<compile_context>
chip_gen: v7x
topology: tpu7x:2x2x1
jax: 0.10.0
libtpu: 0.0.40
codegen_flags: <defaults>
</compile_context>

<pallas_src>
import functools

import jax
import jax.numpy as jnp
from jax.experimental import pallas as pl
from jax.experimental.pallas import tpu as pltpu

EPS = 1e-6


def _layernorm(x, w, b):
    # x: (N, D); w, b broadcastable (1, D). Biased variance, matching nn.LayerNorm.
    mu = jnp.mean(x, axis=-1, keepdims=True)
    xc = x - mu
    var = jnp.mean(xc * xc, axis=-1, keepdims=True)
    inv = jax.lax.rsqrt(var + EPS)
    return xc * inv * w + b


def transformer_cascade_kernel(
    x_ref, pos_ref,
    ln1_w_ref, ln1_b_ref,
    wqkv_ref, bqkv_ref, wo_ref, bo_ref,
    ln2_w_ref, ln2_b_ref,
    w1_ref, b1_ref, w2_ref, b2_ref,
    lnf_w_ref, lnf_b_ref,
    o_ref,
    h_ref,
    *, num_heads, compute_dtype,
):
    l = pl.program_id(1)
    last = pl.num_programs(1) - 1

    # ---- init the residual-stream carry at the first layer of each batch row ----
    @pl.when(l == 0)
    def _():
        h_ref[...] = x_ref[0].astype(jnp.float32) + pos_ref[0].astype(jnp.float32)

    h = h_ref[...]                                   # (N, D) f32
    n, d = h.shape
    dh = d // num_heads
    scale = 1.0 / float(dh) ** 0.5
    cdt = compute_dtype

    # ---------------- multi-head self-attention ----------------
    xn = _layernorm(h, ln1_w_ref[0], ln1_b_ref[0])
    qkv = jnp.dot(xn.astype(cdt), wqkv_ref[0],
                  preferred_element_type=jnp.float32) + bqkv_ref[0]       # (N, 3D)
    q = qkv[:, 0:d] * scale          # fold 1/sqrt(dh) into q (cheap (N, D) VPU mul)
    k = qkv[:, d:2 * d]
    v = qkv[:, 2 * d:3 * d]

    # head-batched layout (H, N, dh)
    qh = jnp.transpose(q.reshape(n, num_heads, dh), (1, 0, 2)).astype(cdt)
    kh = jnp.transpose(k.reshape(n, num_heads, dh), (1, 0, 2)).astype(cdt)
    vh = jnp.transpose(v.reshape(n, num_heads, dh), (1, 0, 2)).astype(cdt)

    s = jnp.einsum("hqd,hkd->hqk", qh, kh,
                   preferred_element_type=jnp.float32)                    # (H, N, N)
    s = s - jnp.max(s, axis=-1, keepdims=True)
    p = jnp.exp(s)
    inv = pl.reciprocal(jnp.sum(p, axis=-1, keepdims=True), approx=True)
    p = p * inv
    ctx = jnp.einsum("hqk,hkd->hqd", p.astype(cdt), vh,
                     preferred_element_type=jnp.float32)                  # (H, N, dh)
    attn = jnp.transpose(ctx, (1, 0, 2)).reshape(n, d)                    # (N, D)
    attn = jnp.dot(attn.astype(cdt), wo_ref[0],
                   preferred_element_type=jnp.float32) + bo_ref[0]
    h = h + attn

    # ---------------- MLP ----------------
    xn = _layernorm(h, ln2_w_ref[0], ln2_b_ref[0])
    m = jnp.dot(xn.astype(cdt), w1_ref[0],
                preferred_element_type=jnp.float32) + b1_ref[0]
    m = jax.nn.gelu(m, approximate=True)
    m = jnp.dot(m.astype(cdt), w2_ref[0],
                preferred_element_type=jnp.float32) + b2_ref[0]
    h = h + m
    h_ref[...] = h

    # ---- final encoder LayerNorm + store on the last layer ----
    @pl.when(l == last)
    def _():
        o_ref[0] = _layernorm(h, lnf_w_ref[...], lnf_b_ref[...]).astype(o_ref.dtype)


def transformer_cascade(x, params, *, num_heads):
    B, N, D = x.shape
    depth = params["wqkv"].shape[0]
    compute_dtype = params["wqkv"].dtype

    kernel = functools.partial(
        transformer_cascade_kernel, num_heads=num_heads, compute_dtype=compute_dtype
    )

    def layer_spec(a):
        # Per-layer parameter: block is one layer's slab, indexed by the depth axis.
        return pl.BlockSpec((1,) + a.shape[1:], lambda b, l: (l, 0, 0))

    in_specs = [
        pl.BlockSpec((1, N, D), lambda b, l: (b, 0, 0)),      # x
        pl.BlockSpec((1, N, D), lambda b, l: (0, 0, 0)),      # pos_emb (shared)
        layer_spec(params["ln1_w"]), layer_spec(params["ln1_b"]),
        layer_spec(params["wqkv"]), layer_spec(params["bqkv"]),
        layer_spec(params["wo"]), layer_spec(params["bo"]),
        layer_spec(params["ln2_w"]), layer_spec(params["ln2_b"]),
        layer_spec(params["w1"]), layer_spec(params["b1"]),
        layer_spec(params["w2"]), layer_spec(params["b2"]),
        pl.BlockSpec((1, D), lambda b, l: (0, 0)),            # lnf_w
        pl.BlockSpec((1, D), lambda b, l: (0, 0)),            # lnf_b
    ]

    ordered = [
        params["pos_emb"],
        params["ln1_w"], params["ln1_b"],
        params["wqkv"], params["bqkv"], params["wo"], params["bo"],
        params["ln2_w"], params["ln2_b"],
        params["w1"], params["b1"], params["w2"], params["b2"],
        params["lnf_w"], params["lnf_b"],
    ]

    return pl.pallas_call(
        kernel,
        out_shape=jax.ShapeDtypeStruct((B, N, D), x.dtype),
        grid=(B, depth),
        in_specs=in_specs,
        out_specs=pl.BlockSpec((1, N, D), lambda b, l: (b, 0, 0)),
        scratch_shapes=[pltpu.VMEM((N, D), jnp.float32)],     # residual-stream carry
        compiler_params=pltpu.CompilerParams(
            dimension_semantics=("parallel", "arbitrary"),
            vmem_limit_bytes=32 * 1024 * 1024,
        ),
    )(x, *ordered)


def init_params(key, *, emb_dims, num_patch, depth, num_heads, mlp_ratio=4,
                param_dtype=jnp.float32):
    D = emb_dims
    H = mlp_ratio * D
    ks = jax.random.split(key, 5)
    std = 0.02

    def nrm(k, shape):
        return (std * jax.random.normal(k, shape, dtype=jnp.float32)).astype(param_dtype)

    params = {
        "pos_emb": (std * jax.random.normal(ks[0], (1, num_patch, D))).astype(jnp.float32),
        "ln1_w": jnp.ones((depth, 1, D), jnp.float32),
        "ln1_b": jnp.zeros((depth, 1, D), jnp.float32),
        "wqkv": nrm(ks[1], (depth, D, 3 * D)),     # fused [wq | wk | wv]
        "bqkv": jnp.zeros((depth, 1, 3 * D), jnp.float32),
        "wo": nrm(ks[2], (depth, D, D)),
        "bo": jnp.zeros((depth, 1, D), jnp.float32),
        "ln2_w": jnp.ones((depth, 1, D), jnp.float32),
        "ln2_b": jnp.zeros((depth, 1, D), jnp.float32),
        "w1": nrm(ks[3], (depth, D, H)),
        "b1": jnp.zeros((depth, 1, H), jnp.float32),
        "w2": nrm(ks[4], (depth, H, D)),
        "b2": jnp.zeros((depth, 1, D), jnp.float32),
        "lnf_w": jnp.ones((1, D), jnp.float32),
        "lnf_b": jnp.zeros((1, D), jnp.float32),
    }
    return params


def reference_forward(x, p, *, num_heads):
    """Plain-JAX f32 reference mirroring the PyTorch module, for validation."""
    depth = p["wqkv"].shape[0]
    B, N, D = x.shape
    dh = D // num_heads
    f32 = lambda a: a.astype(jnp.float32)
    h = x + f32(p["pos_emb"])

    def ln(t, w, b):
        mu = jnp.mean(t, axis=-1, keepdims=True)
        var = jnp.mean((t - mu) ** 2, axis=-1, keepdims=True)
        return (t - mu) * jax.lax.rsqrt(var + EPS) * w + b

    for l in range(depth):
        xn = ln(h, f32(p["ln1_w"][l]), f32(p["ln1_b"][l]))
        qkv = xn @ f32(p["wqkv"][l]) + f32(p["bqkv"][l])
        q, k, v = qkv[..., :D], qkv[..., D:2 * D], qkv[..., 2 * D:]
        q = q.reshape(B, N, num_heads, dh).transpose(0, 2, 1, 3)
        k = k.reshape(B, N, num_heads, dh).transpose(0, 2, 1, 3)
        v = v.reshape(B, N, num_heads, dh).transpose(0, 2, 1, 3)
        s = jnp.einsum("bhqd,bhkd->bhqk", q, k) / dh**0.5
        a = jax.nn.softmax(s, axis=-1)
        o = jnp.einsum("bhqk,bhkd->bhqd", a, v).transpose(0, 2, 1, 3).reshape(B, N, D)
        h = h + (o @ f32(p["wo"][l]) + f32(p["bo"][l]))
        xn = ln(h, f32(p["ln2_w"][l]), f32(p["ln2_b"][l]))
        m = jax.nn.gelu(xn @ f32(p["w1"][l]) + f32(p["b1"][l]), approximate=True)
        h = h + (m @ f32(p["w2"][l]) + f32(p["b2"][l]))
    return ln(h, f32(p["lnf_w"]), f32(p["lnf_b"]))


if __name__ == "__main__":
    B = 2          # batch
    N = 8          # num_patch
    D = 128        # emb_dims (lane-dense)
    DEPTH = 2
    HEADS = 4

    key = jax.random.PRNGKey(0)
    kx, kp = jax.random.split(key)
    x = jax.random.normal(kx, (B, N, D), dtype=jnp.float32)

    # ---- f32 weights ----
    params = init_params(kp, emb_dims=D, num_patch=N, depth=DEPTH, num_heads=HEADS)
    out = jax.block_until_ready(transformer_cascade(x, params, num_heads=HEADS))
    ref = reference_forward(x, params, num_heads=HEADS)
    assert out.shape == (B, N, D)
    err = float(jnp.max(jnp.abs(out - ref)))
    assert err < 2e-2, err   # approx reciprocal in softmax -> slightly loose bound

    # ---- bf16 weights (MXU-friendly), f32 accumulation inside the kernel ----
    params_bf16 = init_params(kp, emb_dims=D, num_patch=N, depth=DEPTH,
                              num_heads=HEADS, param_dtype=jnp.bfloat16)
    out16 = jax.block_until_ready(transformer_cascade(x, params_bf16, num_heads=HEADS))
    ref16 = reference_forward(x, params_bf16, num_heads=HEADS)
    err16 = float(jnp.max(jnp.abs(out16 - ref16)))
    assert err16 < 1e-1, err16

    print("KERNEL_OK")
</pallas_src>

<mosaic_0001>
module attributes {stable_mosaic.version = 11 : i64} {
  func.func @transformer_cascade_kernel(%arg0: i32, %arg1: i32, %arg2: memref<1x8x128xf32, #tpu.memory_space<vmem>>, %arg3: memref<1x8x128xf32, #tpu.memory_space<vmem>>, %arg4: memref<1x1x128xf32, #tpu.memory_space<vmem>>, %arg5: memref<1x1x128xf32, #tpu.memory_space<vmem>>, %arg6: memref<1x128x384xf32, #tpu.memory_space<vmem>>, %arg7: memref<1x1x384xf32, #tpu.memory_space<vmem>>, %arg8: memref<1x128x128xf32, #tpu.memory_space<vmem>>, %arg9: memref<1x1x128xf32, #tpu.memory_space<vmem>>, %arg10: memref<1x1x128xf32, #tpu.memory_space<vmem>>, %arg11: memref<1x1x128xf32, #tpu.memory_space<vmem>>, %arg12: memref<1x128x512xf32, #tpu.memory_space<vmem>>, %arg13: memref<1x1x512xf32, #tpu.memory_space<vmem>>, %arg14: memref<1x512x128xf32, #tpu.memory_space<vmem>>, %arg15: memref<1x1x128xf32, #tpu.memory_space<vmem>>, %arg16: memref<1x128xf32, #tpu.memory_space<vmem>>, %arg17: memref<1x128xf32, #tpu.memory_space<vmem>>, %arg18: memref<1x8x128xf32, #tpu.memory_space<vmem>>, %arg19: memref<8x128xf32, #tpu.memory_space<vmem>>) attributes {dimension_semantics = [#tpu.dimension_semantics<parallel>, #tpu.dimension_semantics<arbitrary>], iteration_bounds = array<i64: 2, 2>, scalar_prefetch = 0 : i64, scratch_operands = 1 : i64, tpu.core_type = #tpu.core_type<tc>, window_params = [{transform_indices = @transform_0, window_bounds = array<i64: 1, 8, 128>}, {pipeline_mode = #tpu.pipeline_mode<synchronous>, transform_indices = @transform_1, window_bounds = array<i64: 1, 8, 128>}, {transform_indices = @transform_2, window_bounds = array<i64: 1, 1, 128>}, {transform_indices = @transform_3, window_bounds = array<i64: 1, 1, 128>}, {transform_indices = @transform_4, window_bounds = array<i64: 1, 128, 384>}, {transform_indices = @transform_5, window_bounds = array<i64: 1, 1, 384>}, {transform_indices = @transform_6, window_bounds = array<i64: 1, 128, 128>}, {transform_indices = @transform_7, window_bounds = array<i64: 1, 1, 128>}, {transform_indices = @transform_8, window_bounds = array<i64: 1, 1, 128>}, {transform_indices = @transform_9, window_bounds = array<i64: 1, 1, 128>}, {transform_indices = @transform_10, window_bounds = array<i64: 1, 128, 512>}, {transform_indices = @transform_11, window_bounds = array<i64: 1, 1, 512>}, {transform_indices = @transform_12, window_bounds = array<i64: 1, 512, 128>}, {transform_indices = @transform_13, window_bounds = array<i64: 1, 1, 128>}, {pipeline_mode = #tpu.pipeline_mode<synchronous>, transform_indices = @transform_14, window_bounds = array<i64: 1, 128>}, {pipeline_mode = #tpu.pipeline_mode<synchronous>, transform_indices = @transform_15, window_bounds = array<i64: 1, 128>}, {transform_indices = @transform_16, window_bounds = array<i64: 1, 8, 128>}]} {
    %c0_i32 = arith.constant 0 : i32
    %0 = arith.cmpi eq, %arg1, %c0_i32 : i32
    %1 = arith.extui %0 : i1 to i32
    %c0_i32_0 = arith.constant 0 : i32
    %2 = arith.cmpi ne, %1, %c0_i32_0 : i32
    scf.if %2 {
      %c0_63 = arith.constant 0 : index
      %c0_64 = arith.constant 0 : index
      %c0_65 = arith.constant 0 : index
      %124 = vector.load %arg2[%c0_63, %c0_64, %c0_65] : memref<1x8x128xf32, #tpu.memory_space<vmem>>, vector<1x8x128xf32>
      %125 = vector.shape_cast %124 : vector<1x8x128xf32> to vector<8x128xf32>
      %c0_66 = arith.constant 0 : index
      %c0_67 = arith.constant 0 : index
      %c0_68 = arith.constant 0 : index
      %126 = vector.load %arg3[%c0_66, %c0_67, %c0_68] : memref<1x8x128xf32, #tpu.memory_space<vmem>>, vector<1x8x128xf32>
      %127 = vector.shape_cast %126 : vector<1x8x128xf32> to vector<8x128xf32>
      %128 = arith.addf %125, %127 : vector<8x128xf32>
      %c0_69 = arith.constant 0 : index
      %c0_70 = arith.constant 0 : index
      %129 = vector.load %arg19[%c0_69, %c0_70] : memref<8x128xf32, #tpu.memory_space<vmem>>, vector<8x128xf32>
      tpu.vector_store %arg19[%c0_69, %c0_70], %128 {strides = array<i32>} : memref<8x128xf32, #tpu.memory_space<vmem>>, vector<8x128xf32>,
    } else {
    }
    %c0 = arith.constant 0 : index
    %c0_1 = arith.constant 0 : index
    %3 = vector.load %arg19[%c0, %c0_1] : memref<8x128xf32, #tpu.memory_space<vmem>>, vector<8x128xf32>
    %c0_2 = arith.constant 0 : index
    %c0_3 = arith.constant 0 : index
    %c0_4 = arith.constant 0 : index
    %4 = vector.load %arg4[%c0_2, %c0_3, %c0_4] : memref<1x1x128xf32, #tpu.memory_space<vmem>>, vector<1x1x128xf32>
    %5 = vector.shape_cast %4 : vector<1x1x128xf32> to vector<1x128xf32>
    %c0_5 = arith.constant 0 : index
    %c0_6 = arith.constant 0 : index
    %c0_7 = arith.constant 0 : index
    %6 = vector.load %arg5[%c0_5, %c0_6, %c0_7] : memref<1x1x128xf32, #tpu.memory_space<vmem>>, vector<1x1x128xf32>
    %7 = vector.shape_cast %6 : vector<1x1x128xf32> to vector<1x128xf32>
    %cst = arith.constant dense<0.000000e+00> : vector<8xf32>
    %8 = vector.multi_reduction <add>, %3, %cst [1] : vector<8x128xf32> to vector<8xf32>
    %9 = vector.shape_cast %8 : vector<8xf32> to vector<8x1xf32>
    %cst_8 = arith.constant 1.280000e+02 : f32
    %10 = vector.broadcast %cst_8 : f32 to vector<8x1xf32>
    %11 = arith.divf %9, %10 : vector<8x1xf32>
    %12 = vector.broadcast %11 : vector<8x1xf32> to vector<8x128xf32>
    %13 = arith.subf %3, %12 : vector<8x128xf32>
    %14 = arith.mulf %13, %13 : vector<8x128xf32>
    %cst_9 = arith.constant dense<0.000000e+00> : vector<8xf32>
    %15 = vector.multi_reduction <add>, %14, %cst_9 [1] : vector<8x128xf32> to vector<8xf32>
    %16 = vector.shape_cast %15 : vector<8xf32> to vector<8x1xf32>
    %cst_10 = arith.constant 1.280000e+02 : f32
    %17 = vector.broadcast %cst_10 : f32 to vector<8x1xf32>
    %18 = arith.divf %16, %17 : vector<8x1xf32>
    %cst_11 = arith.constant 9.99999997E-7 : f32
    %19 = vector.broadcast %cst_11 : f32 to vector<8x1xf32>
    %20 = arith.addf %18, %19 : vector<8x1xf32>
    %21 = math.rsqrt %20 : vector<8x1xf32>
    %22 = vector.broadcast %21 : vector<8x1xf32> to vector<8x128xf32>
    %23 = arith.mulf %13, %22 : vector<8x128xf32>
    %24 = vector.broadcast %5 : vector<1x128xf32> to vector<8x128xf32>
    %25 = arith.mulf %23, %24 : vector<8x128xf32>
    %26 = vector.broadcast %7 : vector<1x128xf32> to vector<8x128xf32>
    %27 = arith.addf %25, %26 : vector<8x128xf32>
    %c0_12 = arith.constant 0 : index
    %c0_13 = arith.constant 0 : index
    %c0_14 = arith.constant 0 : index
    %28 = vector.load %arg6[%c0_12, %c0_13, %c0_14] : memref<1x128x384xf32, #tpu.memory_space<vmem>>, vector<1x128x384xf32>
    %29 = vector.shape_cast %28 : vector<1x128x384xf32> to vector<128x384xf32>
    %cst_15 = arith.constant dense<0.000000e+00> : vector<8x384xf32>
    %30 = tpu.matmul %27, %29, %cst_15 {dimension_numbers = #tpu.dot_dimension_numbers<[1], [0], [0], [1], [0, 0, 1, 1], [], []>} : vector<8x128xf32>, vector<128x384xf32>, vector<8x384xf32> -> vector<8x384xf32>
    %c0_16 = arith.constant 0 : index
    %c0_17 = arith.constant 0 : index
    %c0_18 = arith.constant 0 : index
    %31 = vector.load %arg7[%c0_16, %c0_17, %c0_18] : memref<1x1x384xf32, #tpu.memory_space<vmem>>, vector<1x1x384xf32>
    %32 = vector.shape_cast %31 : vector<1x1x384xf32> to vector<1x384xf32>
    %33 = vector.broadcast %32 : vector<1x384xf32> to vector<8x384xf32>
    %34 = arith.addf %30, %33 : vector<8x384xf32>
    %35 = vector.extract_strided_slice %34 {offsets = [0, 0], sizes = [8, 128], strides = [1, 1]} : vector<8x384xf32> to vector<8x128xf32>
    %cst_19 = arith.constant 0.176776692 : f32
    %36 = vector.broadcast %cst_19 : f32 to vector<8x128xf32>
    %37 = arith.mulf %35, %36 : vector<8x128xf32>
    %38 = vector.extract_strided_slice %34 {offsets = [0, 128], sizes = [8, 128], strides = [1, 1]} : vector<8x384xf32> to vector<8x128xf32>
    %39 = vector.extract_strided_slice %34 {offsets = [0, 256], sizes = [8, 128], strides = [1, 1]} : vector<8x384xf32> to vector<8x128xf32>
    %40 = vector.shape_cast %37 : vector<8x128xf32> to vector<8x4x32xf32>
    %41 = tpu.transpose %40, [1, 0, 2] : vector<8x4x32xf32> -> vector<4x8x32xf32>
    %42 = vector.shape_cast %38 : vector<8x128xf32> to vector<8x4x32xf32>
    %43 = tpu.transpose %42, [1, 0, 2] : vector<8x4x32xf32> -> vector<4x8x32xf32>
    %44 = vector.shape_cast %39 : vector<8x128xf32> to vector<8x4x32xf32>
    %45 = tpu.transpose %44, [1, 0, 2] : vector<8x4x32xf32> -> vector<4x8x32xf32>
    "tpu.trace_start"() <{level = 10 : i32, message = "hqd,hkd->hqk"}> : () -> ()
    %cst_20 = arith.constant dense<0.000000e+00> : vector<4x8x8xf32>
    %46 = tpu.matmul %41, %43, %cst_20 {dimension_numbers = #tpu.dot_dimension_numbers<[2], [2], [1], [1], [0, 0, 0, 1, 1, 1], [0], [0]>} : vector<4x8x32xf32>, vector<4x8x32xf32>, vector<4x8x8xf32> -> vector<4x8x8xf32>
    "tpu.trace_stop"() : () -> ()
    %cst_21 = arith.constant dense<0xFF800000> : vector<4x8xf32>
    %47 = vector.multi_reduction <maximumf>, %46, %cst_21 [2] : vector<4x8x8xf32> to vector<4x8xf32>
    %48 = vector.shape_cast %47 : vector<4x8xf32> to vector<4x8x1xf32>
    %49 = vector.broadcast %48 : vector<4x8x1xf32> to vector<4x8x8xf32>
    %50 = arith.subf %46, %49 : vector<4x8x8xf32>
    %51 = math.exp %50 : vector<4x8x8xf32>
    %cst_22 = arith.constant dense<0.000000e+00> : vector<4x8xf32>
    %52 = vector.multi_reduction <add>, %51, %cst_22 [2] : vector<4x8x8xf32> to vector<4x8xf32>
    %53 = vector.shape_cast %52 : vector<4x8xf32> to vector<4x8x1xf32>
    %54 = tpu.reciprocal %53 {approx = true} : vector<4x8x1xf32> -> vector<4x8x1xf32>
    %55 = vector.broadcast %54 : vector<4x8x1xf32> to vector<4x8x8xf32>
    %56 = arith.mulf %51, %55 : vector<4x8x8xf32>
    "tpu.trace_start"() <{level = 10 : i32, message = "hqk,hkd->hqd"}> : () -> ()
    %cst_23 = arith.constant dense<0.000000e+00> : vector<4x8x32xf32>
    %57 = tpu.matmul %56, %45, %cst_23 {dimension_numbers = #tpu.dot_dimension_numbers<[2], [1], [1], [2], [0, 0, 0, 1, 1, 2], [0], [0]>} : vector<4x8x8xf32>, vector<4x8x32xf32>, vector<4x8x32xf32> -> vector<4x8x32xf32>
    "tpu.trace_stop"() : () -> ()
    %58 = tpu.transpose %57, [1, 0, 2] : vector<4x8x32xf32> -> vector<8x4x32xf32>
    %59 = vector.shape_cast %58 : vector<8x4x32xf32> to vector<8x128xf32>
    %c0_24 = arith.constant 0 : index
    %c0_25 = arith.constant 0 : index
    %c0_26 = arith.constant 0 : index
    %60 = vector.load %arg8[%c0_24, %c0_25, %c0_26] : memref<1x128x128xf32, #tpu.memory_space<vmem>>, vector<1x128x128xf32>
    %61 = vector.shape_cast %60 : vector<1x128x128xf32> to vector<128x128xf32>
    %cst_27 = arith.constant dense<0.000000e+00> : vector<8x128xf32>
    %62 = tpu.matmul %59, %61, %cst_27 {dimension_numbers = #tpu.dot_dimension_numbers<[1], [0], [0], [1], [0, 0, 1, 1], [], []>} : vector<8x128xf32>, vector<128x128xf32>, vector<8x128xf32> -> vector<8x128xf32>
    %c0_28 = arith.constant 0 : index
    %c0_29 = arith.constant 0 : index
    %c0_30 = arith.constant 0 : index
    %63 = vector.load %arg9[%c0_28, %c0_29, %c0_30] : memref<1x1x128xf32, #tpu.memory_space<vmem>>, vector<1x1x128xf32>
    %64 = vector.shape_cast %63 : vector<1x1x128xf32> to vector<1x128xf32>
    %65 = vector.broadcast %64 : vector<1x128xf32> to vector<8x128xf32>
    %66 = arith.addf %62, %65 : vector<8x128xf32>
    %67 = arith.addf %3, %66 : vector<8x128xf32>
    %c0_31 = arith.constant 0 : index
    %c0_32 = arith.constant 0 : index
    %c0_33 = arith.constant 0 : index
    %68 = vector.load %arg10[%c0_31, %c0_32, %c0_33] : memref<1x1x128xf32, #tpu.memory_space<vmem>>, vector<1x1x128xf32>
    %69 = vector.shape_cast %68 : vector<1x1x128xf32> to vector<1x128xf32>
    %c0_34 = arith.constant 0 : index
    %c0_35 = arith.constant 0 : index
    %c0_36 = arith.constant 0 : index
    %70 = vector.load %arg11[%c0_34, %c0_35, %c0_36] : memref<1x1x128xf32, #tpu.memory_space<vmem>>, vector<1x1x128xf32>
    %71 = vector.shape_cast %70 : vector<1x1x128xf32> to vector<1x128xf32>
    %cst_37 = arith.constant dense<0.000000e+00> : vector<8xf32>
    %72 = vector.multi_reduction <add>, %67, %cst_37 [1] : vector<8x128xf32> to vector<8xf32>
    %73 = vector.shape_cast %72 : vector<8xf32> to vector<8x1xf32>
    %cst_38 = arith.constant 1.280000e+02 : f32
    %74 = vector.broadcast %cst_38 : f32 to vector<8x1xf32>
    %75 = arith.divf %73, %74 : vector<8x1xf32>
    %76 = vector.broadcast %75 : vector<8x1xf32> to vector<8x128xf32>
    %77 = arith.subf %67, %76 : vector<8x128xf32>
    %78 = arith.mulf %77, %77 : vector<8x128xf32>
    %cst_39 = arith.constant dense<0.000000e+00> : vector<8xf32>
    %79 = vector.multi_reduction <add>, %78, %cst_39 [1] : vector<8x128xf32> to vector<8xf32>
    %80 = vector.shape_cast %79 : vector<8xf32> to vector<8x1xf32>
    %cst_40 = arith.constant 1.280000e+02 : f32
    %81 = vector.broadcast %cst_40 : f32 to vector<8x1xf32>
    %82 = arith.divf %80, %81 : vector<8x1xf32>
    %cst_41 = arith.constant 9.99999997E-7 : f32
    %83 = vector.broadcast %cst_41 : f32 to vector<8x1xf32>
    %84 = arith.addf %82, %83 : vector<8x1xf32>
    %85 = math.rsqrt %84 : vector<8x1xf32>
    %86 = vector.broadcast %85 : vector<8x1xf32> to vector<8x128xf32>
    %87 = arith.mulf %77, %86 : vector<8x128xf32>
    %88 = vector.broadcast %69 : vector<1x128xf32> to vector<8x128xf32>
    %89 = arith.mulf %87, %88 : vector<8x128xf32>
    %90 = vector.broadcast %71 : vector<1x128xf32> to vector<8x128xf32>
    %91 = arith.addf %89, %90 : vector<8x128xf32>
    %c0_42 = arith.constant 0 : index
    %c0_43 = arith.constant 0 : index
    %c0_44 = arith.constant 0 : index
    %92 = vector.load %arg12[%c0_42, %c0_43, %c0_44] : memref<1x128x512xf32, #tpu.memory_space<vmem>>, vector<1x128x512xf32>
    %93 = vector.shape_cast %92 : vector<1x128x512xf32> to vector<128x512xf32>
    %cst_45 = arith.constant dense<0.000000e+00> : vector<8x512xf32>
    %94 = tpu.matmul %91, %93, %cst_45 {dimension_numbers = #tpu.dot_dimension_numbers<[1], [0], [0], [1], [0, 0, 1, 1], [], []>} : vector<8x128xf32>, vector<128x512xf32>, vector<8x512xf32> -> vector<8x512xf32>
    %c0_46 = arith.constant 0 : index
    %c0_47 = arith.constant 0 : index
    %c0_48 = arith.constant 0 : index
    %95 = vector.load %arg13[%c0_46, %c0_47, %c0_48] : memref<1x1x512xf32, #tpu.memory_space<vmem>>, vector<1x1x512xf32>
    %96 = vector.shape_cast %95 : vector<1x1x512xf32> to vector<1x512xf32>
    %97 = vector.broadcast %96 : vector<1x512xf32> to vector<8x512xf32>
    %98 = arith.addf %94, %97 : vector<8x512xf32>
    %99 = arith.mulf %98, %98 : vector<8x512xf32>
    %100 = arith.mulf %98, %99 : vector<8x512xf32>
    %cst_49 = arith.constant 4.471500e-02 : f32
    %101 = vector.broadcast %cst_49 : f32 to vector<8x512xf32>
    %102 = arith.mulf %101, %100 : vector<8x512xf32>
    %103 = arith.addf %98, %102 : vector<8x512xf32>
    %cst_50 = arith.constant 0.797884583 : f32
    %104 = vector.broadcast %cst_50 : f32 to vector<8x512xf32>
    %105 = arith.mulf %104, %103 : vector<8x512xf32>
    %106 = math.tanh %105 : vector<8x512xf32>
    %cst_51 = arith.constant 1.000000e+00 : f32
    %107 = vector.broadcast %cst_51 : f32 to vector<8x512xf32>
    %108 = arith.addf %107, %106 : vector<8x512xf32>
    %cst_52 = arith.constant 5.000000e-01 : f32
    %109 = vector.broadcast %cst_52 : f32 to vector<8x512xf32>
    %110 = arith.mulf %109, %108 : vector<8x512xf32>
    %111 = arith.mulf %98, %110 : vector<8x512xf32>
    %c0_53 = arith.constant 0 : index
    %c0_54 = arith.constant 0 : index
    %c0_55 = arith.constant 0 : index
    %112 = vector.load %arg14[%c0_53, %c0_54, %c0_55] : memref<1x512x128xf32, #tpu.memory_space<vmem>>, vector<1x512x128xf32>
    %113 = vector.shape_cast %112 : vector<1x512x128xf32> to vector<512x128xf32>
    %cst_56 = arith.constant dense<0.000000e+00> : vector<8x128xf32>
    %114 = tpu.matmul %111, %113, %cst_56 {dimension_numbers = #tpu.dot_dimension_numbers<[1], [0], [0], [1], [0, 0, 1, 1], [], []>} : vector<8x512xf32>, vector<512x128xf32>, vector<8x128xf32> -> vector<8x128xf32>
    %c0_57 = arith.constant 0 : index
    %c0_58 = arith.constant 0 : index
    %c0_59 = arith.constant 0 : index
    %115 = vector.load %arg15[%c0_57, %c0_58, %c0_59] : memref<1x1x128xf32, #tpu.memory_space<vmem>>, vector<1x1x128xf32>
    %116 = vector.shape_cast %115 : vector<1x1x128xf32> to vector<1x128xf32>
    %117 = vector.broadcast %116 : vector<1x128xf32> to vector<8x128xf32>
    %118 = arith.addf %114, %117 : vector<8x128xf32>
    %119 = arith.addf %67, %118 : vector<8x128xf32>
    %c0_60 = arith.constant 0 : index
    %c0_61 = arith.constant 0 : index
    %120 = vector.load %arg19[%c0_60, %c0_61] : memref<8x128xf32, #tpu.memory_space<vmem>>, vector<8x128xf32>
    tpu.vector_store %arg19[%c0_60, %c0_61], %119 {strides = array<i32>} : memref<8x128xf32, #tpu.memory_space<vmem>>, vector<8x128xf32>,
    %c1_i32 = arith.constant 1 : i32
    %121 = arith.cmpi eq, %arg1, %c1_i32 : i32
    %122 = arith.extui %121 : i1 to i32
    %c0_i32_62 = arith.constant 0 : i32
    %123 = arith.cmpi ne, %122, %c0_i32_62 : i32
    scf.if %123 {
      %c0_63 = arith.constant 0 : index
      %c0_64 = arith.constant 0 : index
      %124 = vector.load %arg16[%c0_63, %c0_64] : memref<1x128xf32, #tpu.memory_space<vmem>>, vector<1x128xf32>
      %c0_65 = arith.constant 0 : index
      %c0_66 = arith.constant 0 : index
      %125 = vector.load %arg17[%c0_65, %c0_66] : memref<1x128xf32, #tpu.memory_space<vmem>>, vector<1x128xf32>
      %cst_67 = arith.constant dense<0.000000e+00> : vector<8xf32>
      %126 = vector.multi_reduction <add>, %119, %cst_67 [1] : vector<8x128xf32> to vector<8xf32>
      %127 = vector.shape_cast %126 : vector<8xf32> to vector<8x1xf32>
      %cst_68 = arith.constant 1.280000e+02 : f32
      %128 = vector.broadcast %cst_68 : f32 to vector<8x1xf32>
      %129 = arith.divf %127, %128 : vector<8x1xf32>
      %130 = vector.broadcast %129 : vector<8x1xf32> to vector<8x128xf32>
      %131 = arith.subf %119, %130 : vector<8x128xf32>
      %132 = arith.mulf %131, %131 : vector<8x128xf32>
      %cst_69 = arith.constant dense<0.000000e+00> : vector<8xf32>
      %133 = vector.multi_reduction <add>, %132, %cst_69 [1] : vector<8x128xf32> to vector<8xf32>
      %134 = vector.shape_cast %133 : vector<8xf32> to vector<8x1xf32>
      %cst_70 = arith.constant 1.280000e+02 : f32
      %135 = vector.broadcast %cst_70 : f32 to vector<8x1xf32>
      %136 = arith.divf %134, %135 : vector<8x1xf32>
      %cst_71 = arith.constant 9.99999997E-7 : f32
      %137 = vector.broadcast %cst_71 : f32 to vector<8x1xf32>
      %138 = arith.addf %136, %137 : vector<8x1xf32>
      %139 = math.rsqrt %138 : vector<8x1xf32>
      %140 = vector.broadcast %139 : vector<8x1xf32> to vector<8x128xf32>
      %141 = arith.mulf %131, %140 : vector<8x128xf32>
      %142 = vector.broadcast %124 : vector<1x128xf32> to vector<8x128xf32>
      %143 = arith.mulf %141, %142 : vector<8x128xf32>
      %144 = vector.broadcast %125 : vector<1x128xf32> to vector<8x128xf32>
      %145 = arith.addf %143, %144 : vector<8x128xf32>
      %c0_72 = arith.constant 0 : index
      %c0_73 = arith.constant 0 : index
      %c0_74 = arith.constant 0 : index
      %146 = vector.load %arg18[%c0_72, %c0_73, %c0_74] : memref<1x8x128xf32, #tpu.memory_space<vmem>>, vector<1x8x128xf32>
      %147 = vector.shape_cast %146 : vector<1x8x128xf32> to vector<8x128xf32>
      %148 = vector.shape_cast %145 : vector<8x128xf32> to vector<1x8x128xf32>
      tpu.vector_store %arg18[%c0_72, %c0_73, %c0_74], %148 {strides = array<i32>} : memref<1x8x128xf32, #tpu.memory_space<vmem>>, vector<1x8x128xf32>,
    } else {
    }
    return
  }
  func.func @transform_0(%arg0: i32, %arg1: i32) -> (i32, i32, i32) {
    %c0_i32 = arith.constant 0 : i32
    %c0_i32_0 = arith.constant 0 : i32
    %c0_i32_1 = arith.constant 0 : i32
    return %arg0, %c0_i32, %c0_i32_0 : i32, i32, i32
  }
  func.func @transform_1(%arg0: i32, %arg1: i32) -> (i32, i32, i32) {
    %c0_i32 = arith.constant 0 : i32
    %c0_i32_0 = arith.constant 0 : i32
    %c0_i32_1 = arith.constant 0 : i32
    %c0_i32_2 = arith.constant 0 : i32
    return %c0_i32, %c0_i32_0, %c0_i32_1 : i32, i32, i32
  }
  func.func @transform_2(%arg0: i32, %arg1: i32) -> (i32, i32, i32) {
    %c0_i32 = arith.constant 0 : i32
    %c0_i32_0 = arith.constant 0 : i32
    %c0_i32_1 = arith.constant 0 : i32
    return %arg1, %c0_i32, %c0_i32_0 : i32, i32, i32
  }
  func.func @transform_3(%arg0: i32, %arg1: i32) -> (i32, i32, i32) {
    %c0_i32 = arith.constant 0 : i32
    %c0_i32_0 = arith.constant 0 : i32
    %c0_i32_1 = arith.constant 0 : i32
    return %arg1, %c0_i32, %c0_i32_0 : i32, i32, i32
  }
  func.func @transform_4(%arg0: i32, %arg1: i32) -> (i32, i32, i32) {
    %c0_i32 = arith.constant 0 : i32
    %c0_i32_0 = arith.constant 0 : i32
    %c0_i32_1 = arith.constant 0 : i32
    return %arg1, %c0_i32, %c0_i32_0 : i32, i32, i32
  }
  func.func @transform_5(%arg0: i32, %arg1: i32) -> (i32, i32, i32) {
    %c0_i32 = arith.constant 0 : i32
    %c0_i32_0 = arith.constant 0 : i32
    %c0_i32_1 = arith.constant 0 : i32
    return %arg1, %c0_i32, %c0_i32_0 : i32, i32, i32
  }
  func.func @transform_6(%arg0: i32, %arg1: i32) -> (i32, i32, i32) {
    %c0_i32 = arith.constant 0 : i32
    %c0_i32_0 = arith.constant 0 : i32
    %c0_i32_1 = arith.constant 0 : i32
    return %arg1, %c0_i32, %c0_i32_0 : i32, i32, i32
  }
  func.func @transform_7(%arg0: i32, %arg1: i32) -> (i32, i32, i32) {
    %c0_i32 = arith.constant 0 : i32
    %c0_i32_0 = arith.constant 0 : i32
    %c0_i32_1 = arith.constant 0 : i32
    return %arg1, %c0_i32, %c0_i32_0 : i32, i32, i32
  }
  func.func @transform_8(%arg0: i32, %arg1: i32) -> (i32, i32, i32) {
    %c0_i32 = arith.constant 0 : i32
    %c0_i32_0 = arith.constant 0 : i32
    %c0_i32_1 = arith.constant 0 : i32
    return %arg1, %c0_i32, %c0_i32_0 : i32, i32, i32
  }
  func.func @transform_9(%arg0: i32, %arg1: i32) -> (i32, i32, i32) {
    %c0_i32 = arith.constant 0 : i32
    %c0_i32_0 = arith.constant 0 : i32
    %c0_i32_1 = arith.constant 0 : i32
    return %arg1, %c0_i32, %c0_i32_0 : i32, i32, i32
  }
  func.func @transform_10(%arg0: i32, %arg1: i32) -> (i32, i32, i32) {
    %c0_i32 = arith.constant 0 : i32
    %c0_i32_0 = arith.constant 0 : i32
    %c0_i32_1 = arith.constant 0 : i32
    return %arg1, %c0_i32, %c0_i32_0 : i32, i32, i32
  }
  func.func @transform_11(%arg0: i32, %arg1: i32) -> (i32, i32, i32) {
    %c0_i32 = arith.constant 0 : i32
    %c0_i32_0 = arith.constant 0 : i32
    %c0_i32_1 = arith.constant 0 : i32
    return %arg1, %c0_i32, %c0_i32_0 : i32, i32, i32
  }
  func.func @transform_12(%arg0: i32, %arg1: i32) -> (i32, i32, i32) {
    %c0_i32 = arith.constant 0 : i32
    %c0_i32_0 = arith.constant 0 : i32
    %c0_i32_1 = arith.constant 0 : i32
    return %arg1, %c0_i32, %c0_i32_0 : i32, i32, i32
  }
  func.func @transform_13(%arg0: i32, %arg1: i32) -> (i32, i32, i32) {
    %c0_i32 = arith.constant 0 : i32
    %c0_i32_0 = arith.constant 0 : i32
    %c0_i32_1 = arith.constant 0 : i32
    return %arg1, %c0_i32, %c0_i32_0 : i32, i32, i32
  }
  func.func @transform_14(%arg0: i32, %arg1: i32) -> (i32, i32) {
    %c0_i32 = arith.constant 0 : i32
    %c0_i32_0 = arith.constant 0 : i32
    %c0_i32_1 = arith.constant 0 : i32
    return %c0_i32, %c0_i32_0 : i32, i32
  }
  func.func @transform_15(%arg0: i32, %arg1: i32) -> (i32, i32) {
    %c0_i32 = arith.constant 0 : i32
    %c0_i32_0 = arith.constant 0 : i32
    %c0_i32_1 = arith.constant 0 : i32
    return %c0_i32, %c0_i32_0 : i32, i32
  }
  func.func @transform_16(%arg0: i32, %arg1: i32) -> (i32, i32, i32) {
    %c0_i32 = arith.constant 0 : i32
    %c0_i32_0 = arith.constant 0 : i32
    %c0_i32_1 = arith.constant 0 : i32
    return %arg0, %c0_i32, %c0_i32_0 : i32, i32, i32
  }
}

</mosaic_0001>

<llo_original>
// kernel: tpu_custom_call.1
$region0: #{tpu_custom_call.1}
  #allocation0 [shape = 'u32[]', space=smem, size = 0x4, offset = 0x4, fixed_abs, tag = 'smem constant byte address 0x4 - core index']
  #allocation1 [shape = 'u32[144,128]{1,0:T(1,128)}', space=vmem, size = 0x12000, scoped, tag = 'internal scratch']
  #allocation2 [shape = 'f32[8,128]{1,0:T(8,128)}', space=vmem, size = 0x1000, scoped, tag = 'scratch operand']
  %s0 = inlined_call_operand.hbm [shape: f32[2,8,128], index: 0, kind: input, shape index: {}]
  %s1 = inlined_call_operand.hbm [shape: f32[1,8,128], index: 1, kind: input, shape index: {}]
  %s2 = inlined_call_operand.hbm [shape: f32[2,1,128], index: 2, kind: input, shape index: {}]
  %s3 = inlined_call_operand.hbm [shape: f32[2,1,128], index: 3, kind: input, shape index: {}]
  %s4 = inlined_call_operand.hbm [shape: f32[2,128,384], index: 4, kind: input, shape index: {}]
  %s5 = inlined_call_operand.vmem [shape: f32[2,1,384], index: 5, kind: input, shape index: {}]
  %s6 = inlined_call_operand.hbm [shape: f32[2,128,128], index: 6, kind: input, shape index: {}]
  %s7 = inlined_call_operand.vmem [shape: f32[2,1,128], index: 7, kind: input, shape index: {}]
  %s8 = inlined_call_operand.vmem [shape: f32[2,1,128], index: 8, kind: input, shape index: {}]
  %s9 = inlined_call_operand.vmem [shape: f32[2,1,128], index: 9, kind: input, shape index: {}]
  %s10 = inlined_call_operand.hbm [shape: f32[2,128,512], index: 10, kind: input, shape index: {}]
  %s11 = inlined_call_operand.vmem [shape: f32[2,1,512], index: 11, kind: input, shape index: {}]
  %s12 = inlined_call_operand.hbm [shape: f32[2,512,128], index: 12, kind: input, shape index: {}]
  %s13 = inlined_call_operand.vmem [shape: f32[2,1,128], index: 13, kind: input, shape index: {}]
  %s14 = inlined_call_operand.vmem [shape: f32[1,128], index: 14, kind: input, shape index: {}]
  %s15 = inlined_call_operand.vmem [shape: f32[1,128], index: 15, kind: input, shape index: {}]
  %s16 = inlined_call_operand.hbm [shape: f32[2,8,128], index: 16, kind: output, shape index: {}]
  %s17 = sld [smem:[#allocation0]]
  $region137: #{tpu_custom_call.1} parent=0
    _
  %s19 = ssub.s32 1, %s17
  %s20 = scalar_select 0, %s19, %s17
  $region1: #{tpu_custom_call.1} parent=0
    #allocation3 [shape = 'u8[8192]{0}', space=vmem, size = 0x2000, scoped, tag = 'input window, operand 0']
    #allocation4 [shape = 's32[2]{0}', space=sflag, size = 0x8, scoped, tag = 'scoped memory for tpu_custom_call.1']
    #allocation5 [shape = 's32[2]{0}', space=sflag, size = 0x8, scoped, tag = 'scoped memory for tpu_custom_call.1']
    #allocation6 [shape = 'u8[4096]{0}', space=vmem, size = 0x1000, scoped, tag = 'input window, operand 1, single buffered']
    #allocation7 [shape = 's32[1]{0}', space=sflag, size = 0x4, scoped, tag = 'scoped memory for tpu_custom_call.1']
    #allocation8 [shape = 'u8[1024]{0}', space=vmem, size = 0x400, scoped, tag = 'input window, operand 2']
    #allocation9 [shape = 'u8[1024]{0}', space=vmem, size = 0x400, scoped, tag = 'input window, operand 3']
    #allocation10 [shape = 'u8[393216]{0}', space=vmem, size = 0x60000, scoped, tag = 'input window, operand 4']
    #allocation11 [shape = 'u8[131072]{0}', space=vmem, size = 0x20000, scoped, tag = 'input window, operand 6']
    #allocation12 [shape = 'u8[524288]{0}', space=vmem, size = 0x80000, scoped, tag = 'input window, operand 10']
    #allocation13 [shape = 'u8[524288]{0}', space=vmem, size = 0x80000, scoped, tag = 'input window, operand 12']
    #allocation14 [shape = 'u8[8192]{0}', space=vmem, size = 0x2000, scoped, tag = 'output window, operand 0']
    %21 = vsyncpa [#allocation4], 0
    %s22 = scalar_lea.sflag [#allocation4], 1
    %23 = vsyncpa %s22, 0
    %24 = vsyncpa [#allocation7], 0
    %25 = vsyncpa [#allocation5], 0
    %s26 = scalar_lea.sflag [#allocation5], 1
    %27 = vsyncpa %s26, 0
    loop: start=0, step=1, limit=6
    $region2: #{tpu_custom_call.1} parent=1 // loop_pre_header
      _
    $region3: #{tpu_custom_call.1} parent=1 // loop_header
      %s29 = sphi 0, %s33
      %p30 = scmp.ge.s32.totalorder %s29, 6
      %s36 = sphi 0, %s48
      %s37 = sphi 0, %s44
      %s38 = sphi 0, %s36
      %s39 = sphi 0, %s37
      %s40 = sphi 0, %s38
      %s41 = sphi 0, %s39
      %s51 = sphi 0, %s53
      %s54 = sphi 0, %s51
      %s55 = sphi 0, %s54
      %s71 = sphi 0, %s55
      %s75 = sphi 0, %s75
      %s77 = sphi 0, %s75
      %s78 = sphi 0, %s77
      %s92 = sphi 0, %s78
      %s98 = sphi 0, %s100
      %s101 = sphi 0, %s98
      %s102 = sphi 0, %s101
      %s118 = sphi 0, %s102
      %s124 = sphi 0, %s126
      %s127 = sphi 0, %s124
      %s128 = sphi 0, %s127
      %s144 = sphi 0, %s128
      %s150 = sphi 0, %s152
      %s153 = sphi 0, %s150
      %s154 = sphi 0, %s153
      %s170 = sphi 0, %s154
      %s176 = sphi 0, %s178
      %s179 = sphi 0, %s176
      %s180 = sphi 0, %s179
      %s196 = sphi 0, %s180
      %s202 = sphi 0, %s204
      %s205 = sphi 0, %s202
      %s206 = sphi 0, %s205
      %s222 = sphi 0, %s206
      %s228 = sphi 0, %s230
      %s231 = sphi 0, %s228
      %s232 = sphi 0, %s231
      %s248 = sphi 0, %s232
      %s254 = sphi 0, %s256
      %s257 = sphi 0, %s254
      %s258 = sphi 0, %s257
      %s274 = sphi 0, %s258
      %s280 = sphi 0, %s282
      %s283 = sphi 0, %s280
      %s284 = sphi 0, %s283
      %s300 = sphi 0, %s284
      %s306 = sphi 0, %s308
      %s309 = sphi 0, %s306
      %s310 = sphi 0, %s309
      %s326 = sphi 0, %s310
      %s332 = sphi 0, %s334
      %s335 = sphi 0, %s332
      %s336 = sphi 0, %s335
      %s352 = sphi 0, %s336
      %s358 = sphi 0, %s360
      %s361 = sphi 0, %s358
      %s362 = sphi 0, %s361
      %s378 = sphi 0, %s362
      %s384 = sphi 0, %s386
      %s387 = sphi 0, %s384
      %s388 = sphi 0, %s387
      %s404 = sphi 0, %s388
      %s408 = sphi 0, %s408
      %s410 = sphi 0, %s408
      %s411 = sphi 0, %s410
      %s425 = sphi 0, %s411
      %s429 = sphi 0, %s429
      %s431 = sphi 0, %s429
      %s432 = sphi 0, %s431
      %s446 = sphi 0, %s432
      %s452 = sphi 0, %s454
      %s455 = sphi 0, %s452
      %s456 = sphi 0, %s455
      %s472 = sphi 0, %s456
    $region4: #{tpu_custom_call.1} parent=1 // loop_header_branch
      %32 = sbr.rel (%p30) target = $region8
    $region5: #{tpu_custom_call.1} parent=1 // loop_body
      %s34 = ssub.s32 %s29, 1
      %s35 = ssub.s32 %s29, 2
      %s42 = sadd.s32 1, %s37
      %p43 = scmp.ge.s32.totalorder %s42, 2
      %s44 = scalar_select %p43, 0, %s42
      %s45 = sadd.s32 1, %s36
      %s46 = scalar_select %p43, %s45, %s36
      %p47 = scmp.ge.s32.totalorder %s46, 2
      %s48 = scalar_select %p47, 0, %s46
      %s49 = ssub.s32 %s36, %s48
      %p50 = scmp.eq.s32.totalorder %s49, 0
      %s52 = sadd.s32 %s51, 1
      %s53 = scalar_select %p50, %s51, %s52
      %p56 = pneg %p50
      %p57 = scmp.eq.s32.totalorder %s29, 3
      %p58 = por %p56, %p57
      %p59 = scmp.ne.s32.totalorder %s51, %s54
      %p60 = scmp.eq.s32.totalorder %s29, 0
      %p61 = por %p59, %p60
      %p62 = scmp.ne.s32.totalorder %s51, %s54
      %p63 = scmp.eq.s32.totalorder %s34, 3
      %p64 = por %p62, %p63
      %p65 = scmp.ne.s32.totalorder %s54, %s55
      %p66 = scmp.eq.s32.totalorder %s34, 0
      %p67 = por %p65, %p66
      %p68 = scmp.ne.s32.totalorder %s54, %s55
      %p69 = scmp.eq.s32.totalorder %s35, 3
      %p70 = por %p68, %p69
      %p72 = scmp.ne.s32.totalorder %s55, %s71
      %p73 = scmp.eq.s32.totalorder %s35, 0
      %p74 = por %p72, %p73
      %s76 = sadd.s32 %s75, 1
      %p79 = scmp.eq.s32.totalorder %s29, 3
      %p80 = scmp.ne.s32.totalorder %s75, %s77
      %p81 = scmp.eq.s32.totalorder %s29, 0
      %p82 = por %p80, %p81
      %p83 = scmp.ne.s32.totalorder %s75, %s77
      %p84 = scmp.eq.s32.totalorder %s34, 3
      %p85 = por %p83, %p84
      %p86 = scmp.ne.s32.totalorder %s77, %s78
      %p87 = scmp.eq.s32.totalorder %s34, 0
      %p88 = por %p86, %p87
      %p89 = scmp.ne.s32.totalorder %s77, %s78
      %p90 = scmp.eq.s32.totalorder %s35, 3
      %p91 = por %p89, %p90
      %p93 = scmp.ne.s32.totalorder %s78, %s92
      %p94 = scmp.eq.s32.totalorder %s35, 0
      %p95 = por %p93, %p94
      %s96 = ssub.s32 %s37, %s44
      %p97 = scmp.eq.s32.totalorder %s96, 0
      %s99 = sadd.s32 %s98, 1
      %s100 = scalar_select %p97, %s98, %s99
      %p103 = pneg %p97
      %p104 = scmp.eq.s32.totalorder %s29, 3
      %p105 = por %p103, %p104
      %p106 = scmp.ne.s32.totalorder %s98, %s101
      %p107 = scmp.eq.s32.totalorder %s29, 0
      %p108 = por %p106, %p107
      %p109 = scmp.ne.s32.totalorder %s98, %s101
      %p110 = scmp.eq.s32.totalorder %s34, 3
      %p111 = por %p109, %p110
      %p112 = scmp.ne.s32.totalorder %s101, %s102
      %p113 = scmp.eq.s32.totalorder %s34, 0
      %p114 = por %p112, %p113
      %p115 = scmp.ne.s32.totalorder %s101, %s102
      %p116 = scmp.eq.s32.totalorder %s35, 3
      %p117 = por %p115, %p116
      %p119 = scmp.ne.s32.totalorder %s102, %s118
      %p120 = scmp.eq.s32.totalorder %s35, 0
      %p121 = por %p119, %p120
      %s122 = ssub.s32 %s37, %s44
      %p123 = scmp.eq.s32.totalorder %s122, 0
      %s125 = sadd.s32 %s124, 1
      %s126 = scalar_select %p123, %s124, %s125
      %p129 = pneg %p123
      %p130 = scmp.eq.s32.totalorder %s29, 3
      %p131 = por %p129, %p130
      %p132 = scmp.ne.s32.totalorder %s124, %s127
      %p133 = scmp.eq.s32.totalorder %s29, 0
      %p134 = por %p132, %p133
      %p135 = scmp.ne.s32.totalorder %s124, %s127
      %p136 = scmp.eq.s32.totalorder %s34, 3
      %p137 = por %p135, %p136
      %p138 = scmp.ne.s32.totalorder %s127, %s128
      %p139 = scmp.eq.s32.totalorder %s34, 0
      %p140 = por %p138, %p139
      %p141 = scmp.ne.s32.totalorder %s127, %s128
      %p142 = scmp.eq.s32.totalorder %s35, 3
      %p143 = por %p141, %p142
      %p145 = scmp.ne.s32.totalorder %s128, %s144
      %p146 = scmp.eq.s32.totalorder %s35, 0
      %p147 = por %p145, %p146
      %s148 = ssub.s32 %s37, %s44
      %p149 = scmp.eq.s32.totalorder %s148, 0
      %s151 = sadd.s32 %s150, 1
      %s152 = scalar_select %p149, %s150, %s151
      %p155 = pneg %p149
      %p156 = scmp.eq.s32.totalorder %s29, 3
      %p157 = por %p155, %p156
      %p158 = scmp.ne.s32.totalorder %s150, %s153
      %p159 = scmp.eq.s32.totalorder %s29, 0
      %p160 = por %p158, %p159
      %p161 = scmp.ne.s32.totalorder %s150, %s153
      %p162 = scmp.eq.s32.totalorder %s34, 3
      %p163 = por %p161, %p162
      %p164 = scmp.ne.s32.totalorder %s153, %s154
      %p165 = scmp.eq.s32.totalorder %s34, 0
      %p166 = por %p164, %p165
      %p167 = scmp.ne.s32.totalorder %s153, %s154
      %p168 = scmp.eq.s32.totalorder %s35, 3
      %p169 = por %p167, %p168
      %p171 = scmp.ne.s32.totalorder %s154, %s170
      %p172 = scmp.eq.s32.totalorder %s35, 0
      %p173 = por %p171, %p172
      %s174 = ssub.s32 %s37, %s44
      %p175 = scmp.eq.s32.totalorder %s174, 0
      %s177 = sadd.s32 %s176, 1
      %s178 = scalar_select %p175, %s176, %s177
      %p181 = pneg %p175
      %p182 = scmp.eq.s32.totalorder %s29, 3
      %p183 = por %p181, %p182
      %p184 = scmp.ne.s32.totalorder %s176, %s179
      %p185 = scmp.eq.s32.totalorder %s29, 0
      %p186 = por %p184, %p185
      %p187 = scmp.ne.s32.totalorder %s176, %s179
      %p188 = scmp.eq.s32.totalorder %s34, 3
      %p189 = por %p187, %p188
      %p190 = scmp.ne.s32.totalorder %s179, %s180
      %p191 = scmp.eq.s32.totalorder %s34, 0
      %p192 = por %p190, %p191
      %p193 = scmp.ne.s32.totalorder %s179, %s180
      %p194 = scmp.eq.s32.totalorder %s35, 3
      %p195 = por %p193, %p194
      %p197 = scmp.ne.s32.totalorder %s180, %s196
      %p198 = scmp.eq.s32.totalorder %s35, 0
      %p199 = por %p197, %p198
      %s200 = ssub.s32 %s37, %s44
      %p201 = scmp.eq.s32.totalorder %s200, 0
      %s203 = sadd.s32 %s202, 1
      %s204 = scalar_select %p201, %s202, %s203
      %p207 = pneg %p201
      %p208 = scmp.eq.s32.totalorder %s29, 3
      %p209 = por %p207, %p208
      %p210 = scmp.ne.s32.totalorder %s202, %s205
      %p211 = scmp.eq.s32.totalorder %s29, 0
      %p212 = por %p210, %p211
      %p213 = scmp.ne.s32.totalorder %s202, %s205
      %p214 = scmp.eq.s32.totalorder %s34, 3
      %p215 = por %p213, %p214
      %p216 = scmp.ne.s32.totalorder %s205, %s206
      %p217 = scmp.eq.s32.totalorder %s34, 0
      %p218 = por %p216, %p217
      %p219 = scmp.ne.s32.totalorder %s205, %s206
      %p220 = scmp.eq.s32.totalorder %s35, 3
      %p221 = por %p219, %p220
      %p223 = scmp.ne.s32.totalorder %s206, %s222
      %p224 = scmp.eq.s32.totalorder %s35, 0
      %p225 = por %p223, %p224
      %s226 = ssub.s32 %s37, %s44
      %p227 = scmp.eq.s32.totalorder %s226, 0
      %s229 = sadd.s32 %s228, 1
      %s230 = scalar_select %p227, %s228, %s229
      %p233 = pneg %p227
      %p234 = scmp.eq.s32.totalorder %s29, 3
      %p235 = por %p233, %p234
      %p236 = scmp.ne.s32.totalorder %s228, %s231
      %p237 = scmp.eq.s32.totalorder %s29, 0
      %p238 = por %p236, %p237
      %p239 = scmp.ne.s32.totalorder %s228, %s231
      %p240 = scmp.eq.s32.totalorder %s34, 3
      %p241 = por %p239, %p240
      %p242 = scmp.ne.s32.totalorder %s231, %s232
      %p243 = scmp.eq.s32.totalorder %s34, 0
      %p244 = por %p242, %p243
      %p245 = scmp.ne.s32.totalorder %s231, %s232
      %p246 = scmp.eq.s32.totalorder %s35, 3
      %p247 = por %p245, %p246
      %p249 = scmp.ne.s32.totalorder %s232, %s248
      %p250 = scmp.eq.s32.totalorder %s35, 0
      %p251 = por %p249, %p250
      %s252 = ssub.s32 %s37, %s44
      %p253 = scmp.eq.s32.totalorder %s252, 0
      %s255 = sadd.s32 %s254, 1
      %s256 = scalar_select %p253, %s254, %s255
      %p259 = pneg %p253
      %p260 = scmp.eq.s32.totalorder %s29, 3
      %p261 = por %p259, %p260
      %p262 = scmp.ne.s32.totalorder %s254, %s257
      %p263 = scmp.eq.s32.totalorder %s29, 0
      %p264 = por %p262, %p263
      %p265 = scmp.ne.s32.totalorder %s254, %s257
      %p266 = scmp.eq.s32.totalorder %s34, 3
      %p267 = por %p265, %p266
      %p268 = scmp.ne.s32.totalorder %s257, %s258
      %p269 = scmp.eq.s32.totalorder %s34, 0
      %p270 = por %p268, %p269
      %p271 = scmp.ne.s32.totalorder %s257, %s258
      %p272 = scmp.eq.s32.totalorder %s35, 3
      %p273 = por %p271, %p272
      %p275 = scmp.ne.s32.totalorder %s258, %s274
      %p276 = scmp.eq.s32.totalorder %s35, 0
      %p277 = por %p275, %p276
      %s278 = ssub.s32 %s37, %s44
      %p279 = scmp.eq.s32.totalorder %s278, 0
      %s281 = sadd.s32 %s280, 1
      %s282 = scalar_select %p279, %s280, %s281
      %p285 = pneg %p279
      %p286 = scmp.eq.s32.totalorder %s29, 3
      %p287 = por %p285, %p286
      %p288 = scmp.ne.s32.totalorder %s280, %s283
      %p289 = scmp.eq.s32.totalorder %s29, 0
      %p290 = por %p288, %p289
      %p291 = scmp.ne.s32.totalorder %s280, %s283
      %p292 = scmp.eq.s32.totalorder %s34, 3
      %p293 = por %p291, %p292
      %p294 = scmp.ne.s32.totalorder %s283, %s284
      %p295 = scmp.eq.s32.totalorder %s34, 0
      %p296 = por %p294, %p295
      %p297 = scmp.ne.s32.totalorder %s283, %s284
      %p298 = scmp.eq.s32.totalorder %s35, 3
      %p299 = por %p297, %p298
      %p301 = scmp.ne.s32.totalorder %s284, %s300
      %p302 = scmp.eq.s32.totalorder %s35, 0
      %p303 = por %p301, %p302
      %s304 = ssub.s32 %s37, %s44
      %p305 = scmp.eq.s32.totalorder %s304, 0
      %s307 = sadd.s32 %s306, 1
      %s308 = scalar_select %p305, %s306, %s307
      %p311 = pneg %p305
      %p312 = scmp.eq.s32.totalorder %s29, 3
      %p313 = por %p311, %p312
      %p314 = scmp.ne.s32.totalorder %s306, %s309
      %p315 = scmp.eq.s32.totalorder %s29, 0
      %p316 = por %p314, %p315
      %p317 = scmp.ne.s32.totalorder %s306, %s309
      %p318 = scmp.eq.s32.totalorder %s34, 3
      %p319 = por %p317, %p318
      %p320 = scmp.ne.s32.totalorder %s309, %s310
      %p321 = scmp.eq.s32.totalorder %s34, 0
      %p322 = por %p320, %p321
      %p323 = scmp.ne.s32.totalorder %s309, %s310
      %p324 = scmp.eq.s32.totalorder %s35, 3
      %p325 = por %p323, %p324
      %p327 = scmp.ne.s32.totalorder %s310, %s326
      %p328 = scmp.eq.s32.totalorder %s35, 0
      %p329 = por %p327, %p328
      %s330 = ssub.s32 %s37, %s44
      %p331 = scmp.eq.s32.totalorder %s330, 0
      %s333 = sadd.s32 %s332, 1
      %s334 = scalar_select %p331, %s332, %s333
      %p337 = pneg %p331
      %p338 = scmp.eq.s32.totalorder %s29, 3
      %p339 = por %p337, %p338
      %p340 = scmp.ne.s32.totalorder %s332, %s335
      %p341 = scmp.eq.s32.totalorder %s29, 0
      %p342 = por %p340, %p341
      %p343 = scmp.ne.s32.totalorder %s332, %s335
      %p344 = scmp.eq.s32.totalorder %s34, 3
      %p345 = por %p343, %p344
      %p346 = scmp.ne.s32.totalorder %s335, %s336
      %p347 = scmp.eq.s32.totalorder %s34, 0
      %p348 = por %p346, %p347
      %p349 = scmp.ne.s32.totalorder %s335, %s336
      %p350 = scmp.eq.s32.totalorder %s35, 3
      %p351 = por %p349, %p350
      %p353 = scmp.ne.s32.totalorder %s336, %s352
      %p354 = scmp.eq.s32.totalorder %s35, 0
      %p355 = por %p353, %p354
      %s356 = ssub.s32 %s37, %s44
      %p357 = scmp.eq.s32.totalorder %s356, 0
      %s359 = sadd.s32 %s358, 1
      %s360 = scalar_select %p357, %s358, %s359
      %p363 = pneg %p357
      %p364 = scmp.eq.s32.totalorder %s29, 3
      %p365 = por %p363, %p364
      %p366 = scmp.ne.s32.totalorder %s358, %s361
      %p367 = scmp.eq.s32.totalorder %s29, 0
      %p368 = por %p366, %p367
      %p369 = scmp.ne.s32.totalorder %s358, %s361
      %p370 = scmp.eq.s32.totalorder %s34, 3
      %p371 = por %p369, %p370
      %p372 = scmp.ne.s32.totalorder %s361, %s362
      %p373 = scmp.eq.s32.totalorder %s34, 0
      %p374 = por %p372, %p373
      %p375 = scmp.ne.s32.totalorder %s361, %s362
      %p376 = scmp.eq.s32.totalorder %s35, 3
      %p377 = por %p375, %p376
      %p379 = scmp.ne.s32.totalorder %s362, %s378
      %p380 = scmp.eq.s32.totalorder %s35, 0
      %p381 = por %p379, %p380
      %s382 = ssub.s32 %s37, %s44
      %p383 = scmp.eq.s32.totalorder %s382, 0
      %s385 = sadd.s32 %s384, 1
      %s386 = scalar_select %p383, %s384, %s385
      %p389 = pneg %p383
      %p390 = scmp.eq.s32.totalorder %s29, 3
      %p391 = por %p389, %p390
      %p392 = scmp.ne.s32.totalorder %s384, %s387
      %p393 = scmp.eq.s32.totalorder %s29, 0
      %p394 = por %p392, %p393
      %p395 = scmp.ne.s32.totalorder %s384, %s387
      %p396 = scmp.eq.s32.totalorder %s34, 3
      %p397 = por %p395, %p396
      %p398 = scmp.ne.s32.totalorder %s387, %s388
      %p399 = scmp.eq.s32.totalorder %s34, 0
      %p400 = por %p398, %p399
      %p401 = scmp.ne.s32.totalorder %s387, %s388
      %p402 = scmp.eq.s32.totalorder %s35, 3
      %p403 = por %p401, %p402
      %p405 = scmp.ne.s32.totalorder %s388, %s404
      %p406 = scmp.eq.s32.totalorder %s35, 0
      %p407 = por %p405, %p406
      %s409 = sadd.s32 %s408, 1
      %p412 = scmp.eq.s32.totalorder %s29, 3
      %p413 = scmp.ne.s32.totalorder %s408, %s410
      %p414 = scmp.eq.s32.totalorder %s29, 0
      %p415 = por %p413, %p414
      %p416 = scmp.ne.s32.totalorder %s408, %s410
      %p417 = scmp.eq.s32.totalorder %s34, 3
      %p418 = por %p416, %p417
      %p419 = scmp.ne.s32.totalorder %s410, %s411
      %p420 = scmp.eq.s32.totalorder %s34, 0
      %p421 = por %p419, %p420
      %p422 = scmp.ne.s32.totalorder %s410, %s411
      %p423 = scmp.eq.s32.totalorder %s35, 3
      %p424 = por %p422, %p423
      %p426 = scmp.ne.s32.totalorder %s411, %s425
      %p427 = scmp.eq.s32.totalorder %s35, 0
      %p428 = por %p426, %p427
      %s430 = sadd.s32 %s429, 1
      %p433 = scmp.eq.s32.totalorder %s29, 3
      %p434 = scmp.ne.s32.totalorder %s429, %s431
      %p435 = scmp.eq.s32.totalorder %s29, 0
      %p436 = por %p434, %p435
      %p437 = scmp.ne.s32.totalorder %s429, %s431
      %p438 = scmp.eq.s32.totalorder %s34, 3
      %p439 = por %p437, %p438
      %p440 = scmp.ne.s32.totalorder %s431, %s432
      %p441 = scmp.eq.s32.totalorder %s34, 0
      %p442 = por %p440, %p441
      %p443 = scmp.ne.s32.totalorder %s431, %s432
      %p444 = scmp.eq.s32.totalorder %s35, 3
      %p445 = por %p443, %p444
      %p447 = scmp.ne.s32.totalorder %s432, %s446
      %p448 = scmp.eq.s32.totalorder %s35, 0
      %p449 = por %p447, %p448
      %s450 = ssub.s32 %s36, %s48
      %p451 = scmp.eq.s32.totalorder %s450, 0
      %s453 = sadd.s32 %s452, 1
      %s454 = scalar_select %p451, %s452, %s453
      %p457 = pneg %p451
      %p458 = scmp.eq.s32.totalorder %s29, 3
      %p459 = por %p457, %p458
      %p460 = scmp.ne.s32.totalorder %s452, %s455
      %p461 = scmp.eq.s32.totalorder %s29, 0
      %p462 = por %p460, %p461
      %p463 = scmp.ne.s32.totalorder %s452, %s455
      %p464 = scmp.eq.s32.totalorder %s34, 3
      %p465 = por %p463, %p464
      %p466 = scmp.ne.s32.totalorder %s455, %s456
      %p467 = scmp.eq.s32.totalorder %s34, 0
      %p468 = por %p466, %p467
      %p469 = scmp.ne.s32.totalorder %s455, %s456
      %p470 = scmp.eq.s32.totalorder %s35, 3
      %p471 = por %p469, %p470
      %p473 = scmp.ne.s32.totalorder %s456, %s472
      %p474 = scmp.eq.s32.totalorder %s35, 0
      %p475 = por %p473, %p474
      %p476 = scmp.le.s32.totalorder 1, %s29
      %p477 = scmp.lt.s32.totalorder %s29, 5
      %p478 = pnand %p476, %p477
      %p479 = pneg %p478
      // Predicated region
      $region9: #{tpu_custom_call.1} parent=5 // pred_check
        _
      $region10: #{tpu_custom_call.1} parent=5 // pred_check_branch
        %481 = sbr.rel (%p478) target = $region12
      $region11: #{tpu_custom_call.1} parent=5 // pred_region
        %s482 = ssub.s32 %s29, 1
        // Predicated region
        $region13: #{tpu_custom_call.1} parent=11 // pred_check
          %p483 = pneg %p88
        $region14: #{tpu_custom_call.1} parent=11 // pred_check_branch
          %485 = sbr.rel (%p483) target = $region16
        $region15: #{tpu_custom_call.1} parent=11 // pred_region
          %s487 = ssub.s32 128, 128
          %488 = vsyncadd [#allocation7], %s487
          %s490 = sshll.u32 [#allocation6], 4
          %s491 = int_to_ptr.vmem [resolvable:$true] %s490
          %493 = dma.hbm_to_vmem [thread:$0]  %s1, 128, %s491, [#allocation7]
        $region16: #{tpu_custom_call.1} parent=11 // pred_fallthru
          _
        // Predicated region
        $region17: #{tpu_custom_call.1} parent=11 // pred_check
          %p494 = pneg %p421
        $region18: #{tpu_custom_call.1} parent=11 // pred_check_branch
          %496 = sbr.rel (%p494) target = $region20
        $region19: #{tpu_custom_call.1} parent=11 // pred_region
          _
        $region20: #{tpu_custom_call.1} parent=11 // pred_fallthru
          _
        // Predicated region
        $region21: #{tpu_custom_call.1} parent=11 // pred_check
          %p497 = pneg %p442
        $region22: #{tpu_custom_call.1} parent=11 // pred_check_branch
          %499 = sbr.rel (%p497) target = $region24
        $region23: #{tpu_custom_call.1} parent=11 // pred_region
          _
        $region24: #{tpu_custom_call.1} parent=11 // pred_fallthru
          _
      $region12: #{tpu_custom_call.1} parent=5 // pred_fallthru
        _
      %p500 = scmp.lt.s32.totalorder %s29, 4
      // Predicated region
      $region25: #{tpu_custom_call.1} parent=5 // pred_check
        %p501 = pneg %p500
      $region26: #{tpu_custom_call.1} parent=5 // pred_check_branch
        %503 = sbr.rel (%p501) target = $region28
      $region27: #{tpu_custom_call.1} parent=5 // pred_region
        // Predicated region
        $region29: #{tpu_custom_call.1} parent=27 // pred_check
          %p504 = pneg %p61
        $region30: #{tpu_custom_call.1} parent=27 // pred_check_branch
          %506 = sbr.rel (%p504) target = $region32
        $region31: #{tpu_custom_call.1} parent=27 // pred_region
          %s507 = sand.u32 %s29, 1
          %s508 = scalar_lea.sflag [#allocation4], %s507
          %s509 = sand.u32 %s51, 1
          %s510 = smul.addr %s509, 8
          %s511 = scalar_lea.vmem [#allocation3], %s510
          %s513 = ssub.s32 128, 128
          %514 = vsyncadd %s508, %s513
          %s515 = smul.addr %s36, 128
          %s516 = scalar_lea.hbm %s0, %s515
          %s518 = sshll.u32 %s511, 4
          %s519 = int_to_ptr.vmem [resolvable:$true] %s518
          %521 = dma.hbm_to_vmem [thread:$0]  %s516, 128, %s519, %s508
        $region32: #{tpu_custom_call.1} parent=27 // pred_fallthru
          _
        // Predicated region
        $region33: #{tpu_custom_call.1} parent=27 // pred_check
          %p522 = pneg %p108
        $region34: #{tpu_custom_call.1} parent=27 // pred_check_branch
          %524 = sbr.rel (%p522) target = $region36
        $region35: #{tpu_custom_call.1} parent=27 // pred_region
          %s525 = sand.u32 %s29, 1
          %s526 = scalar_lea.sflag [#allocation4], %s525
          %s527 = sand.u32 %s98, 1
          %s528 = scalar_lea.vmem [#allocation8], %s527
          %s530 = ssub.s32 16, 16
          %531 = vsyncadd %s526, %s530
          %s532 = smul.addr %s37, 16
          %s533 = scalar_lea.hbm %s2, %s532
          %s535 = sshll.u32 %s528, 4
          %s536 = int_to_ptr.vmem [resolvable:$true] %s535
          %538 = dma.hbm_to_vmem [thread:$0]  %s533, 16, %s536, %s526
        $region36: #{tpu_custom_call.1} parent=27 // pred_fallthru
          _
        // Predicated region
        $region37: #{tpu_custom_call.1} parent=27 // pred_check
          %p539 = pneg %p134
        $region38: #{tpu_custom_call.1} parent=27 // pred_check_branch
          %541 = sbr.rel (%p539) target = $region40
        $region39: #{tpu_custom_call.1} parent=27 // pred_region
          %s542 = sand.u32 %s29, 1
          %s543 = scalar_lea.sflag [#allocation4], %s542
          %s544 = sand.u32 %s124, 1
          %s545 = scalar_lea.vmem [#allocation9], %s544
          %s547 = ssub.s32 16, 16
          %548 = vsyncadd %s543, %s547
          %s549 = smul.addr %s37, 16
          %s550 = scalar_lea.hbm %s3, %s549
          %s552 = sshll.u32 %s545, 4
          %s553 = int_to_ptr.vmem [resolvable:$true] %s552
          %555 = dma.hbm_to_vmem [thread:$0]  %s550, 16, %s553, %s543
        $region40: #{tpu_custom_call.1} parent=27 // pred_fallthru
          _
        // Predicated region
        $region41: #{tpu_custom_call.1} parent=27 // pred_check
          %p556 = pneg %p160
        $region42: #{tpu_custom_call.1} parent=27 // pred_check_branch
          %558 = sbr.rel (%p556) target = $region44
        $region43: #{tpu_custom_call.1} parent=27 // pred_region
          %s559 = sand.u32 %s29, 1
          %s560 = scalar_lea.sflag [#allocation4], %s559
          %s561 = sand.u32 %s150, 1
          %s562 = smul.addr %s561, 384
          %s563 = scalar_lea.vmem [#allocation10], %s562
          %s565 = ssub.s32 6144, 6144
          %566 = vsyncadd %s560, %s565
          %s567 = smul.addr %s37, 48
          %s568 = smul.addr %s567, 128
          %s569 = scalar_lea.hbm %s4, %s568
          %s570 = sshll.u32 %s563, 4
          %s571 = int_to_ptr.vmem [resolvable:$true] %s570
          %576 = dma.hbm_to_vmem [thread:$0]  %s569, 6144, %s571, %s560, 384, 384, 24
        $region44: #{tpu_custom_call.1} parent=27 // pred_fallthru
          _
        // Predicated region
        $region45: #{tpu_custom_call.1} parent=27 // pred_check
          %p577 = pneg %p186
        $region46: #{tpu_custom_call.1} parent=27 // pred_check_branch
          %579 = sbr.rel (%p577) target = $region48
        $region47: #{tpu_custom_call.1} parent=27 // pred_region
          %p580 = scmp.lt.s32.totalorder %s37, 1
          %s581 = scalar_select %p580, %s37, 1
          %s582 = smul.addr %s581, 3
          %s583 = scalar_lea.vmem %s5, %s582
        $region48: #{tpu_custom_call.1} parent=27 // pred_fallthru
          _
        // Predicated region
        $region49: #{tpu_custom_call.1} parent=27 // pred_check
          %p584 = pneg %p212
        $region50: #{tpu_custom_call.1} parent=27 // pred_check_branch
          %586 = sbr.rel (%p584) target = $region52
        $region51: #{tpu_custom_call.1} parent=27 // pred_region
          %s587 = sand.u32 %s29, 1
          %s588 = scalar_lea.sflag [#allocation4], %s587
          %s589 = sand.u32 %s202, 1
          %s590 = smul.addr %s589, 128
          %s591 = scalar_lea.vmem [#allocation11], %s590
          %s593 = ssub.s32 2048, 2048
          %594 = vsyncadd %s588, %s593
          %s595 = smul.addr %s37, 16
          %s596 = smul.addr %s595, 128
          %s597 = scalar_lea.hbm %s6, %s596
          %s598 = sshll.u32 %s591, 4
          %s599 = int_to_ptr.vmem [resolvable:$true] %s598
          %604 = dma.hbm_to_vmem [thread:$0]  %s597, 2048, %s599, %s588, 128, 128, 8
        $region52: #{tpu_custom_call.1} parent=27 // pred_fallthru
          _
        // Predicated region
        $region53: #{tpu_custom_call.1} parent=27 // pred_check
          %p605 = pneg %p238
        $region54: #{tpu_custom_call.1} parent=27 // pred_check_branch
          %607 = sbr.rel (%p605) target = $region56
        $region55: #{tpu_custom_call.1} parent=27 // pred_region
          %p608 = scmp.lt.s32.totalorder %s37, 1
          %s609 = scalar_select %p608, %s37, 1
          %s610 = scalar_lea.vmem %s7, %s609
        $region56: #{tpu_custom_call.1} parent=27 // pred_fallthru
          _
        // Predicated region
        $region57: #{tpu_custom_call.1} parent=27 // pred_check
          %p611 = pneg %p264
        $region58: #{tpu_custom_call.1} parent=27 // pred_check_branch
          %613 = sbr.rel (%p611) target = $region60
        $region59: #{tpu_custom_call.1} parent=27 // pred_region
          %p614 = scmp.lt.s32.totalorder %s37, 1
          %s615 = scalar_select %p614, %s37, 1
          %s616 = scalar_lea.vmem %s8, %s615
        $region60: #{tpu_custom_call.1} parent=27 // pred_fallthru
          _
        // Predicated region
        $region61: #{tpu_custom_call.1} parent=27 // pred_check
          %p617 = pneg %p290
        $region62: #{tpu_custom_call.1} parent=27 // pred_check_branch
          %619 = sbr.rel (%p617) target = $region64
        $region63: #{tpu_custom_call.1} parent=27 // pred_region
          %p620 = scmp.lt.s32.totalorder %s37, 1
          %s621 = scalar_select %p620, %s37, 1
          %s622 = scalar_lea.vmem %s9, %s621
        $region64: #{tpu_custom_call.1} parent=27 // pred_fallthru
          _
        // Predicated region
        $region65: #{tpu_custom_call.1} parent=27 // pred_check
          %p623 = pneg %p316
        $region66: #{tpu_custom_call.1} parent=27 // pred_check_branch
          %625 = sbr.rel (%p623) target = $region68
        $region67: #{tpu_custom_call.1} parent=27 // pred_region
          %s626 = sand.u32 %s29, 1
          %s627 = scalar_lea.sflag [#allocation4], %s626
          %s628 = sand.u32 %s306, 1
          %s629 = smul.addr %s628, 512
          %s630 = scalar_lea.vmem [#allocation12], %s629
          %s632 = ssub.s32 8192, 8192
          %633 = vsyncadd %s627, %s632
          %s634 = smul.addr %s37, 64
          %s635 = smul.addr %s634, 128
          %s636 = scalar_lea.hbm %s10, %s635
          %s637 = sshll.u32 %s630, 4
          %s638 = int_to_ptr.vmem [resolvable:$true] %s637
          %643 = dma.hbm_to_vmem [thread:$0]  %s636, 8192, %s638, %s627, 512, 512, 32
        $region68: #{tpu_custom_call.1} parent=27 // pred_fallthru
          _
        // Predicated region
        $region69: #{tpu_custom_call.1} parent=27 // pred_check
          %p644 = pneg %p342
        $region70: #{tpu_custom_call.1} parent=27 // pred_check_branch
          %646 = sbr.rel (%p644) target = $region72
        $region71: #{tpu_custom_call.1} parent=27 // pred_region
          %p647 = scmp.lt.s32.totalorder %s37, 1
          %s648 = scalar_select %p647, %s37, 1
          %s649 = smul.addr %s648, 4
          %s650 = scalar_lea.vmem %s11, %s649
        $region72: #{tpu_custom_call.1} parent=27 // pred_fallthru
          _
        // Predicated region
        $region73: #{tpu_custom_call.1} parent=27 // pred_check
          %p651 = pneg %p368
        $region74: #{tpu_custom_call.1} parent=27 // pred_check_branch
          %653 = sbr.rel (%p651) target = $region76
        $region75: #{tpu_custom_call.1} parent=27 // pred_region
          %s654 = sand.u32 %s29, 1
          %s655 = scalar_lea.sflag [#allocation4], %s654
          %s656 = sand.u32 %s358, 1
          %s657 = smul.addr %s656, 512
          %s658 = scalar_lea.vmem [#allocation13], %s657
          %s660 = ssub.s32 8192, 8192
          %661 = vsyncadd %s655, %s660
          %s662 = smul.addr %s37, 64
          %s663 = smul.addr %s662, 128
          %s664 = scalar_lea.hbm %s12, %s663
          %s665 = sshll.u32 %s658, 4
          %s666 = int_to_ptr.vmem [resolvable:$true] %s665
          %671 = dma.hbm_to_vmem [thread:$0]  %s664, 8192, %s666, %s655, 128, 128, 8
        $region76: #{tpu_custom_call.1} parent=27 // pred_fallthru
          _
        // Predicated region
        $region77: #{tpu_custom_call.1} parent=27 // pred_check
          %p672 = pneg %p394
        $region78: #{tpu_custom_call.1} parent=27 // pred_check_branch
          %674 = sbr.rel (%p672) target = $region80
        $region79: #{tpu_custom_call.1} parent=27 // pred_region
          %p675 = scmp.lt.s32.totalorder %s37, 1
          %s676 = scalar_select %p675, %s37, 1
          %s677 = scalar_lea.vmem %s13, %s676
        $region80: #{tpu_custom_call.1} parent=27 // pred_fallthru
          _
      $region28: #{tpu_custom_call.1} parent=5 // pred_fallthru
        _
      %p678 = scmp.le.s32.totalorder 1, %s29
      %p679 = scmp.lt.s32.totalorder %s29, 5
      %p680 = pnand %p678, %p679
      %p681 = pneg %p680
      // Predicated region
      $region81: #{tpu_custom_call.1} parent=5 // pred_check
        _
      $region82: #{tpu_custom_call.1} parent=5 // pred_check_branch
        %683 = sbr.rel (%p680) target = $region84
      $region83: #{tpu_custom_call.1} parent=5 // pred_region
        %s684 = ssub.s32 %s29, 1
        %s685 = sand.u32 %s34, 1
        %s686 = scalar_lea.sflag [#allocation4], %s685
        %s687 = sand.u32 %s54, 1
        %s688 = smul.addr %s687, 8
        %s689 = scalar_lea.vmem [#allocation3], %s688
        // Predicated region
        $region85: #{tpu_custom_call.1} parent=83 // pred_check
          %p690 = pneg %p67
        $region86: #{tpu_custom_call.1} parent=83 // pred_check_branch
          %692 = sbr.rel (%p690) target = $region88
        $region87: #{tpu_custom_call.1} parent=83 // pred_region
          %693 = dma.done %s686, 128
        $region88: #{tpu_custom_call.1} parent=83 // pred_fallthru
          _
        // Predicated region
        $region89: #{tpu_custom_call.1} parent=83 // pred_check
          %p694 = pneg %p88
        $region90: #{tpu_custom_call.1} parent=83 // pred_check_branch
          %696 = sbr.rel (%p694) target = $region92
        $region91: #{tpu_custom_call.1} parent=83 // pred_region
          %697 = dma.done [#allocation7], 128
        $region92: #{tpu_custom_call.1} parent=83 // pred_fallthru
          _
        %s698 = sand.u32 %s34, 1
        %s699 = scalar_lea.sflag [#allocation4], %s698
        %s700 = sand.u32 %s101, 1
        %s701 = scalar_lea.vmem [#allocation8], %s700
        // Predicated region
        $region93: #{tpu_custom_call.1} parent=83 // pred_check
          %p702 = pneg %p114
        $region94: #{tpu_custom_call.1} parent=83 // pred_check_branch
          %704 = sbr.rel (%p702) target = $region96
        $region95: #{tpu_custom_call.1} parent=83 // pred_region
          %705 = dma.done %s699, 16
        $region96: #{tpu_custom_call.1} parent=83 // pred_fallthru
          _
        %s706 = sand.u32 %s34, 1
        %s707 = scalar_lea.sflag [#allocation4], %s706
        %s708 = sand.u32 %s127, 1
        %s709 = scalar_lea.vmem [#allocation9], %s708
        // Predicated region
        $region97: #{tpu_custom_call.1} parent=83 // pred_check
          %p710 = pneg %p140
        $region98: #{tpu_custom_call.1} parent=83 // pred_check_branch
          %712 = sbr.rel (%p710) target = $region100
        $region99: #{tpu_custom_call.1} parent=83 // pred_region
          %713 = dma.done %s707, 16
        $region100: #{tpu_custom_call.1} parent=83 // pred_fallthru
          _
        %s714 = sand.u32 %s34, 1
        %s715 = scalar_lea.sflag [#allocation4], %s714
        %s716 = sand.u32 %s153, 1
        %s717 = smul.addr %s716, 384
        %s718 = scalar_lea.vmem [#allocation10], %s717
        // Predicated region
        $region101: #{tpu_custom_call.1} parent=83 // pred_check
          %p719 = pneg %p166
        $region102: #{tpu_custom_call.1} parent=83 // pred_check_branch
          %721 = sbr.rel (%p719) target = $region104
        $region103: #{tpu_custom_call.1} parent=83 // pred_region
          %722 = dma.done %s715, 6144
        $region104: #{tpu_custom_call.1} parent=83 // pred_fallthru
          _
        %s723 = sand.u32 %s34, 1
        %s724 = scalar_lea.sflag [#allocation4], %s723
        %s725 = sand.u32 %s205, 1
        %s726 = smul.addr %s725, 128
        %s727 = scalar_lea.vmem [#allocation11], %s726
        // Predicated region
        $region105: #{tpu_custom_call.1} parent=83 // pred_check
          %p728 = pneg %p218
        $region106: #{tpu_custom_call.1} parent=83 // pred_check_branch
          %730 = sbr.rel (%p728) target = $region108
        $region107: #{tpu_custom_call.1} parent=83 // pred_region
          %731 = dma.done %s724, 2048
        $region108: #{tpu_custom_call.1} parent=83 // pred_fallthru
          _
        %s732 = sand.u32 %s34, 1
        %s733 = scalar_lea.sflag [#allocation4], %s732
        %s734 = sand.u32 %s309, 1
        %s735 = smul.addr %s734, 512
        %s736 = scalar_lea.vmem [#allocation12], %s735
        // Predicated region
        $region109: #{tpu_custom_call.1} parent=83 // pred_check
          %p737 = pneg %p322
        $region110: #{tpu_custom_call.1} parent=83 // pred_check_branch
          %739 = sbr.rel (%p737) target = $region112
        $region111: #{tpu_custom_call.1} parent=83 // pred_region
          %740 = dma.done %s733, 8192
        $region112: #{tpu_custom_call.1} parent=83 // pred_fallthru
          _
        %s741 = sand.u32 %s34, 1
        %s742 = scalar_lea.sflag [#allocation4], %s741
        %s743 = sand.u32 %s361, 1
        %s744 = smul.addr %s743, 512
        %s745 = scalar_lea.vmem [#allocation13], %s744
        // Predicated region
        $region113: #{tpu_custom_call.1} parent=83 // pred_check
          %p746 = pneg %p374
        $region114: #{tpu_custom_call.1} parent=83 // pred_check_branch
          %748 = sbr.rel (%p746) target = $region116
        $region115: #{tpu_custom_call.1} parent=83 // pred_region
          %749 = dma.done %s742, 8192
        $region116: #{tpu_custom_call.1} parent=83 // pred_fallthru
          _
        %s750 = sand.u32 %s34, 1
        %s751 = scalar_lea.sflag [#allocation4], %s750
        %s752 = sand.u32 %s54, 1
        %s753 = smul.addr %s752, 8
        %s754 = scalar_lea.vmem [#allocation3], %s753
        %p755 = pneg %p67
        %p756 = pneg %p64
        %p757 = pneg %p88
        %p758 = pneg %p85
        %s759 = sand.u32 %s34, 1
        %s760 = scalar_lea.sflag [#allocation4], %s759
        %s761 = sand.u32 %s101, 1
        %s762 = scalar_lea.vmem [#allocation8], %s761
        %p763 = pneg %p114
        %p764 = pneg %p111
        %s765 = sand.u32 %s34, 1
        %s766 = scalar_lea.sflag [#allocation4], %s765
        %s767 = sand.u32 %s127, 1
        %s768 = scalar_lea.vmem [#allocation9], %s767
        %p769 = pneg %p140
        %p770 = pneg %p137
        %s771 = sand.u32 %s34, 1
        %s772 = scalar_lea.sflag [#allocation4], %s771
        %s773 = sand.u32 %s153, 1
        %s774 = smul.addr %s773, 384
        %s775 = scalar_lea.vmem [#allocation10], %s774
        %p776 = pneg %p166
        %p777 = pneg %p163
        %p778 = scmp.lt.s32.totalorder %s39, 1
        %s779 = scalar_select %p778, %s39, 1
        %s780 = smul.addr %s779, 3
        %s781 = scalar_lea.vmem %s5, %s780
        %p782 = pneg %p192
        %p783 = pneg %p189
        %s784 = sand.u32 %s34, 1
        %s785 = scalar_lea.sflag [#allocation4], %s784
        %s786 = sand.u32 %s205, 1
        %s787 = smul.addr %s786, 128
        %s788 = scalar_lea.vmem [#allocation11], %s787
        %p789 = pneg %p218
        %p790 = pneg %p215
        %p791 = scmp.lt.s32.totalorder %s39, 1
        %s792 = scalar_select %p791, %s39, 1
        %s793 = scalar_lea.vmem %s7, %s792
        %p794 = pneg %p244
        %p795 = pneg %p241
        %p796 = scmp.lt.s32.totalorder %s39, 1
        %s797 = scalar_select %p796, %s39, 1
        %s798 = scalar_lea.vmem %s8, %s797
        %p799 = pneg %p270
        %p800 = pneg %p267
        %p801 = scmp.lt.s32.totalorder %s39, 1
        %s802 = scalar_select %p801, %s39, 1
        %s803 = scalar_lea.vmem %s9, %s802
        %p804 = pneg %p296
        %p805 = pneg %p293
        %s806 = sand.u32 %s34, 1
        %s807 = scalar_lea.sflag [#allocation4], %s806
        %s808 = sand.u32 %s309, 1
        %s809 = smul.addr %s808, 512
        %s810 = scalar_lea.vmem [#allocation12], %s809
        %p811 = pneg %p322
        %p812 = pneg %p319
        %p813 = scmp.lt.s32.totalorder %s39, 1
        %s814 = scalar_select %p813, %s39, 1
        %s815 = smul.addr %s814, 4
        %s816 = scalar_lea.vmem %s11, %s815
        %p817 = pneg %p348
        %p818 = pneg %p345
        %s819 = sand.u32 %s34, 1
        %s820 = scalar_lea.sflag [#allocation4], %s819
        %s821 = sand.u32 %s361, 1
        %s822 = smul.addr %s821, 512
        %s823 = scalar_lea.vmem [#allocation13], %s822
        %p824 = pneg %p374
        %p825 = pneg %p371
        %p826 = scmp.lt.s32.totalorder %s39, 1
        %s827 = scalar_select %p826, %s39, 1
        %s828 = scalar_lea.vmem %s13, %s827
        %p829 = pneg %p400
        %p830 = pneg %p397
        %p831 = pneg %p421
        %p832 = pneg %p418
        %p833 = pneg %p442
        %p834 = pneg %p439
        %p835 = pneg %p468
        %p836 = pneg %p465
        %s837 = sand.u32 %s455, 1
        %s838 = scalar_lea.sflag [#allocation5], %s837
        %s839 = sand.u32 %s455, 1
        %s840 = smul.addr %s839, 8
        %s841 = scalar_lea.vmem [#allocation14], %s840
        %p842 = scmp.lt.s32.totalorder %s39, 1
        %s843 = scalar_select %p842, %s39, 1
        %s844 = smul.addr %s843, 3
        %s845 = scalar_lea.vmem %s5, %s844
        %p846 = scmp.lt.s32.totalorder %s39, 1
        %s847 = scalar_select %p846, %s39, 1
        %s848 = scalar_lea.vmem %s7, %s847
        %p849 = scmp.lt.s32.totalorder %s39, 1
        %s850 = scalar_select %p849, %s39, 1
        %s851 = scalar_lea.vmem %s8, %s850
        %p852 = scmp.lt.s32.totalorder %s39, 1
        %s853 = scalar_select %p852, %s39, 1
        %s854 = scalar_lea.vmem %s9, %s853
        %p855 = scmp.lt.s32.totalorder %s39, 1
        %s856 = scalar_select %p855, %s39, 1
        %s857 = smul.addr %s856, 4
        %s858 = scalar_lea.vmem %s11, %s857
        %p859 = scmp.lt.s32.totalorder %s39, 1
        %s860 = scalar_select %p859, %s39, 1
        %s861 = scalar_lea.vmem %s13, %s860
        %p862 = scmp.eq.s32.totalorder %s39, 0
        // Predicated region
        $region117: #{tpu_custom_call.1} parent=83 // pred_check
          %p863 = pneg %p862
        $region118: #{tpu_custom_call.1} parent=83 // pred_check_branch
          %865 = sbr.rel (%p863) target = $region120
        $region119: #{tpu_custom_call.1} parent=83 // pred_region
          %v866 = vld [vmem:[%s689] sm:$0xff]
          %v867 = vld [vmem:[#allocation6] sm:$0xff]
          %v868 = vadd.f32 %v866, %v867
          %869 = vst [vmem:[#allocation2] sm:$0xff] %v868
        $region120: #{tpu_custom_call.1} parent=83 // pred_fallthru
          _
        %v870 = vld [vmem:[#allocation2] sm:$0xff]
        %v871 = vld [vmem:[%s701] sm:$0x1]
        %v872 = vld [vmem:[%s709] sm:$0x1]
        %873 = vadd.xlane.f32.xlu0 %v870
        %v874 = vpop.xlane.xlu0 %873
        %v875 = vrcp.pop 128.0
        %v876 = vmul.f32 %v874, %v875
        %v877 = vsub.f32 %v870, %v876
        %v878 = vmul.f32 %v877, %v877
        %879 = vadd.xlane.f32.xlu0 %v878
        %v880 = vpop.xlane.xlu0 %879
        %v881 = vmul.f32 %v880, %v875
        %v882 = vadd.f32 %v881, 1e-06
        %v883 = vrsqrt.pop %v882
        %v884 = vmul.f32 %v877, %v883
        %v886 = vlaneseq
        %v887 = vshrl.u32 %v886, 7
        %v888 = vsub.s32 0, %v887
        %v889 = vrot.slane %v871, %v888
        %v891 = vmul.f32 %v884, %v889
        %v893 = vlaneseq
        %v894 = vshrl.u32 %v893, 7
        %v895 = vsub.s32 0, %v894
        %v896 = vrot.slane %v872, %v895
        %v898 = vadd.f32 %v891, %v896
        %v899 = vld [vmem:[%s718] sm:$0xff]
        %v900 = vld [vmem:[%s718 + $0x8] sm:$0xff]
        %v901 = vld [vmem:[%s718 + $0x10] sm:$0xff]
        %v902 = vld [vmem:[%s718 + $0x18] sm:$0xff]
        %v903 = vld [vmem:[%s718 + $0x20] sm:$0xff]
        %v904 = vld [vmem:[%s718 + $0x28] sm:$0xff]
        %v905 = vld [vmem:[%s718 + $0x30] sm:$0xff]
        %v906 = vld [vmem:[%s718 + $0x38] sm:$0xff]
        %v907 = vld [vmem:[%s718 + $0x40] sm:$0xff]
        %v908 = vld [vmem:[%s718 + $0x48] sm:$0xff]
        %v909 = vld [vmem:[%s718 + $0x50] sm:$0xff]
        %v910 = vld [vmem:[%s718 + $0x58] sm:$0xff]
        %v911 = vld [vmem:[%s718 + $0x60] sm:$0xff]
        %v912 = vld [vmem:[%s718 + $0x68] sm:$0xff]
        %v913 = vld [vmem:[%s718 + $0x70] sm:$0xff]
        %v914 = vld [vmem:[%s718 + $0x78] sm:$0xff]
        %v915 = vld [vmem:[%s718 + $0x80] sm:$0xff]
        %v916 = vld [vmem:[%s718 + $0x88] sm:$0xff]
        %v917 = vld [vmem:[%s718 + $0x90] sm:$0xff]
        %v918 = vld [vmem:[%s718 + $0x98] sm:$0xff]
        %v919 = vld [vmem:[%s718 + $0xa0] sm:$0xff]
        %v920 = vld [vmem:[%s718 + $0xa8] sm:$0xff]
        %v921 = vld [vmem:[%s718 + $0xb0] sm:$0xff]
        %v922 = vld [vmem:[%s718 + $0xb8] sm:$0xff]
        %v923 = vld [vmem:[%s718 + $0xc0] sm:$0xff]
        %v924 = vld [vmem:[%s718 + $0xc8] sm:$0xff]
        %v925 = vld [vmem:[%s718 + $0xd0] sm:$0xff]
        %v926 = vld [vmem:[%s718 + $0xd8] sm:$0xff]
        %v927 = vld [vmem:[%s718 + $0xe0] sm:$0xff]
        %v928 = vld [vmem:[%s718 + $0xe8] sm:$0xff]
        %v929 = vld [vmem:[%s718 + $0xf0] sm:$0xff]
        %v930 = vld [vmem:[%s718 + $0xf8] sm:$0xff]
        %v931 = vld [vmem:[%s718 + $0x100] sm:$0xff]
        %v932 = vld [vmem:[%s718 + $0x108] sm:$0xff]
        %v933 = vld [vmem:[%s718 + $0x110] sm:$0xff]
        %v934 = vld [vmem:[%s718 + $0x118] sm:$0xff]
        %v935 = vld [vmem:[%s718 + $0x120] sm:$0xff]
        %v936 = vld [vmem:[%s718 + $0x128] sm:$0xff]
        %v937 = vld [vmem:[%s718 + $0x130] sm:$0xff]
        %v938 = vld [vmem:[%s718 + $0x138] sm:$0xff]
        %v939 = vld [vmem:[%s718 + $0x140] sm:$0xff]
        %v940 = vld [vmem:[%s718 + $0x148] sm:$0xff]
        %v941 = vld [vmem:[%s718 + $0x150] sm:$0xff]
        %v942 = vld [vmem:[%s718 + $0x158] sm:$0xff]
        %v943 = vld [vmem:[%s718 + $0x160] sm:$0xff]
        %v944 = vld [vmem:[%s718 + $0x168] sm:$0xff]
        %v945 = vld [vmem:[%s718 + $0x170] sm:$0xff]
        %v946 = vld [vmem:[%s718 + $0x178] sm:$0xff]
        %v947 = vld [vmem:[%s845] sm:$0x7]
        %v949 = vlaneseq
        %v950 = vshrl.u32 %v949, 7
        %v951 = vsub.s32 0, %v950
        %v952 = vrot.slane %v947, %v951
        %v953 = vlaneseq
        %v954 = vshrl.u32 %v953, 7
        %v955 = vsub.s32 1, %v954
        %v956 = vrot.slane %v947, %v955
        %v957 = vlaneseq
        %v958 = vshrl.u32 %v957, 7
        %v959 = vsub.s32 2, %v958
        %v960 = vrot.slane %v947, %v959
        %964 = vmatprep.subr.mxu0 %v900
        %965 = vmatpush1.msra.mxu0 %v899
        %966 = vmatprep.subr.mxu0 %v903
        %967 = vmatpush1.msra.mxu0 %v902
        %968 = vmatprep.subr.mxu0 %v906
        %969 = vmatpush1.msra.mxu0 %v905
        %970 = vmatprep.subr.mxu0 %v909
        %971 = vmatpush1.msra.mxu0 %v908
        %972 = vmatprep.subr.mxu0 %v912
        %973 = vmatpush1.msra.mxu0 %v911
        %974 = vmatprep.subr.mxu0 %v915
        %975 = vmatpush1.msra.mxu0 %v914
        %976 = vmatprep.subr.mxu0 %v918
        %977 = vmatpush1.msra.mxu0 %v917
        %978 = vmatprep.subr.mxu0 %v921
        %979 = vmatpush1.msra.mxu0 %v920
        %980 = vmatprep.subr.mxu0 %v924
        %981 = vmatpush1.msra.mxu0 %v923
        %982 = vmatprep.subr.mxu0 %v927
        %983 = vmatpush1.msra.mxu0 %v926
        %984 = vmatprep.subr.mxu0 %v930
        %985 = vmatpush1.msra.mxu0 %v929
        %986 = vmatprep.subr.mxu0 %v933
        %987 = vmatpush1.msra.mxu0 %v932
        %988 = vmatprep.subr.mxu0 %v936
        %989 = vmatpush1.msra.mxu0 %v935
        %990 = vmatprep.subr.mxu0 %v939
        %991 = vmatpush1.msra.mxu0 %v938
        %992 = vmatprep.subr.mxu0 %v942
        %993 = vmatpush1.msra.mxu0 %v941
        %994 = vmatprep.subr.mxu0 %v945
        %995 = vmatpush1.msra.mxu0 %v944
        %996 = vmatprep.subr.mxu0 0.0
        %997 = vmatpush1.msra.mxu0 0.0
        %998 = vmatprep.subr.mxu0 0.0
        %999 = vmatpush1.msra.mxu0 0.0
        %1000 = vmatprep.subr.mxu0 0.0
        %1001 = vmatpush1.msra.mxu0 0.0
        %1002 = vmatprep.subr.mxu0 0.0
        %1003 = vmatpush1.msra.mxu0 0.0
        %1004 = vmatprep.subr.mxu0 0.0
        %1005 = vmatpush1.msra.mxu0 0.0
        %1006 = vmatprep.subr.mxu0 0.0
        %1007 = vmatpush1.msra.mxu0 0.0
        %1008 = vmatprep.subr.mxu0 0.0
        %1009 = vmatpush1.msra.mxu0 0.0
        %1010 = vmatprep.subr.mxu0 0.0
        %1011 = vmatpush1.msra.mxu0 0.0
        %1012 = vmatprep.subr.mxu0 0.0
        %1013 = vmatpush1.msra.mxu0 0.0
        %1014 = vmatprep.subr.mxu0 0.0
        %1015 = vmatpush1.msra.mxu0 0.0
        %1016 = vmatprep.subr.mxu0 0.0
        %1017 = vmatpush1.msra.mxu0 0.0
        %1018 = vmatprep.subr.mxu0 0.0
        %1019 = vmatpush1.msra.mxu0 0.0
        %1020 = vmatprep.subr.mxu0 0.0
        %1021 = vmatpush1.msra.mxu0 0.0
        %1022 = vmatprep.subr.mxu0 0.0
        %1023 = vmatpush1.msra.mxu0 0.0
        %1024 = vmatprep.subr.mxu0 0.0
        %1025 = vmatpush1.msra.mxu0 0.0
        %1026 = vmatprep.subr.mxu0 0.0
        %1027 = vmatpush1.msra.mxu0 0.0
        %1028 = vmatprep.mubr.f32.mxu0 0.0
        %1029 = vmatmul.mubr.f32.gmra.mrb[0].mxu0 %v898
        %v1030 = vpop.f32.mrb[0].mxu0
        %v1031 = vadd.f32 %v952, %v1030
        %v1032 = vpop.f32.mrb[0].mxu0
        %v1033 = vadd.f32 %v956, %v1032
        %1034 = vdwg.mxu0
        %1035 = vmatprep.subr.mxu0 0.0
        %1036 = vmatpush1.msra.mxu0 %v901
        %1037 = vmatprep.subr.mxu0 0.0
        %1038 = vmatpush1.msra.mxu0 %v904
        %1039 = vmatprep.subr.mxu0 0.0
        %1040 = vmatpush1.msra.mxu0 %v907
        %1041 = vmatprep.subr.mxu0 0.0
        %1042 = vmatpush1.msra.mxu0 %v910
        %1043 = vmatprep.subr.mxu0 0.0
        %1044 = vmatpush1.msra.mxu0 %v913
        %1045 = vmatprep.subr.mxu0 0.0
        %1046 = vmatpush1.msra.mxu0 %v916
        %1047 = vmatprep.subr.mxu0 0.0
        %1048 = vmatpush1.msra.mxu0 %v919
        %1049 = vmatprep.subr.mxu0 0.0
        %1050 = vmatpush1.msra.mxu0 %v922
        %1051 = vmatprep.subr.mxu0 0.0
        %1052 = vmatpush1.msra.mxu0 %v925
        %1053 = vmatprep.subr.mxu0 0.0
        %1054 = vmatpush1.msra.mxu0 %v928
        %1055 = vmatprep.subr.mxu0 0.0
        %1056 = vmatpush1.msra.mxu0 %v931
        %1057 = vmatprep.subr.mxu0 0.0
        %1058 = vmatpush1.msra.mxu0 %v934
        %1059 = vmatprep.subr.mxu0 0.0
        %1060 = vmatpush1.msra.mxu0 %v937
        %1061 = vmatprep.subr.mxu0 0.0
        %1062 = vmatpush1.msra.mxu0 %v940
        %1063 = vmatprep.subr.mxu0 0.0
        %1064 = vmatpush1.msra.mxu0 %v943
        %1065 = vmatprep.subr.mxu0 0.0
        %1066 = vmatpush1.msra.mxu0 %v946
        %1067 = vmatprep.subr.mxu0 0.0
        %1068 = vmatpush1.msra.mxu0 0.0
        %1069 = vmatprep.subr.mxu0 0.0
        %1070 = vmatpush1.msra.mxu0 0.0
        %1071 = vmatprep.subr.mxu0 0.0
        %1072 = vmatpush1.msra.mxu0 0.0
        %1073 = vmatprep.subr.mxu0 0.0
        %1074 = vmatpush1.msra.mxu0 0.0
        %1075 = vmatprep.subr.mxu0 0.0
        %1076 = vmatpush1.msra.mxu0 0.0
        %1077 = vmatprep.subr.mxu0 0.0
        %1078 = vmatpush1.msra.mxu0 0.0
        %1079 = vmatprep.subr.mxu0 0.0
        %1080 = vmatpush1.msra.mxu0 0.0
        %1081 = vmatprep.subr.mxu0 0.0
        %1082 = vmatpush1.msra.mxu0 0.0
        %1083 = vmatprep.subr.mxu0 0.0
        %1084 = vmatpush1.msra.mxu0 0.0
        %1085 = vmatprep.subr.mxu0 0.0
        %1086 = vmatpush1.msra.mxu0 0.0
        %1087 = vmatprep.subr.mxu0 0.0
        %1088 = vmatpush1.msra.mxu0 0.0
        %1089 = vmatprep.subr.mxu0 0.0
        %1090 = vmatpush1.msra.mxu0 0.0
        %1091 = vmatprep.subr.mxu0 0.0
        %1092 = vmatpush1.msra.mxu0 0.0
        %1093 = vmatprep.subr.mxu0 0.0
        %1094 = vmatpush1.msra.mxu0 0.0
        %1095 = vmatprep.subr.mxu0 0.0
        %1096 = vmatpush1.msra.mxu0 0.0
        %1097 = vmatprep.subr.mxu0 0.0
        %1098 = vmatpush1.msra.mxu0 0.0
        %1099 = vmatprep.mubr.f32.mxu0 0.0
        %1100 = vmatmul.mubr.f32.gmra.mrb[0].mxu0 %v898
        %v1101 = vpop.f32.mrb[0].mxu0
        %v1102 = vadd.f32 %v960, %v1101
        %v1103 = vpop.f32.mrb[0].mxu0
        %1104 = vdwg.mxu0
        %v1105 = vmul.f32 %v1031, 0.17677669
        %1107 = vrot.lane.b32.xlu0 %v1105, 96
        %v1108 = vpop.permute.xlu0 %1107
        %1110 = vrot.lane.b32.xlu0 %v1105, 64
        %v1111 = vpop.permute.xlu0 %1110
        %1113 = vrot.lane.b32.xlu0 %v1105, 32
        %v1114 = vpop.permute.xlu0 %1113
        %v1116 = vcombine.low %v1105, %v1111
        %v1117 = vcombine.high %v1105, %v1111
        %v1119 = vunpack.c.l.s4 1983009808
        %v1120 = vunpack.c.0.s8 %v1119
        %v1121 = vlaneseq
        %v1122 = vshrl.u32 %v1121, 7
        %v1123 = vsub.s32 %v1120, %v1122
        %v1124 = vrot.slane %v1116, %v1123
        %v1126 = vunpack.c.l.s4 1983009808
        %v1127 = vunpack.c.0.s8 %v1126
        %v1128 = vlaneseq
        %v1129 = vshrl.u32 %v1128, 7
        %v1130 = vsub.s32 %v1127, %v1129
        %v1131 = vrot.slane %v1117, %v1130
        %v1132 = vcombine.low %v1108, %v1114
        %v1133 = vcombine.high %v1108, %v1114
        %v1135 = vunpack.c.l.s4 1983009808
        %v1136 = vunpack.c.0.s8 %v1135
        %v1137 = vlaneseq
        %v1138 = vshrl.u32 %v1137, 7
        %v1139 = vsub.s32 %v1136, %v1138
        %v1140 = vrot.slane %v1132, %v1139
        %v1142 = vunpack.c.l.s4 1983009808
        %v1143 = vunpack.c.0.s8 %v1142
        %v1144 = vlaneseq
        %v1145 = vshrl.u32 %v1144, 7
        %v1146 = vsub.s32 %v1143, %v1145
        %v1147 = vrot.slane %v1133, %v1146
        %v1148 = vcombine.low %v1124, %v1140
        %v1149 = vcombine.high %v1124, %v1140
        %v1151 = vunpack.c.l.s4 1934713408
        %v1152 = vunpack.c.0.s8 %v1151
        %v1153 = vlaneseq
        %v1154 = vshrl.u32 %v1153, 7
        %v1155 = vsub.s32 %v1152, %v1154
        %v1156 = vrot.slane %v1148, %v1155
        %v1158 = vunpack.c.l.s4 1934713408
        %v1159 = vunpack.c.0.s8 %v1158
        %v1160 = vlaneseq
        %v1161 = vshrl.u32 %v1160, 7
        %v1162 = vsub.s32 %v1159, %v1161
        %v1163 = vrot.slane %v1149, %v1162
        %v1164 = vcombine.low %v1131, %v1147
        %v1165 = vcombine.high %v1131, %v1147
        %v1167 = vunpack.c.l.s4 1934713408
        %v1168 = vunpack.c.0.s8 %v1167
        %v1169 = vlaneseq
        %v1170 = vshrl.u32 %v1169, 7
        %v1171 = vsub.s32 %v1168, %v1170
        %v1172 = vrot.slane %v1164, %v1171
        %v1174 = vunpack.c.l.s4 1934713408
        %v1175 = vunpack.c.0.s8 %v1174
        %v1176 = vlaneseq
        %v1177 = vshrl.u32 %v1176, 7
        %v1178 = vsub.s32 %v1175, %v1177
        %v1179 = vrot.slane %v1165, %v1178
        %v1180 = vcombine.high %v1156, 0.0
        %v1181 = vcombine.high %v1163, 0.0
        %v1182 = vcombine.high %v1172, 0.0
        %v1183 = vcombine.high %v1179, 0.0
        %v1184 = vcombine.low %v1156, %v1163
        %v1186 = vunpack.c.l.s4 1983009808
        %v1187 = vunpack.c.0.s8 %v1186
        %v1188 = vlaneseq
        %v1189 = vshrl.u32 %v1188, 7
        %v1190 = vsub.s32 %v1187, %v1189
        %v1191 = vrot.slane %v1184, %v1190
        %v1192 = vcombine.low %v1180, %v1181
        %v1194 = vunpack.c.l.s4 1983009808
        %v1195 = vunpack.c.0.s8 %v1194
        %v1196 = vlaneseq
        %v1197 = vshrl.u32 %v1196, 7
        %v1198 = vsub.s32 %v1195, %v1197
        %v1199 = vrot.slane %v1192, %v1198
        %v1200 = vcombine.low %v1172, %v1179
        %v1202 = vunpack.c.l.s4 1983009808
        %v1203 = vunpack.c.0.s8 %v1202
        %v1204 = vlaneseq
        %v1205 = vshrl.u32 %v1204, 7
        %v1206 = vsub.s32 %v1203, %v1205
        %v1207 = vrot.slane %v1200, %v1206
        %v1208 = vcombine.low %v1182, %v1183
        %v1210 = vunpack.c.l.s4 1983009808
        %v1211 = vunpack.c.0.s8 %v1210
        %v1212 = vlaneseq
        %v1213 = vshrl.u32 %v1212, 7
        %v1214 = vsub.s32 %v1211, %v1213
        %v1215 = vrot.slane %v1208, %v1214
        %v1216 = vcombine.low %v1191, %v1199
        %v1217 = vcombine.high %v1191, %v1199
        %v1219 = vunpack.c.l.s4 1934713408
        %v1220 = vunpack.c.0.s8 %v1219
        %v1221 = vlaneseq
        %v1222 = vshrl.u32 %v1221, 7
        %v1223 = vsub.s32 %v1220, %v1222
        %v1224 = vrot.slane %v1216, %v1223
        %v1226 = vunpack.c.l.s4 1934713408
        %v1227 = vunpack.c.0.s8 %v1226
        %v1228 = vlaneseq
        %v1229 = vshrl.u32 %v1228, 7
        %v1230 = vsub.s32 %v1227, %v1229
        %v1231 = vrot.slane %v1217, %v1230
        %v1232 = vcombine.low %v1207, %v1215
        %v1233 = vcombine.high %v1207, %v1215
        %v1235 = vunpack.c.l.s4 1934713408
        %v1236 = vunpack.c.0.s8 %v1235
        %v1237 = vlaneseq
        %v1238 = vshrl.u32 %v1237, 7
        %v1239 = vsub.s32 %v1236, %v1238
        %v1240 = vrot.slane %v1232, %v1239
        %v1242 = vunpack.c.l.s4 1934713408
        %v1243 = vunpack.c.0.s8 %v1242
        %v1244 = vlaneseq
        %v1245 = vshrl.u32 %v1244, 7
        %v1246 = vsub.s32 %v1243, %v1245
        %v1247 = vrot.slane %v1233, %v1246
        %v1248 = vcombine.low %v1224, %v1240
        %v1249 = vcombine.high %v1224, %v1240
        %v1250 = vcombine.low %v1231, %v1247
        %v1251 = vcombine.high %v1231, %v1247
        %1253 = vrot.lane.b32.xlu0 %v1033, 96
        %v1254 = vpop.permute.xlu0 %1253
        %1256 = vrot.lane.b32.xlu0 %v1033, 64
        %v1257 = vpop.permute.xlu0 %1256
        %1259 = vrot.lane.b32.xlu0 %v1033, 32
        %v1260 = vpop.permute.xlu0 %1259
        %v1262 = vcombine.low %v1033, %v1257
        %v1263 = vcombine.high %v1033, %v1257
        %v1265 = vunpack.c.l.s4 1983009808
        %v1266 = vunpack.c.0.s8 %v1265
        %v1267 = vlaneseq
        %v1268 = vshrl.u32 %v1267, 7
        %v1269 = vsub.s32 %v1266, %v1268
        %v1270 = vrot.slane %v1262, %v1269
        %v1272 = vunpack.c.l.s4 1983009808
        %v1273 = vunpack.c.0.s8 %v1272
        %v1274 = vlaneseq
        %v1275 = vshrl.u32 %v1274, 7
        %v1276 = vsub.s32 %v1273, %v1275
        %v1277 = vrot.slane %v1263, %v1276
        %v1278 = vcombine.low %v1254, %v1260
        %v1279 = vcombine.high %v1254, %v1260
        %v1281 = vunpack.c.l.s4 1983009808
        %v1282 = vunpack.c.0.s8 %v1281
        %v1283 = vlaneseq
        %v1284 = vshrl.u32 %v1283, 7
        %v1285 = vsub.s32 %v1282, %v1284
        %v1286 = vrot.slane %v1278, %v1285
        %v1288 = vunpack.c.l.s4 1983009808
        %v1289 = vunpack.c.0.s8 %v1288
        %v1290 = vlaneseq
        %v1291 = vshrl.u32 %v1290, 7
        %v1292 = vsub.s32 %v1289, %v1291
        %v1293 = vrot.slane %v1279, %v1292
        %v1294 = vcombine.low %v1270, %v1286
        %v1295 = vcombine.high %v1270, %v1286
        %v1297 = vunpack.c.l.s4 1934713408
        %v1298 = vunpack.c.0.s8 %v1297
        %v1299 = vlaneseq
        %v1300 = vshrl.u32 %v1299, 7
        %v1301 = vsub.s32 %v1298, %v1300
        %v1302 = vrot.slane %v1294, %v1301
        %v1304 = vunpack.c.l.s4 1934713408
        %v1305 = vunpack.c.0.s8 %v1304
        %v1306 = vlaneseq
        %v1307 = vshrl.u32 %v1306, 7
        %v1308 = vsub.s32 %v1305, %v1307
        %v1309 = vrot.slane %v1295, %v1308
        %v1310 = vcombine.low %v1277, %v1293
        %v1311 = vcombine.high %v1277, %v1293
        %v1313 = vunpack.c.l.s4 1934713408
        %v1314 = vunpack.c.0.s8 %v1313
        %v1315 = vlaneseq
        %v1316 = vshrl.u32 %v1315, 7
        %v1317 = vsub.s32 %v1314, %v1316
        %v1318 = vrot.slane %v1310, %v1317
        %v1320 = vunpack.c.l.s4 1934713408
        %v1321 = vunpack.c.0.s8 %v1320
        %v1322 = vlaneseq
        %v1323 = vshrl.u32 %v1322, 7
        %v1324 = vsub.s32 %v1321, %v1323
        %v1325 = vrot.slane %v1311, %v1324
        %v1326 = vcombine.high %v1302, 0.0
        %v1327 = vcombine.high %v1309, 0.0
        %v1328 = vcombine.high %v1318, 0.0
        %v1329 = vcombine.high %v1325, 0.0
        %v1330 = vcombine.low %v1302, %v1309
        %v1332 = vunpack.c.l.s4 1983009808
        %v1333 = vunpack.c.0.s8 %v1332
        %v1334 = vlaneseq
        %v1335 = vshrl.u32 %v1334, 7
        %v1336 = vsub.s32 %v1333, %v1335
        %v1337 = vrot.slane %v1330, %v1336
        %v1338 = vcombine.low %v1326, %v1327
        %v1340 = vunpack.c.l.s4 1983009808
        %v1341 = vunpack.c.0.s8 %v1340
        %v1342 = vlaneseq
        %v1343 = vshrl.u32 %v1342, 7
        %v1344 = vsub.s32 %v1341, %v1343
        %v1345 = vrot.slane %v1338, %v1344
        %v1346 = vcombine.low %v1318, %v1325
        %v1348 = vunpack.c.l.s4 1983009808
        %v1349 = vunpack.c.0.s8 %v1348
        %v1350 = vlaneseq
        %v1351 = vshrl.u32 %v1350, 7
        %v1352 = vsub.s32 %v1349, %v1351
        %v1353 = vrot.slane %v1346, %v1352
        %v1354 = vcombine.low %v1328, %v1329
        %v1356 = vunpack.c.l.s4 1983009808
        %v1357 = vunpack.c.0.s8 %v1356
        %v1358 = vlaneseq
        %v1359 = vshrl.u32 %v1358, 7
        %v1360 = vsub.s32 %v1357, %v1359
        %v1361 = vrot.slane %v1354, %v1360
        %v1362 = vcombine.low %v1337, %v1345
        %v1363 = vcombine.high %v1337, %v1345
        %v1365 = vunpack.c.l.s4 1934713408
        %v1366 = vunpack.c.0.s8 %v1365
        %v1367 = vlaneseq
        %v1368 = vshrl.u32 %v1367, 7
        %v1369 = vsub.s32 %v1366, %v1368
        %v1370 = vrot.slane %v1362, %v1369
        %v1372 = vunpack.c.l.s4 1934713408
        %v1373 = vunpack.c.0.s8 %v1372
        %v1374 = vlaneseq
        %v1375 = vshrl.u32 %v1374, 7
        %v1376 = vsub.s32 %v1373, %v1375
        %v1377 = vrot.slane %v1363, %v1376
        %v1378 = vcombine.low %v1353, %v1361
        %v1379 = vcombine.high %v1353, %v1361
        %v1381 = vunpack.c.l.s4 1934713408
        %v1382 = vunpack.c.0.s8 %v1381
        %v1383 = vlaneseq
        %v1384 = vshrl.u32 %v1383, 7
        %v1385 = vsub.s32 %v1382, %v1384
        %v1386 = vrot.slane %v1378, %v1385
        %v1388 = vunpack.c.l.s4 1934713408
        %v1389 = vunpack.c.0.s8 %v1388
        %v1390 = vlaneseq
        %v1391 = vshrl.u32 %v1390, 7
        %v1392 = vsub.s32 %v1389, %v1391
        %v1393 = vrot.slane %v1379, %v1392
        %v1394 = vcombine.low %v1370, %v1386
        %v1395 = vcombine.high %v1370, %v1386
        %v1396 = vcombine.low %v1377, %v1393
        %v1397 = vcombine.high %v1377, %v1393
        %1399 = vrot.lane.b32.xlu0 %v1102, 96
        %v1400 = vpop.permute.xlu0 %1399
        %1402 = vrot.lane.b32.xlu0 %v1102, 64
        %v1403 = vpop.permute.xlu0 %1402
        %1405 = vrot.lane.b32.xlu0 %v1102, 32
        %v1406 = vpop.permute.xlu0 %1405
        %v1408 = vcombine.low %v1102, %v1403
        %v1409 = vcombine.high %v1102, %v1403
        %v1411 = vunpack.c.l.s4 1983009808
        %v1412 = vunpack.c.0.s8 %v1411
        %v1413 = vlaneseq
        %v1414 = vshrl.u32 %v1413, 7
        %v1415 = vsub.s32 %v1412, %v1414
        %v1416 = vrot.slane %v1408, %v1415
        %v1418 = vunpack.c.l.s4 1983009808
        %v1419 = vunpack.c.0.s8 %v1418
        %v1420 = vlaneseq
        %v1421 = vshrl.u32 %v1420, 7
        %v1422 = vsub.s32 %v1419, %v1421
        %v1423 = vrot.slane %v1409, %v1422
        %v1424 = vcombine.low %v1400, %v1406
        %v1425 = vcombine.high %v1400, %v1406
        %v1427 = vunpack.c.l.s4 1983009808
        %v1428 = vunpack.c.0.s8 %v1427
        %v1429 = vlaneseq
        %v1430 = vshrl.u32 %v1429, 7
        %v1431 = vsub.s32 %v1428, %v1430
        %v1432 = vrot.slane %v1424, %v1431
        %v1434 = vunpack.c.l.s4 1983009808
        %v1435 = vunpack.c.0.s8 %v1434
        %v1436 = vlaneseq
        %v1437 = vshrl.u32 %v1436, 7
        %v1438 = vsub.s32 %v1435, %v1437
        %v1439 = vrot.slane %v1425, %v1438
        %v1440 = vcombine.low %v1416, %v1432
        %v1441 = vcombine.high %v1416, %v1432
        %v1443 = vunpack.c.l.s4 1934713408
        %v1444 = vunpack.c.0.s8 %v1443
        %v1445 = vlaneseq
        %v1446 = vshrl.u32 %v1445, 7
        %v1447 = vsub.s32 %v1444, %v1446
        %v1448 = vrot.slane %v1440, %v1447
        %v1450 = vunpack.c.l.s4 1934713408
        %v1451 = vunpack.c.0.s8 %v1450
        %v1452 = vlaneseq
        %v1453 = vshrl.u32 %v1452, 7
        %v1454 = vsub.s32 %v1451, %v1453
        %v1455 = vrot.slane %v1441, %v1454
        %v1456 = vcombine.low %v1423, %v1439
        %v1457 = vcombine.high %v1423, %v1439
        %v1459 = vunpack.c.l.s4 1934713408
        %v1460 = vunpack.c.0.s8 %v1459
        %v1461 = vlaneseq
        %v1462 = vshrl.u32 %v1461, 7
        %v1463 = vsub.s32 %v1460, %v1462
        %v1464 = vrot.slane %v1456, %v1463
        %v1466 = vunpack.c.l.s4 1934713408
        %v1467 = vunpack.c.0.s8 %v1466
        %v1468 = vlaneseq
        %v1469 = vshrl.u32 %v1468, 7
        %v1470 = vsub.s32 %v1467, %v1469
        %v1471 = vrot.slane %v1457, %v1470
        %v1472 = vcombine.high %v1448, 0.0
        %v1473 = vcombine.high %v1455, 0.0
        %v1474 = vcombine.high %v1464, 0.0
        %v1475 = vcombine.high %v1471, 0.0
        %v1476 = vcombine.low %v1448, %v1455
        %v1478 = vunpack.c.l.s4 1983009808
        %v1479 = vunpack.c.0.s8 %v1478
        %v1480 = vlaneseq
        %v1481 = vshrl.u32 %v1480, 7
        %v1482 = vsub.s32 %v1479, %v1481
        %v1483 = vrot.slane %v1476, %v1482
        %v1484 = vcombine.low %v1472, %v1473
        %v1486 = vunpack.c.l.s4 1983009808
        %v1487 = vunpack.c.0.s8 %v1486
        %v1488 = vlaneseq
        %v1489 = vshrl.u32 %v1488, 7
        %v1490 = vsub.s32 %v1487, %v1489
        %v1491 = vrot.slane %v1484, %v1490
        %v1492 = vcombine.low %v1464, %v1471
        %v1494 = vunpack.c.l.s4 1983009808
        %v1495 = vunpack.c.0.s8 %v1494
        %v1496 = vlaneseq
        %v1497 = vshrl.u32 %v1496, 7
        %v1498 = vsub.s32 %v1495, %v1497
        %v1499 = vrot.slane %v1492, %v1498
        %v1500 = vcombine.low %v1474, %v1475
        %v1502 = vunpack.c.l.s4 1983009808
        %v1503 = vunpack.c.0.s8 %v1502
        %v1504 = vlaneseq
        %v1505 = vshrl.u32 %v1504, 7
        %v1506 = vsub.s32 %v1503, %v1505
        %v1507 = vrot.slane %v1500, %v1506
        %v1508 = vcombine.low %v1483, %v1491
        %v1509 = vcombine.high %v1483, %v1491
        %v1511 = vunpack.c.l.s4 1934713408
        %v1512 = vunpack.c.0.s8 %v1511
        %v1513 = vlaneseq
        %v1514 = vshrl.u32 %v1513, 7
        %v1515 = vsub.s32 %v1512, %v1514
        %v1516 = vrot.slane %v1508, %v1515
        %v1518 = vunpack.c.l.s4 1934713408
        %v1519 = vunpack.c.0.s8 %v1518
        %v1520 = vlaneseq
        %v1521 = vshrl.u32 %v1520, 7
        %v1522 = vsub.s32 %v1519, %v1521
        %v1523 = vrot.slane %v1509, %v1522
        %v1524 = vcombine.low %v1499, %v1507
        %v1525 = vcombine.high %v1499, %v1507
        %v1527 = vunpack.c.l.s4 1934713408
        %v1528 = vunpack.c.0.s8 %v1527
        %v1529 = vlaneseq
        %v1530 = vshrl.u32 %v1529, 7
        %v1531 = vsub.s32 %v1528, %v1530
        %v1532 = vrot.slane %v1524, %v1531
        %v1534 = vunpack.c.l.s4 1934713408
        %v1535 = vunpack.c.0.s8 %v1534
        %v1536 = vlaneseq
        %v1537 = vshrl.u32 %v1536, 7
        %v1538 = vsub.s32 %v1535, %v1537
        %v1539 = vrot.slane %v1525, %v1538
        %v1540 = vcombine.low %v1516, %v1532
        %v1541 = vcombine.high %v1516, %v1532
        %v1542 = vcombine.low %v1523, %v1539
        %v1543 = vcombine.high %v1523, %v1539
        %vm1544 = vcmask 261120
        %v1546 = vsel %vm1544, %v1248, 0
        %v1549 = vsel %vm1544, %v1394, 0
        %1551 = vmatprep.subr.mxu0 0.0
        %1552 = vmatpush1.xpose.msra.mxu0 %v1549
        %1553 = vmatprep.subr.mxu0 0.0
        %1554 = vmatpush1.xpose.msra.mxu0 0.0
        %1555 = vmatprep.subr.mxu0 0.0
        %1556 = vmatpush1.xpose.msra.mxu0 0.0
        %1557 = vmatprep.subr.mxu0 0.0
        %1558 = vmatpush1.xpose.msra.mxu0 0.0
        %1559 = vmatprep.subr.mxu0 0.0
        %1560 = vmatpush1.xpose.msra.mxu0 0.0
        %1561 = vmatprep.subr.mxu0 0.0
        %1562 = vmatpush1.xpose.msra.mxu0 0.0
        %1563 = vmatprep.subr.mxu0 0.0
        %1564 = vmatpush1.xpose.msra.mxu0 0.0
        %1565 = vmatprep.subr.mxu0 0.0
        %1566 = vmatpush1.xpose.msra.mxu0 0.0
        %1567 = vmatprep.subr.mxu0 0.0
        %1568 = vmatpush1.xpose.msra.mxu0 0.0
        %1569 = vmatprep.subr.mxu0 0.0
        %1570 = vmatpush1.xpose.msra.mxu0 0.0
        %1571 = vmatprep.subr.mxu0 0.0
        %1572 = vmatpush1.xpose.msra.mxu0 0.0
        %1573 = vmatprep.subr.mxu0 0.0
        %1574 = vmatpush1.xpose.msra.mxu0 0.0
        %1575 = vmatprep.subr.mxu0 0.0
        %1576 = vmatpush1.xpose.msra.mxu0 0.0
        %1577 = vmatprep.subr.mxu0 0.0
        %1578 = vmatpush1.xpose.msra.mxu0 0.0
        %1579 = vmatprep.subr.mxu0 0.0
        %1580 = vmatpush1.xpose.msra.mxu0 0.0
        %1581 = vmatprep.subr.mxu0 0.0
        %1582 = vmatpush1.xpose.msra.mxu0 0.0
        %1583 = vmatprep.subr.mxu0 0.0
        %1584 = vmatpush1.xpose.msra.mxu0 0.0
        %1585 = vmatprep.subr.mxu0 0.0
        %1586 = vmatpush1.xpose.msra.mxu0 0.0
        %1587 = vmatprep.subr.mxu0 0.0
        %1588 = vmatpush1.xpose.msra.mxu0 0.0
        %1589 = vmatprep.subr.mxu0 0.0
        %1590 = vmatpush1.xpose.msra.mxu0 0.0
        %1591 = vmatprep.subr.mxu0 0.0
        %1592 = vmatpush1.xpose.msra.mxu0 0.0
        %1593 = vmatprep.subr.mxu0 0.0
        %1594 = vmatpush1.xpose.msra.mxu0 0.0
        %1595 = vmatprep.subr.mxu0 0.0
        %1596 = vmatpush1.xpose.msra.mxu0 0.0
        %1597 = vmatprep.subr.mxu0 0.0
        %1598 = vmatpush1.xpose.msra.mxu0 0.0
        %1599 = vmatprep.subr.mxu0 0.0
        %1600 = vmatpush1.xpose.msra.mxu0 0.0
        %1601 = vmatprep.subr.mxu0 0.0
        %1602 = vmatpush1.xpose.msra.mxu0 0.0
        %1603 = vmatprep.subr.mxu0 0.0
        %1604 = vmatpush1.xpose.msra.mxu0 0.0
        %1605 = vmatprep.subr.mxu0 0.0
        %1606 = vmatpush1.xpose.msra.mxu0 0.0
        %1607 = vmatprep.subr.mxu0 0.0
        %1608 = vmatpush1.xpose.msra.mxu0 0.0
        %1609 = vmatprep.subr.mxu0 0.0
        %1610 = vmatpush1.xpose.msra.mxu0 0.0
        %1611 = vmatprep.subr.mxu0 0.0
        %1612 = vmatpush1.xpose.msra.mxu0 0.0
        %1613 = vmatprep.subr.mxu0 0.0
        %1614 = vmatpush1.xpose.msra.mxu0 0.0
        %1615 = vmatprep.mubr.f32.mxu0 0.0
        %1616 = vmatmul.mubr.f32.gmra.mrb[0].mxu0 %v1546
        %v1617 = vpop.f32.mrb[0].mxu0
        %v1618 = vadd.f32 0.0, %v1617
        %v1619 = vpop.f32.mrb[0].mxu0
        %1620 = vdwg.mxu0
        %v1622 = vsel %vm1544, %v1249, 0
        %v1625 = vsel %vm1544, %v1395, 0
        %1627 = vmatprep.subr.mxu0 0.0
        %1628 = vmatpush1.xpose.msra.mxu0 %v1625
        %1629 = vmatprep.subr.mxu0 0.0
        %1630 = vmatpush1.xpose.msra.mxu0 0.0
        %1631 = vmatprep.subr.mxu0 0.0
        %1632 = vmatpush1.xpose.msra.mxu0 0.0
        %1633 = vmatprep.subr.mxu0 0.0
        %1634 = vmatpush1.xpose.msra.mxu0 0.0
        %1635 = vmatprep.subr.mxu0 0.0
        %1636 = vmatpush1.xpose.msra.mxu0 0.0
        %1637 = vmatprep.subr.mxu0 0.0
        %1638 = vmatpush1.xpose.msra.mxu0 0.0
        %1639 = vmatprep.subr.mxu0 0.0
        %1640 = vmatpush1.xpose.msra.mxu0 0.0
        %1641 = vmatprep.subr.mxu0 0.0
        %1642 = vmatpush1.xpose.msra.mxu0 0.0
        %1643 = vmatprep.subr.mxu0 0.0
        %1644 = vmatpush1.xpose.msra.mxu0 0.0
        %1645 = vmatprep.subr.mxu0 0.0
        %1646 = vmatpush1.xpose.msra.mxu0 0.0
        %1647 = vmatprep.subr.mxu0 0.0
        %1648 = vmatpush1.xpose.msra.mxu0 0.0
        %1649 = vmatprep.subr.mxu0 0.0
        %1650 = vmatpush1.xpose.msra.mxu0 0.0
        %1651 = vmatprep.subr.mxu0 0.0
        %1652 = vmatpush1.xpose.msra.mxu0 0.0
        %1653 = vmatprep.subr.mxu0 0.0
        %1654 = vmatpush1.xpose.msra.mxu0 0.0
        %1655 = vmatprep.subr.mxu0 0.0
        %1656 = vmatpush1.xpose.msra.mxu0 0.0
        %1657 = vmatprep.subr.mxu0 0.0
        %1658 = vmatpush1.xpose.msra.mxu0 0.0
        %1659 = vmatprep.subr.mxu0 0.0
        %1660 = vmatpush1.xpose.msra.mxu0 0.0
        %1661 = vmatprep.subr.mxu0 0.0
        %1662 = vmatpush1.xpose.msra.mxu0 0.0
        %1663 = vmatprep.subr.mxu0 0.0
        %1664 = vmatpush1.xpose.msra.mxu0 0.0
        %1665 = vmatprep.subr.mxu0 0.0
        %1666 = vmatpush1.xpose.msra.mxu0 0.0
        %1667 = vmatprep.subr.mxu0 0.0
        %1668 = vmatpush1.xpose.msra.mxu0 0.0
        %1669 = vmatprep.subr.mxu0 0.0
        %1670 = vmatpush1.xpose.msra.mxu0 0.0
        %1671 = vmatprep.subr.mxu0 0.0
        %1672 = vmatpush1.xpose.msra.mxu0 0.0
        %1673 = vmatprep.subr.mxu0 0.0
        %1674 = vmatpush1.xpose.msra.mxu0 0.0
        %1675 = vmatprep.subr.mxu0 0.0
        %1676 = vmatpush1.xpose.msra.mxu0 0.0
        %1677 = vmatprep.subr.mxu0 0.0
        %1678 = vmatpush1.xpose.msra.mxu0 0.0
        %1679 = vmatprep.subr.mxu0 0.0
        %1680 = vmatpush1.xpose.msra.mxu0 0.0
        %1681 = vmatprep.subr.mxu0 0.0
        %1682 = vmatpush1.xpose.msra.mxu0 0.0
        %1683 = vmatprep.subr.mxu0 0.0
        %1684 = vmatpush1.xpose.msra.mxu0 0.0
        %1685 = vmatprep.subr.mxu0 0.0
        %1686 = vmatpush1.xpose.msra.mxu0 0.0
        %1687 = vmatprep.subr.mxu0 0.0
        %1688 = vmatpush1.xpose.msra.mxu0 0.0
        %1689 = vmatprep.subr.mxu0 0.0
        %1690 = vmatpush1.xpose.msra.mxu0 0.0
        %1691 = vmatprep.mubr.f32.mxu0 0.0
        %1692 = vmatmul.mubr.f32.gmra.mrb[0].mxu0 %v1622
        %v1693 = vpop.f32.mrb[0].mxu0
        %v1694 = vadd.f32 0.0, %v1693
        %v1695 = vpop.f32.mrb[0].mxu0
        %1696 = vdwg.mxu0
        %v1698 = vsel %vm1544, %v1250, 0
        %v1701 = vsel %vm1544, %v1396, 0
        %1703 = vmatprep.subr.mxu0 0.0
        %1704 = vmatpush1.xpose.msra.mxu0 %v1701
        %1705 = vmatprep.subr.mxu0 0.0
        %1706 = vmatpush1.xpose.msra.mxu0 0.0
        %1707 = vmatprep.subr.mxu0 0.0
        %1708 = vmatpush1.xpose.msra.mxu0 0.0
        %1709 = vmatprep.subr.mxu0 0.0
        %1710 = vmatpush1.xpose.msra.mxu0 0.0
        %1711 = vmatprep.subr.mxu0 0.0
        %1712 = vmatpush1.xpose.msra.mxu0 0.0
        %1713 = vmatprep.subr.mxu0 0.0
        %1714 = vmatpush1.xpose.msra.mxu0 0.0
        %1715 = vmatprep.subr.mxu0 0.0
        %1716 = vmatpush1.xpose.msra.mxu0 0.0
        %1717 = vmatprep.subr.mxu0 0.0
        %1718 = vmatpush1.xpose.msra.mxu0 0.0
        %1719 = vmatprep.subr.mxu0 0.0
        %1720 = vmatpush1.xpose.msra.mxu0 0.0
        %1721 = vmatprep.subr.mxu0 0.0
        %1722 = vmatpush1.xpose.msra.mxu0 0.0
        %1723 = vmatprep.subr.mxu0 0.0
        %1724 = vmatpush1.xpose.msra.mxu0 0.0
        %1725 = vmatprep.subr.mxu0 0.0
        %1726 = vmatpush1.xpose.msra.mxu0 0.0
        %1727 = vmatprep.subr.mxu0 0.0
        %1728 = vmatpush1.xpose.msra.mxu0 0.0
        %1729 = vmatprep.subr.mxu0 0.0
        %1730 = vmatpush1.xpose.msra.mxu0 0.0
        %1731 = vmatprep.subr.mxu0 0.0
        %1732 = vmatpush1.xpose.msra.mxu0 0.0
        %1733 = vmatprep.subr.mxu0 0.0
        %1734 = vmatpush1.xpose.msra.mxu0 0.0
        %1735 = vmatprep.subr.mxu0 0.0
        %1736 = vmatpush1.xpose.msra.mxu0 0.0
        %1737 = vmatprep.subr.mxu0 0.0
        %1738 = vmatpush1.xpose.msra.mxu0 0.0
        %1739 = vmatprep.subr.mxu0 0.0
        %1740 = vmatpush1.xpose.msra.mxu0 0.0
        %1741 = vmatprep.subr.mxu0 0.0
        %1742 = vmatpush1.xpose.msra.mxu0 0.0
        %1743 = vmatprep.subr.mxu0 0.0
        %1744 = vmatpush1.xpose.msra.mxu0 0.0
        %1745 = vmatprep.subr.mxu0 0.0
        %1746 = vmatpush1.xpose.msra.mxu0 0.0
        %1747 = vmatprep.subr.mxu0 0.0
        %1748 = vmatpush1.xpose.msra.mxu0 0.0
        %1749 = vmatprep.subr.mxu0 0.0
        %1750 = vmatpush1.xpose.msra.mxu0 0.0
        %1751 = vmatprep.subr.mxu0 0.0
        %1752 = vmatpush1.xpose.msra.mxu0 0.0
        %1753 = vmatprep.subr.mxu0 0.0
        %1754 = vmatpush1.xpose.msra.mxu0 0.0
        %1755 = vmatprep.subr.mxu0 0.0
        %1756 = vmatpush1.xpose.msra.mxu0 0.0
        %1757 = vmatprep.subr.mxu0 0.0
        %1758 = vmatpush1.xpose.msra.mxu0 0.0
        %1759 = vmatprep.subr.mxu0 0.0
        %1760 = vmatpush1.xpose.msra.mxu0 0.0
        %1761 = vmatprep.subr.mxu0 0.0
        %1762 = vmatpush1.xpose.msra.mxu0 0.0
        %1763 = vmatprep.subr.mxu0 0.0
        %1764 = vmatpush1.xpose.msra.mxu0 0.0
        %1765 = vmatprep.subr.mxu0 0.0
        %1766 = vmatpush1.xpose.msra.mxu0 0.0
        %1767 = vmatprep.mubr.f32.mxu0 0.0
        %1768 = vmatmul.mubr.f32.gmra.mrb[0].mxu0 %v1698
        %v1769 = vpop.f32.mrb[0].mxu0
        %v1770 = vadd.f32 0.0, %v1769
        %v1771 = vpop.f32.mrb[0].mxu0
        %1772 = vdwg.mxu0
        %v1774 = vsel %vm1544, %v1251, 0
        %v1777 = vsel %vm1544, %v1397, 0
        %1779 = vmatprep.subr.mxu0 0.0
        %1780 = vmatpush1.xpose.msra.mxu0 %v1777
        %1781 = vmatprep.subr.mxu0 0.0
        %1782 = vmatpush1.xpose.msra.mxu0 0.0
        %1783 = vmatprep.subr.mxu0 0.0
        %1784 = vmatpush1.xpose.msra.mxu0 0.0
        %1785 = vmatprep.subr.mxu0 0.0
        %1786 = vmatpush1.xpose.msra.mxu0 0.0
        %1787 = vmatprep.subr.mxu0 0.0
        %1788 = vmatpush1.xpose.msra.mxu0 0.0
        %1789 = vmatprep.subr.mxu0 0.0
        %1790 = vmatpush1.xpose.msra.mxu0 0.0
        %1791 = vmatprep.subr.mxu0 0.0
        %1792 = vmatpush1.xpose.msra.mxu0 0.0
        %1793 = vmatprep.subr.mxu0 0.0
        %1794 = vmatpush1.xpose.msra.mxu0 0.0
        %1795 = vmatprep.subr.mxu0 0.0
        %1796 = vmatpush1.xpose.msra.mxu0 0.0
        %1797 = vmatprep.subr.mxu0 0.0
        %1798 = vmatpush1.xpose.msra.mxu0 0.0
        %1799 = vmatprep.subr.mxu0 0.0
        %1800 = vmatpush1.xpose.msra.mxu0 0.0
        %1801 = vmatprep.subr.mxu0 0.0
        %1802 = vmatpush1.xpose.msra.mxu0 0.0
        %1803 = vmatprep.subr.mxu0 0.0
        %1804 = vmatpush1.xpose.msra.mxu0 0.0
        %1805 = vmatprep.subr.mxu0 0.0
        %1806 = vmatpush1.xpose.msra.mxu0 0.0
        %1807 = vmatprep.subr.mxu0 0.0
        %1808 = vmatpush1.xpose.msra.mxu0 0.0
        %1809 = vmatprep.subr.mxu0 0.0
        %1810 = vmatpush1.xpose.msra.mxu0 0.0
        %1811 = vmatprep.subr.mxu0 0.0
        %1812 = vmatpush1.xpose.msra.mxu0 0.0
        %1813 = vmatprep.subr.mxu0 0.0
        %1814 = vmatpush1.xpose.msra.mxu0 0.0
        %1815 = vmatprep.subr.mxu0 0.0
        %1816 = vmatpush1.xpose.msra.mxu0 0.0
        %1817 = vmatprep.subr.mxu0 0.0
        %1818 = vmatpush1.xpose.msra.mxu0 0.0
        %1819 = vmatprep.subr.mxu0 0.0
        %1820 = vmatpush1.xpose.msra.mxu0 0.0
        %1821 = vmatprep.subr.mxu0 0.0
        %1822 = vmatpush1.xpose.msra.mxu0 0.0
        %1823 = vmatprep.subr.mxu0 0.0
        %1824 = vmatpush1.xpose.msra.mxu0 0.0
        %1825 = vmatprep.subr.mxu0 0.0
        %1826 = vmatpush1.xpose.msra.mxu0 0.0
        %1827 = vmatprep.subr.mxu0 0.0
        %1828 = vmatpush1.xpose.msra.mxu0 0.0
        %1829 = vmatprep.subr.mxu0 0.0
        %1830 = vmatpush1.xpose.msra.mxu0 0.0
        %1831 = vmatprep.subr.mxu0 0.0
        %1832 = vmatpush1.xpose.msra.mxu0 0.0
        %1833 = vmatprep.subr.mxu0 0.0
        %1834 = vmatpush1.xpose.msra.mxu0 0.0
        %1835 = vmatprep.subr.mxu0 0.0
        %1836 = vmatpush1.xpose.msra.mxu0 0.0
        %1837 = vmatprep.subr.mxu0 0.0
        %1838 = vmatpush1.xpose.msra.mxu0 0.0
        %1839 = vmatprep.subr.mxu0 0.0
        %1840 = vmatpush1.xpose.msra.mxu0 0.0
        %1841 = vmatprep.subr.mxu0 0.0
        %1842 = vmatpush1.xpose.msra.mxu0 0.0
        %1843 = vmatprep.mubr.f32.mxu0 0.0
        %1844 = vmatmul.mubr.f32.gmra.mrb[0].mxu0 %v1774
        %v1845 = vpop.f32.mrb[0].mxu0
        %v1846 = vadd.f32 0.0, %v1845
        %v1847 = vpop.f32.mrb[0].mxu0
        %1848 = vdwg.mxu0
        %vm1849 = vcmask 64512
        %v1850 = vsel %vm1849, %v1618, -inf
        %1851 = vmax.xlane.f32.xlu0 %v1850
        %v1852 = vpop.xlane.xlu0 %1851
        %v1853 = vsel %vm1849, %v1694, -inf
        %1854 = vmax.xlane.f32.xlu0 %v1853
        %v1855 = vpop.xlane.xlu0 %1854
        %v1856 = vsel %vm1849, %v1770, -inf
        %1857 = vmax.xlane.f32.xlu0 %v1856
        %v1858 = vpop.xlane.xlu0 %1857
        %v1859 = vsel %vm1849, %v1846, -inf
        %1860 = vmax.xlane.f32.xlu0 %v1859
        %v1861 = vpop.xlane.xlu0 %1860
        %v1862 = vsub.f32 %v1618, %v1852
        %v1863 = vsub.f32 %v1694, %v1855
        %v1864 = vsub.f32 %v1770, %v1858
        %v1865 = vsub.f32 %v1846, %v1861
        %v1866 = vmul.f32 %v1862, 1.442695
        %v1867 = vpow.pop %v1866
        %v1868 = vmul.f32 %v1863, 1.442695
        %v1869 = vpow.pop %v1868
        %v1870 = vmul.f32 %v1864, 1.442695
        %v1871 = vpow.pop %v1870
        %v1872 = vmul.f32 %v1865, 1.442695
        %v1873 = vpow.pop %v1872
        %v1874 = vsel %vm1849, %v1867, 0.0
        %1875 = vadd.xlane.f32.xlu0 %v1874
        %v1876 = vpop.xlane.xlu0 %1875
        %v1877 = vsel %vm1849, %v1869, 0.0
        %1878 = vadd.xlane.f32.xlu0 %v1877
        %v1879 = vpop.xlane.xlu0 %1878
        %v1880 = vsel %vm1849, %v1871, 0.0
        %1881 = vadd.xlane.f32.xlu0 %v1880
        %v1882 = vpop.xlane.xlu0 %1881
        %v1883 = vsel %vm1849, %v1873, 0.0
        %1884 = vadd.xlane.f32.xlu0 %v1883
        %v1885 = vpop.xlane.xlu0 %1884
        %v1886 = vrcp.pop %v1876
        %v1887 = vrcp.pop %v1879
        %v1888 = vrcp.pop %v1882
        %v1889 = vrcp.pop %v1885
        %v1890 = vmul.f32 %v1867, %v1886
        %v1891 = vmul.f32 %v1869, %v1887
        %v1892 = vmul.f32 %v1871, %v1888
        %v1893 = vmul.f32 %v1873, %v1889
        %v1895 = vsel %vm1849, %v1890, 0
        %1897 = vmatprep.subr.mxu0 0.0
        %1898 = vmatpush1.msra.mxu0 %v1540
        %1899 = vmatprep.subr.mxu0 0.0
        %1900 = vmatpush1.msra.mxu0 0.0
        %1901 = vmatprep.subr.mxu0 0.0
        %1902 = vmatpush1.msra.mxu0 0.0
        %1903 = vmatprep.subr.mxu0 0.0
        %1904 = vmatpush1.msra.mxu0 0.0
        %1905 = vmatprep.subr.mxu0 0.0
        %1906 = vmatpush1.msra.mxu0 0.0
        %1907 = vmatprep.subr.mxu0 0.0
        %1908 = vmatpush1.msra.mxu0 0.0
        %1909 = vmatprep.subr.mxu0 0.0
        %1910 = vmatpush1.msra.mxu0 0.0
        %1911 = vmatprep.subr.mxu0 0.0
        %1912 = vmatpush1.msra.mxu0 0.0
        %1913 = vmatprep.subr.mxu0 0.0
        %1914 = vmatpush1.msra.mxu0 0.0
        %1915 = vmatprep.subr.mxu0 0.0
        %1916 = vmatpush1.msra.mxu0 0.0
        %1917 = vmatprep.subr.mxu0 0.0
        %1918 = vmatpush1.msra.mxu0 0.0
        %1919 = vmatprep.subr.mxu0 0.0
        %1920 = vmatpush1.msra.mxu0 0.0
        %1921 = vmatprep.subr.mxu0 0.0
        %1922 = vmatpush1.msra.mxu0 0.0
        %1923 = vmatprep.subr.mxu0 0.0
        %1924 = vmatpush1.msra.mxu0 0.0
        %1925 = vmatprep.subr.mxu0 0.0
        %1926 = vmatpush1.msra.mxu0 0.0
        %1927 = vmatprep.subr.mxu0 0.0
        %1928 = vmatpush1.msra.mxu0 0.0
        %1929 = vmatprep.subr.mxu0 0.0
        %1930 = vmatpush1.msra.mxu0 0.0
        %1931 = vmatprep.subr.mxu0 0.0
        %1932 = vmatpush1.msra.mxu0 0.0
        %1933 = vmatprep.subr.mxu0 0.0
        %1934 = vmatpush1.msra.mxu0 0.0
        %1935 = vmatprep.subr.mxu0 0.0
        %1936 = vmatpush1.msra.mxu0 0.0
        %1937 = vmatprep.subr.mxu0 0.0
        %1938 = vmatpush1.msra.mxu0 0.0
        %1939 = vmatprep.subr.mxu0 0.0
        %1940 = vmatpush1.msra.mxu0 0.0
        %1941 = vmatprep.subr.mxu0 0.0
        %1942 = vmatpush1.msra.mxu0 0.0
        %1943 = vmatprep.subr.mxu0 0.0
        %1944 = vmatpush1.msra.mxu0 0.0
        %1945 = vmatprep.subr.mxu0 0.0
        %1946 = vmatpush1.msra.mxu0 0.0
        %1947 = vmatprep.subr.mxu0 0.0
        %1948 = vmatpush1.msra.mxu0 0.0
        %1949 = vmatprep.subr.mxu0 0.0
        %1950 = vmatpush1.msra.mxu0 0.0
        %1951 = vmatprep.subr.mxu0 0.0
        %1952 = vmatpush1.msra.mxu0 0.0
        %1953 = vmatprep.subr.mxu0 0.0
        %1954 = vmatpush1.msra.mxu0 0.0
        %1955 = vmatprep.subr.mxu0 0.0
        %1956 = vmatpush1.msra.mxu0 0.0
        %1957 = vmatprep.subr.mxu0 0.0
        %1958 = vmatpush1.msra.mxu0 0.0
        %1959 = vmatprep.subr.mxu0 0.0
        %1960 = vmatpush1.msra.mxu0 0.0
        %1961 = vmatprep.mubr.f32.mxu0 0.0
        %1962 = vmatmul.mubr.f32.gmra.mrb[0].mxu0 %v1895
        %v1963 = vpop.f32.mrb[0].mxu0
        %v1964 = vadd.f32 0.0, %v1963
        %v1965 = vpop.f32.mrb[0].mxu0
        %1966 = vdwg.mxu0
        %v1968 = vsel %vm1849, %v1891, 0
        %1970 = vmatprep.subr.mxu0 0.0
        %1971 = vmatpush1.msra.mxu0 %v1541
        %1972 = vmatprep.subr.mxu0 0.0
        %1973 = vmatpush1.msra.mxu0 0.0
        %1974 = vmatprep.subr.mxu0 0.0
        %1975 = vmatpush1.msra.mxu0 0.0
        %1976 = vmatprep.subr.mxu0 0.0
        %1977 = vmatpush1.msra.mxu0 0.0
        %1978 = vmatprep.subr.mxu0 0.0
        %1979 = vmatpush1.msra.mxu0 0.0
        %1980 = vmatprep.subr.mxu0 0.0
        %1981 = vmatpush1.msra.mxu0 0.0
        %1982 = vmatprep.subr.mxu0 0.0
        %1983 = vmatpush1.msra.mxu0 0.0
        %1984 = vmatprep.subr.mxu0 0.0
        %1985 = vmatpush1.msra.mxu0 0.0
        %1986 = vmatprep.subr.mxu0 0.0
        %1987 = vmatpush1.msra.mxu0 0.0
        %1988 = vmatprep.subr.mxu0 0.0
        %1989 = vmatpush1.msra.mxu0 0.0
        %1990 = vmatprep.subr.mxu0 0.0
        %1991 = vmatpush1.msra.mxu0 0.0
        %1992 = vmatprep.subr.mxu0 0.0
        %1993 = vmatpush1.msra.mxu0 0.0
        %1994 = vmatprep.subr.mxu0 0.0
        %1995 = vmatpush1.msra.mxu0 0.0
        %1996 = vmatprep.subr.mxu0 0.0
        %1997 = vmatpush1.msra.mxu0 0.0
        %1998 = vmatprep.subr.mxu0 0.0
        %1999 = vmatpush1.msra.mxu0 0.0
        %2000 = vmatprep.subr.mxu0 0.0
        %2001 = vmatpush1.msra.mxu0 0.0
        %2002 = vmatprep.subr.mxu0 0.0
        %2003 = vmatpush1.msra.mxu0 0.0
        %2004 = vmatprep.subr.mxu0 0.0
        %2005 = vmatpush1.msra.mxu0 0.0
        %2006 = vmatprep.subr.mxu0 0.0
        %2007 = vmatpush1.msra.mxu0 0.0
        %2008 = vmatprep.subr.mxu0 0.0
        %2009 = vmatpush1.msra.mxu0 0.0
        %2010 = vmatprep.subr.mxu0 0.0
        %2011 = vmatpush1.msra.mxu0 0.0
        %2012 = vmatprep.subr.mxu0 0.0
        %2013 = vmatpush1.msra.mxu0 0.0
        %2014 = vmatprep.subr.mxu0 0.0
        %2015 = vmatpush1.msra.mxu0 0.0
        %2016 = vmatprep.subr.mxu0 0.0
        %2017 = vmatpush1.msra.mxu0 0.0
        %2018 = vmatprep.subr.mxu0 0.0
        %2019 = vmatpush1.msra.mxu0 0.0
        %2020 = vmatprep.subr.mxu0 0.0
        %2021 = vmatpush1.msra.mxu0 0.0
        %2022 = vmatprep.subr.mxu0 0.0
        %2023 = vmatpush1.msra.mxu0 0.0
        %2024 = vmatprep.subr.mxu0 0.0
        %2025 = vmatpush1.msra.mxu0 0.0
        %2026 = vmatprep.subr.mxu0 0.0
        %2027 = vmatpush1.msra.mxu0 0.0
        %2028 = vmatprep.subr.mxu0 0.0
        %2029 = vmatpush1.msra.mxu0 0.0
        %2030 = vmatprep.subr.mxu0 0.0
        %2031 = vmatpush1.msra.mxu0 0.0
        %2032 = vmatprep.subr.mxu0 0.0
        %2033 = vmatpush1.msra.mxu0 0.0
        %2034 = vmatprep.mubr.f32.mxu0 0.0
        %2035 = vmatmul.mubr.f32.gmra.mrb[0].mxu0 %v1968
        %v2036 = vpop.f32.mrb[0].mxu0
        %v2037 = vadd.f32 0.0, %v2036
        %v2038 = vpop.f32.mrb[0].mxu0
        %2039 = vdwg.mxu0
        %v2041 = vsel %vm1849, %v1892, 0
        %2043 = vmatprep.subr.mxu0 0.0
        %2044 = vmatpush1.msra.mxu0 %v1542
        %2045 = vmatprep.subr.mxu0 0.0
        %2046 = vmatpush1.msra.mxu0 0.0
        %2047 = vmatprep.subr.mxu0 0.0
        %2048 = vmatpush1.msra.mxu0 0.0
        %2049 = vmatprep.subr.mxu0 0.0
        %2050 = vmatpush1.msra.mxu0 0.0
        %2051 = vmatprep.subr.mxu0 0.0
        %2052 = vmatpush1.msra.mxu0 0.0
        %2053 = vmatprep.subr.mxu0 0.0
        %2054 = vmatpush1.msra.mxu0 0.0
        %2055 = vmatprep.subr.mxu0 0.0
        %2056 = vmatpush1.msra.mxu0 0.0
        %2057 = vmatprep.subr.mxu0 0.0
        %2058 = vmatpush1.msra.mxu0 0.0
        %2059 = vmatprep.subr.mxu0 0.0
        %2060 = vmatpush1.msra.mxu0 0.0
        %2061 = vmatprep.subr.mxu0 0.0
        %2062 = vmatpush1.msra.mxu0 0.0
        %2063 = vmatprep.subr.mxu0 0.0
        %2064 = vmatpush1.msra.mxu0 0.0
        %2065 = vmatprep.subr.mxu0 0.0
        %2066 = vmatpush1.msra.mxu0 0.0
        %2067 = vmatprep.subr.mxu0 0.0
        %2068 = vmatpush1.msra.mxu0 0.0
        %2069 = vmatprep.subr.mxu0 0.0
        %2070 = vmatpush1.msra.mxu0 0.0
        %2071 = vmatprep.subr.mxu0 0.0
        %2072 = vmatpush1.msra.mxu0 0.0
        %2073 = vmatprep.subr.mxu0 0.0
        %2074 = vmatpush1.msra.mxu0 0.0
        %2075 = vmatprep.subr.mxu0 0.0
        %2076 = vmatpush1.msra.mxu0 0.0
        %2077 = vmatprep.subr.mxu0 0.0
        %2078 = vmatpush1.msra.mxu0 0.0
        %2079 = vmatprep.subr.mxu0 0.0
        %2080 = vmatpush1.msra.mxu0 0.0
        %2081 = vmatprep.subr.mxu0 0.0
        %2082 = vmatpush1.msra.mxu0 0.0
        %2083 = vmatprep.subr.mxu0 0.0
        %2084 = vmatpush1.msra.mxu0 0.0
        %2085 = vmatprep.subr.mxu0 0.0
        %2086 = vmatpush1.msra.mxu0 0.0
        %2087 = vmatprep.subr.mxu0 0.0
        %2088 = vmatpush1.msra.mxu0 0.0
        %2089 = vmatprep.subr.mxu0 0.0
        %2090 = vmatpush1.msra.mxu0 0.0
        %2091 = vmatprep.subr.mxu0 0.0
        %2092 = vmatpush1.msra.mxu0 0.0
        %2093 = vmatprep.subr.mxu0 0.0
        %2094 = vmatpush1.msra.mxu0 0.0
        %2095 = vmatprep.subr.mxu0 0.0
        %2096 = vmatpush1.msra.mxu0 0.0
        %2097 = vmatprep.subr.mxu0 0.0
        %2098 = vmatpush1.msra.mxu0 0.0
        %2099 = vmatprep.subr.mxu0 0.0
        %2100 = vmatpush1.msra.mxu0 0.0
        %2101 = vmatprep.subr.mxu0 0.0
        %2102 = vmatpush1.msra.mxu0 0.0
        %2103 = vmatprep.subr.mxu0 0.0
        %2104 = vmatpush1.msra.mxu0 0.0
        %2105 = vmatprep.subr.mxu0 0.0
        %2106 = vmatpush1.msra.mxu0 0.0
        %2107 = vmatprep.mubr.f32.mxu0 0.0
        %2108 = vmatmul.mubr.f32.gmra.mrb[0].mxu0 %v2041
        %v2109 = vpop.f32.mrb[0].mxu0
        %v2110 = vadd.f32 0.0, %v2109
        %v2111 = vpop.f32.mrb[0].mxu0
        %2112 = vdwg.mxu0
        %v2114 = vsel %vm1849, %v1893, 0
        %2116 = vmatprep.subr.mxu0 0.0
        %2117 = vmatpush1.msra.mxu0 %v1543
        %2118 = vmatprep.subr.mxu0 0.0
        %2119 = vmatpush1.msra.mxu0 0.0
        %2120 = vmatprep.subr.mxu0 0.0
        %2121 = vmatpush1.msra.mxu0 0.0
        %2122 = vmatprep.subr.mxu0 0.0
        %2123 = vmatpush1.msra.mxu0 0.0
        %2124 = vmatprep.subr.mxu0 0.0
        %2125 = vmatpush1.msra.mxu0 0.0
        %2126 = vmatprep.subr.mxu0 0.0
        %2127 = vmatpush1.msra.mxu0 0.0
        %2128 = vmatprep.subr.mxu0 0.0
        %2129 = vmatpush1.msra.mxu0 0.0
        %2130 = vmatprep.subr.mxu0 0.0
        %2131 = vmatpush1.msra.mxu0 0.0
        %2132 = vmatprep.subr.mxu0 0.0
        %2133 = vmatpush1.msra.mxu0 0.0
        %2134 = vmatprep.subr.mxu0 0.0
        %2135 = vmatpush1.msra.mxu0 0.0
        %2136 = vmatprep.subr.mxu0 0.0
        %2137 = vmatpush1.msra.mxu0 0.0
        %2138 = vmatprep.subr.mxu0 0.0
        %2139 = vmatpush1.msra.mxu0 0.0
        %2140 = vmatprep.subr.mxu0 0.0
        %2141 = vmatpush1.msra.mxu0 0.0
        %2142 = vmatprep.subr.mxu0 0.0
        %2143 = vmatpush1.msra.mxu0 0.0
        %2144 = vmatprep.subr.mxu0 0.0
        %2145 = vmatpush1.msra.mxu0 0.0
        %2146 = vmatprep.subr.mxu0 0.0
        %2147 = vmatpush1.msra.mxu0 0.0
        %2148 = vmatprep.subr.mxu0 0.0
        %2149 = vmatpush1.msra.mxu0 0.0
        %2150 = vmatprep.subr.mxu0 0.0
        %2151 = vmatpush1.msra.mxu0 0.0
        %2152 = vmatprep.subr.mxu0 0.0
        %2153 = vmatpush1.msra.mxu0 0.0
        %2154 = vmatprep.subr.mxu0 0.0
        %2155 = vmatpush1.msra.mxu0 0.0
        %2156 = vmatprep.subr.mxu0 0.0
        %2157 = vmatpush1.msra.mxu0 0.0
        %2158 = vmatprep.subr.mxu0 0.0
        %2159 = vmatpush1.msra.mxu0 0.0
        %2160 = vmatprep.subr.mxu0 0.0
        %2161 = vmatpush1.msra.mxu0 0.0
        %2162 = vmatprep.subr.mxu0 0.0
        %2163 = vmatpush1.msra.mxu0 0.0
        %2164 = vmatprep.subr.mxu0 0.0
        %2165 = vmatpush1.msra.mxu0 0.0
        %2166 = vmatprep.subr.mxu0 0.0
        %2167 = vmatpush1.msra.mxu0 0.0
        %2168 = vmatprep.subr.mxu0 0.0
        %2169 = vmatpush1.msra.mxu0 0.0
        %2170 = vmatprep.subr.mxu0 0.0
        %2171 = vmatpush1.msra.mxu0 0.0
        %2172 = vmatprep.subr.mxu0 0.0
        %2173 = vmatpush1.msra.mxu0 0.0
        %2174 = vmatprep.subr.mxu0 0.0
        %2175 = vmatpush1.msra.mxu0 0.0
        %2176 = vmatprep.subr.mxu0 0.0
        %2177 = vmatpush1.msra.mxu0 0.0
        %2178 = vmatprep.subr.mxu0 0.0
        %2179 = vmatpush1.msra.mxu0 0.0
        %2180 = vmatprep.mubr.f32.mxu0 0.0
        %2181 = vmatmul.mubr.f32.gmra.mrb[0].mxu0 %v2114
        %v2182 = vpop.f32.mrb[0].mxu0
        %v2183 = vadd.f32 0.0, %v2182
        %v2184 = vpop.f32.mrb[0].mxu0
        %2185 = vdwg.mxu0
        %v2186 = vcombine.low %v1964, %v2110
        %v2187 = vcombine.high %v1964, %v2110
        %v2189 = vunpack.c.l.s4 1983009808
        %v2190 = vunpack.c.0.s8 %v2189
        %v2191 = vlaneseq
        %v2192 = vshrl.u32 %v2191, 7
        %v2193 = vsub.s32 %v2190, %v2192
        %v2194 = vrot.slane %v2186, %v2193
        %v2196 = vunpack.c.l.s4 1983009808
        %v2197 = vunpack.c.0.s8 %v2196
        %v2198 = vlaneseq
        %v2199 = vshrl.u32 %v2198, 7
        %v2200 = vsub.s32 %v2197, %v2199
        %v2201 = vrot.slane %v2187, %v2200
        %v2202 = vcombine.low %v2037, %v2183
        %v2203 = vcombine.high %v2037, %v2183
        %v2205 = vunpack.c.l.s4 1983009808
        %v2206 = vunpack.c.0.s8 %v2205
        %v2207 = vlaneseq
        %v2208 = vshrl.u32 %v2207, 7
        %v2209 = vsub.s32 %v2206, %v2208
        %v2210 = vrot.slane %v2202, %v2209
        %v2212 = vunpack.c.l.s4 1983009808
        %v2213 = vunpack.c.0.s8 %v2212
        %v2214 = vlaneseq
        %v2215 = vshrl.u32 %v2214, 7
        %v2216 = vsub.s32 %v2213, %v2215
        %v2217 = vrot.slane %v2203, %v2216
        %v2218 = vcombine.low %v2194, %v2210
        %v2219 = vcombine.high %v2194, %v2210
        %v2221 = vunpack.c.l.s4 1934713408
        %v2222 = vunpack.c.0.s8 %v2221
        %v2223 = vlaneseq
        %v2224 = vshrl.u32 %v2223, 7
        %v2225 = vsub.s32 %v2222, %v2224
        %v2226 = vrot.slane %v2218, %v2225
        %v2228 = vunpack.c.l.s4 1934713408
        %v2229 = vunpack.c.0.s8 %v2228
        %v2230 = vlaneseq
        %v2231 = vshrl.u32 %v2230, 7
        %v2232 = vsub.s32 %v2229, %v2231
        %v2233 = vrot.slane %v2219, %v2232
        %v2234 = vcombine.low %v2201, %v2217
        %v2235 = vcombine.high %v2201, %v2217
        %v2237 = vunpack.c.l.s4 1934713408
        %v2238 = vunpack.c.0.s8 %v2237
        %v2239 = vlaneseq
        %v2240 = vshrl.u32 %v2239, 7
        %v2241 = vsub.s32 %v2238, %v2240
        %v2242 = vrot.slane %v2234, %v2241
        %v2244 = vunpack.c.l.s4 1934713408
        %v2245 = vunpack.c.0.s8 %v2244
        %v2246 = vlaneseq
        %v2247 = vshrl.u32 %v2246, 7
        %v2248 = vsub.s32 %v2245, %v2247
        %v2249 = vrot.slane %v2235, %v2248
        %v2250 = vcombine.high %v2226, 0.0
        %v2251 = vcombine.high %v2233, 0.0
        %v2252 = vcombine.high %v2242, 0.0
        %v2253 = vcombine.high %v2249, 0.0
        %v2254 = vcombine.low %v2226, %v2233
        %v2256 = vunpack.c.l.s4 1983009808
        %v2257 = vunpack.c.0.s8 %v2256
        %v2258 = vlaneseq
        %v2259 = vshrl.u32 %v2258, 7
        %v2260 = vsub.s32 %v2257, %v2259
        %v2261 = vrot.slane %v2254, %v2260
        %v2262 = vcombine.low %v2250, %v2251
        %v2264 = vunpack.c.l.s4 1983009808
        %v2265 = vunpack.c.0.s8 %v2264
        %v2266 = vlaneseq
        %v2267 = vshrl.u32 %v2266, 7
        %v2268 = vsub.s32 %v2265, %v2267
        %v2269 = vrot.slane %v2262, %v2268
        %v2270 = vcombine.low %v2242, %v2249
        %v2272 = vunpack.c.l.s4 1983009808
        %v2273 = vunpack.c.0.s8 %v2272
        %v2274 = vlaneseq
        %v2275 = vshrl.u32 %v2274, 7
        %v2276 = vsub.s32 %v2273, %v2275
        %v2277 = vrot.slane %v2270, %v2276
        %v2278 = vcombine.low %v2252, %v2253
        %v2280 = vunpack.c.l.s4 1983009808
        %v2281 = vunpack.c.0.s8 %v2280
        %v2282 = vlaneseq
        %v2283 = vshrl.u32 %v2282, 7
        %v2284 = vsub.s32 %v2281, %v2283
        %v2285 = vrot.slane %v2278, %v2284
        %v2286 = vcombine.low %v2261, %v2269
        %v2287 = vcombine.high %v2261, %v2269
        %v2289 = vunpack.c.l.s4 1934713408
        %v2290 = vunpack.c.0.s8 %v2289
        %v2291 = vlaneseq
        %v2292 = vshrl.u32 %v2291, 7
        %v2293 = vsub.s32 %v2290, %v2292
        %v2294 = vrot.slane %v2286, %v2293
        %v2296 = vunpack.c.l.s4 1934713408
        %v2297 = vunpack.c.0.s8 %v2296
        %v2298 = vlaneseq
        %v2299 = vshrl.u32 %v2298, 7
        %v2300 = vsub.s32 %v2297, %v2299
        %v2301 = vrot.slane %v2287, %v2300
        %v2302 = vcombine.low %v2277, %v2285
        %v2303 = vcombine.high %v2277, %v2285
        %v2305 = vunpack.c.l.s4 1934713408
        %v2306 = vunpack.c.0.s8 %v2305
        %v2307 = vlaneseq
        %v2308 = vshrl.u32 %v2307, 7
        %v2309 = vsub.s32 %v2306, %v2308
        %v2310 = vrot.slane %v2302, %v2309
        %v2312 = vunpack.c.l.s4 1934713408
        %v2313 = vunpack.c.0.s8 %v2312
        %v2314 = vlaneseq
        %v2315 = vshrl.u32 %v2314, 7
        %v2316 = vsub.s32 %v2313, %v2315
        %v2317 = vrot.slane %v2303, %v2316
        %v2318 = vcombine.low %v2294, %v2310
        %v2319 = vcombine.high %v2294, %v2310
        %v2320 = vcombine.low %v2301, %v2317
        %v2321 = vcombine.high %v2301, %v2317
        %2323 = vrot.lane.b32.xlu0 %v2319, 32
        %v2324 = vpop.permute.xlu0 %2323
        %2327 = vrot.lane.b32.xlu0 %v2320, 64
        %v2328 = vpop.permute.xlu0 %2327
        %2331 = vrot.lane.b32.xlu0 %v2321, 96
        %v2332 = vpop.permute.xlu0 %2331
        %v2334 = vsel %vm1544, %v2318, %v2324
        %vm2335 = vcmask 523264
        %v2336 = vsel %vm2335, %v2334, %v2328
        %vm2337 = vcmask 785408
        %v2338 = vsel %vm2337, %v2336, %v2332
        %v2339 = vld [vmem:[%s727] sm:$0xff]
        %v2340 = vld [vmem:[%s727 + $0x8] sm:$0xff]
        %v2341 = vld [vmem:[%s727 + $0x10] sm:$0xff]
        %v2342 = vld [vmem:[%s727 + $0x18] sm:$0xff]
        %v2343 = vld [vmem:[%s727 + $0x20] sm:$0xff]
        %v2344 = vld [vmem:[%s727 + $0x28] sm:$0xff]
        %v2345 = vld [vmem:[%s727 + $0x30] sm:$0xff]
        %v2346 = vld [vmem:[%s727 + $0x38] sm:$0xff]
        %v2347 = vld [vmem:[%s727 + $0x40] sm:$0xff]
        %v2348 = vld [vmem:[%s727 + $0x48] sm:$0xff]
        %v2349 = vld [vmem:[%s727 + $0x50] sm:$0xff]
        %v2350 = vld [vmem:[%s727 + $0x58] sm:$0xff]
        %v2351 = vld [vmem:[%s727 + $0x60] sm:$0xff]
        %v2352 = vld [vmem:[%s727 + $0x68] sm:$0xff]
        %v2353 = vld [vmem:[%s727 + $0x70] sm:$0xff]
        %v2354 = vld [vmem:[%s727 + $0x78] sm:$0xff]
        %v2355 = vld [vmem:[%s848] sm:$0x1]
        %v2357 = vlaneseq
        %v2358 = vshrl.u32 %v2357, 7
        %v2359 = vsub.s32 0, %v2358
        %v2360 = vrot.slane %v2355, %v2359
        %2362 = vmatprep.subr.mxu0 0.0
        %2363 = vmatpush1.msra.mxu0 %v2339
        %2364 = vmatprep.subr.mxu0 0.0
        %2365 = vmatpush1.msra.mxu0 %v2340
        %2366 = vmatprep.subr.mxu0 0.0
        %2367 = vmatpush1.msra.mxu0 %v2341
        %2368 = vmatprep.subr.mxu0 0.0
        %2369 = vmatpush1.msra.mxu0 %v2342
        %2370 = vmatprep.subr.mxu0 0.0
        %2371 = vmatpush1.msra.mxu0 %v2343
        %2372 = vmatprep.subr.mxu0 0.0
        %2373 = vmatpush1.msra.mxu0 %v2344
        %2374 = vmatprep.subr.mxu0 0.0
        %2375 = vmatpush1.msra.mxu0 %v2345
        %2376 = vmatprep.subr.mxu0 0.0
        %2377 = vmatpush1.msra.mxu0 %v2346
        %2378 = vmatprep.subr.mxu0 0.0
        %2379 = vmatpush1.msra.mxu0 %v2347
        %2380 = vmatprep.subr.mxu0 0.0
        %2381 = vmatpush1.msra.mxu0 %v2348
        %2382 = vmatprep.subr.mxu0 0.0
        %2383 = vmatpush1.msra.mxu0 %v2349
        %2384 = vmatprep.subr.mxu0 0.0
        %2385 = vmatpush1.msra.mxu0 %v2350
        %2386 = vmatprep.subr.mxu0 0.0
        %2387 = vmatpush1.msra.mxu0 %v2351
        %2388 = vmatprep.subr.mxu0 0.0
        %2389 = vmatpush1.msra.mxu0 %v2352
        %2390 = vmatprep.subr.mxu0 0.0
        %2391 = vmatpush1.msra.mxu0 %v2353
        %2392 = vmatprep.subr.mxu0 0.0
        %2393 = vmatpush1.msra.mxu0 %v2354
        %2394 = vmatprep.subr.mxu0 0.0
        %2395 = vmatpush1.msra.mxu0 0.0
        %2396 = vmatprep.subr.mxu0 0.0
        %2397 = vmatpush1.msra.mxu0 0.0
        %2398 = vmatprep.subr.mxu0 0.0
        %2399 = vmatpush1.msra.mxu0 0.0
        %2400 = vmatprep.subr.mxu0 0.0
        %2401 = vmatpush1.msra.mxu0 0.0
        %2402 = vmatprep.subr.mxu0 0.0
        %2403 = vmatpush1.msra.mxu0 0.0
        %2404 = vmatprep.subr.mxu0 0.0
        %2405 = vmatpush1.msra.mxu0 0.0
        %2406 = vmatprep.subr.mxu0 0.0
        %2407 = vmatpush1.msra.mxu0 0.0
        %2408 = vmatprep.subr.mxu0 0.0
        %2409 = vmatpush1.msra.mxu0 0.0
        %2410 = vmatprep.subr.mxu0 0.0
        %2411 = vmatpush1.msra.mxu0 0.0
        %2412 = vmatprep.subr.mxu0 0.0
        %2413 = vmatpush1.msra.mxu0 0.0
        %2414 = vmatprep.subr.mxu0 0.0
        %2415 = vmatpush1.msra.mxu0 0.0
        %2416 = vmatprep.subr.mxu0 0.0
        %2417 = vmatpush1.msra.mxu0 0.0
        %2418 = vmatprep.subr.mxu0 0.0
        %2419 = vmatpush1.msra.mxu0 0.0
        %2420 = vmatprep.subr.mxu0 0.0
        %2421 = vmatpush1.msra.mxu0 0.0
        %2422 = vmatprep.subr.mxu0 0.0
        %2423 = vmatpush1.msra.mxu0 0.0
        %2424 = vmatprep.subr.mxu0 0.0
        %2425 = vmatpush1.msra.mxu0 0.0
        %2426 = vmatprep.mubr.f32.mxu0 0.0
        %2427 = vmatmul.mubr.f32.gmra.mrb[0].mxu0 %v2338
        %v2428 = vpop.f32.mrb[0].mxu0
        %v2429 = vadd.f32 %v2360, %v2428
        %v2430 = vpop.f32.mrb[0].mxu0
        %2431 = vdwg.mxu0
        %v2432 = vadd.f32 %v870, %v2429
        %v2433 = vld [vmem:[%s851] sm:$0x1]
        %v2434 = vld [vmem:[%s854] sm:$0x1]
        %2435 = vadd.xlane.f32.xlu0 %v2432
        %v2436 = vpop.xlane.xlu0 %2435
        %v2437 = vmul.f32 %v2436, %v875
        %v2438 = vsub.f32 %v2432, %v2437
        %v2439 = vmul.f32 %v2438, %v2438
        %2440 = vadd.xlane.f32.xlu0 %v2439
        %v2441 = vpop.xlane.xlu0 %2440
        %v2442 = vmul.f32 %v2441, %v875
        %v2443 = vadd.f32 %v2442, 1e-06
        %v2444 = vrsqrt.pop %v2443
        %v2445 = vmul.f32 %v2438, %v2444
        %v2447 = vlaneseq
        %v2448 = vshrl.u32 %v2447, 7
        %v2449 = vsub.s32 0, %v2448
        %v2450 = vrot.slane %v2433, %v2449
        %v2452 = vmul.f32 %v2445, %v2450
        %v2454 = vlaneseq
        %v2455 = vshrl.u32 %v2454, 7
        %v2456 = vsub.s32 0, %v2455
        %v2457 = vrot.slane %v2434, %v2456
        %v2459 = vadd.f32 %v2452, %v2457
        %v2460 = vld [vmem:[%s736] sm:$0xff]
        %v2461 = vld [vmem:[%s736 + $0x8] sm:$0xff]
        %v2462 = vld [vmem:[%s736 + $0x10] sm:$0xff]
        %v2463 = vld [vmem:[%s736 + $0x18] sm:$0xff]
        %v2464 = vld [vmem:[%s736 + $0x20] sm:$0xff]
        %v2465 = vld [vmem:[%s736 + $0x28] sm:$0xff]
        %v2466 = vld [vmem:[%s736 + $0x30] sm:$0xff]
        %v2467 = vld [vmem:[%s736 + $0x38] sm:$0xff]
        %v2468 = vld [vmem:[%s736 + $0x40] sm:$0xff]
        %v2469 = vld [vmem:[%s736 + $0x48] sm:$0xff]
        %v2470 = vld [vmem:[%s736 + $0x50] sm:$0xff]
        %v2471 = vld [vmem:[%s736 + $0x58] sm:$0xff]
        %v2472 = vld [vmem:[%s736 + $0x60] sm:$0xff]
        %v2473 = vld [vmem:[%s736 + $0x68] sm:$0xff]
        %v2474 = vld [vmem:[%s736 + $0x70] sm:$0xff]
        %v2475 = vld [vmem:[%s736 + $0x78] sm:$0xff]
        %v2476 = vld [vmem:[%s736 + $0x80] sm:$0xff]
        %v2477 = vld [vmem:[%s736 + $0x88] sm:$0xff]
        %v2478 = vld [vmem:[%s736 + $0x90] sm:$0xff]
        %v2479 = vld [vmem:[%s736 + $0x98] sm:$0xff]
        %v2480 = vld [vmem:[%s736 + $0xa0] sm:$0xff]
        %v2481 = vld [vmem:[%s736 + $0xa8] sm:$0xff]
        %v2482 = vld [vmem:[%s736 + $0xb0] sm:$0xff]
        %v2483 = vld [vmem:[%s736 + $0xb8] sm:$0xff]
        %v2484 = vld [vmem:[%s736 + $0xc0] sm:$0xff]
        %v2485 = vld [vmem:[%s736 + $0xc8] sm:$0xff]
        %v2486 = vld [vmem:[%s736 + $0xd0] sm:$0xff]
        %v2487 = vld [vmem:[%s736 + $0xd8] sm:$0xff]
        %v2488 = vld [vmem:[%s736 + $0xe0] sm:$0xff]
        %v2489 = vld [vmem:[%s736 + $0xe8] sm:$0xff]
        %v2490 = vld [vmem:[%s736 + $0xf0] sm:$0xff]
        %v2491 = vld [vmem:[%s736 + $0xf8] sm:$0xff]
        %v2492 = vld [vmem:[%s736 + $0x100] sm:$0xff]
        %v2493 = vld [vmem:[%s736 + $0x108] sm:$0xff]
        %v2494 = vld [vmem:[%s736 + $0x110] sm:$0xff]
        %v2495 = vld [vmem:[%s736 + $0x118] sm:$0xff]
        %v2496 = vld [vmem:[%s736 + $0x120] sm:$0xff]
        %v2497 = vld [vmem:[%s736 + $0x128] sm:$0xff]
        %v2498 = vld [vmem:[%s736 + $0x130] sm:$0xff]
        %v2499 = vld [vmem:[%s736 + $0x138] sm:$0xff]
        %v2500 = vld [vmem:[%s736 + $0x140] sm:$0xff]
        %v2501 = vld [vmem:[%s736 + $0x148] sm:$0xff]
        %v2502 = vld [vmem:[%s736 + $0x150] sm:$0xff]
        %v2503 = vld [vmem:[%s736 + $0x158] sm:$0xff]
        %v2504 = vld [vmem:[%s736 + $0x160] sm:$0xff]
        %v2505 = vld [vmem:[%s736 + $0x168] sm:$0xff]
        %v2506 = vld [vmem:[%s736 + $0x170] sm:$0xff]
        %v2507 = vld [vmem:[%s736 + $0x178] sm:$0xff]
        %v2508 = vld [vmem:[%s736 + $0x180] sm:$0xff]
        %v2509 = vld [vmem:[%s736 + $0x188] sm:$0xff]
        %v2510 = vld [vmem:[%s736 + $0x190] sm:$0xff]
        %v2511 = vld [vmem:[%s736 + $0x198] sm:$0xff]
        %v2512 = vld [vmem:[%s736 + $0x1a0] sm:$0xff]
        %v2513 = vld [vmem:[%s736 + $0x1a8] sm:$0xff]
        %v2514 = vld [vmem:[%s736 + $0x1b0] sm:$0xff]
        %v2515 = vld [vmem:[%s736 + $0x1b8] sm:$0xff]
        %v2516 = vld [vmem:[%s736 + $0x1c0] sm:$0xff]
        %v2517 = vld [vmem:[%s736 + $0x1c8] sm:$0xff]
        %v2518 = vld [vmem:[%s736 + $0x1d0] sm:$0xff]
        %v2519 = vld [vmem:[%s736 + $0x1d8] sm:$0xff]
        %v2520 = vld [vmem:[%s736 + $0x1e0] sm:$0xff]
        %v2521 = vld [vmem:[%s736 + $0x1e8] sm:$0xff]
        %v2522 = vld [vmem:[%s736 + $0x1f0] sm:$0xff]
        %v2523 = vld [vmem:[%s736 + $0x1f8] sm:$0xff]
        %v2524 = vld [vmem:[%s858] sm:$0xf]
        %v2526 = vlaneseq
        %v2527 = vshrl.u32 %v2526, 7
        %v2528 = vsub.s32 0, %v2527
        %v2529 = vrot.slane %v2524, %v2528
        %v2530 = vlaneseq
        %v2531 = vshrl.u32 %v2530, 7
        %v2532 = vsub.s32 1, %v2531
        %v2533 = vrot.slane %v2524, %v2532
        %v2534 = vlaneseq
        %v2535 = vshrl.u32 %v2534, 7
        %v2536 = vsub.s32 2, %v2535
        %v2537 = vrot.slane %v2524, %v2536
        %v2538 = vlaneseq
        %v2539 = vshrl.u32 %v2538, 7
        %v2540 = vsub.s32 3, %v2539
        %v2541 = vrot.slane %v2524, %v2540
        %2546 = vmatprep.subr.mxu0 %v2461
        %2547 = vmatpush1.msra.mxu0 %v2460
        %2548 = vmatprep.subr.mxu0 %v2465
        %2549 = vmatpush1.msra.mxu0 %v2464
        %2550 = vmatprep.subr.mxu0 %v2469
        %2551 = vmatpush1.msra.mxu0 %v2468
        %2552 = vmatprep.subr.mxu0 %v2473
        %2553 = vmatpush1.msra.mxu0 %v2472
        %2554 = vmatprep.subr.mxu0 %v2477
        %2555 = vmatpush1.msra.mxu0 %v2476
        %2556 = vmatprep.subr.mxu0 %v2481
        %2557 = vmatpush1.msra.mxu0 %v2480
        %2558 = vmatprep.subr.mxu0 %v2485
        %2559 = vmatpush1.msra.mxu0 %v2484
        %2560 = vmatprep.subr.mxu0 %v2489
        %2561 = vmatpush1.msra.mxu0 %v2488
        %2562 = vmatprep.subr.mxu0 %v2493
        %2563 = vmatpush1.msra.mxu0 %v2492
        %2564 = vmatprep.subr.mxu0 %v2497
        %2565 = vmatpush1.msra.mxu0 %v2496
        %2566 = vmatprep.subr.mxu0 %v2501
        %2567 = vmatpush1.msra.mxu0 %v2500
        %2568 = vmatprep.subr.mxu0 %v2505
        %2569 = vmatpush1.msra.mxu0 %v2504
        %2570 = vmatprep.subr.mxu0 %v2509
        %2571 = vmatpush1.msra.mxu0 %v2508
        %2572 = vmatprep.subr.mxu0 %v2513
        %2573 = vmatpush1.msra.mxu0 %v2512
        %2574 = vmatprep.subr.mxu0 %v2517
        %2575 = vmatpush1.msra.mxu0 %v2516
        %2576 = vmatprep.subr.mxu0 %v2521
        %2577 = vmatpush1.msra.mxu0 %v2520
        %2578 = vmatprep.subr.mxu0 0.0
        %2579 = vmatpush1.msra.mxu0 0.0
        %2580 = vmatprep.subr.mxu0 0.0
        %2581 = vmatpush1.msra.mxu0 0.0
        %2582 = vmatprep.subr.mxu0 0.0
        %2583 = vmatpush1.msra.mxu0 0.0
        %2584 = vmatprep.subr.mxu0 0.0
        %2585 = vmatpush1.msra.mxu0 0.0
        %2586 = vmatprep.subr.mxu0 0.0
        %2587 = vmatpush1.msra.mxu0 0.0
        %2588 = vmatprep.subr.mxu0 0.0
        %2589 = vmatpush1.msra.mxu0 0.0
        %2590 = vmatprep.subr.mxu0 0.0
        %2591 = vmatpush1.msra.mxu0 0.0
        %2592 = vmatprep.subr.mxu0 0.0
        %2593 = vmatpush1.msra.mxu0 0.0
        %2594 = vmatprep.subr.mxu0 0.0
        %2595 = vmatpush1.msra.mxu0 0.0
        %2596 = vmatprep.subr.mxu0 0.0
        %2597 = vmatpush1.msra.mxu0 0.0
        %2598 = vmatprep.subr.mxu0 0.0
        %2599 = vmatpush1.msra.mxu0 0.0
        %2600 = vmatprep.subr.mxu0 0.0
        %2601 = vmatpush1.msra.mxu0 0.0
        %2602 = vmatprep.subr.mxu0 0.0
        %2603 = vmatpush1.msra.mxu0 0.0
        %2604 = vmatprep.subr.mxu0 0.0
        %2605 = vmatpush1.msra.mxu0 0.0
        %2606 = vmatprep.subr.mxu0 0.0
        %2607 = vmatpush1.msra.mxu0 0.0
        %2608 = vmatprep.subr.mxu0 0.0
        %2609 = vmatpush1.msra.mxu0 0.0
        %2610 = vmatprep.mubr.f32.mxu0 0.0
        %2611 = vmatmul.mubr.f32.gmra.mrb[0].mxu0 %v2459
        %v2612 = vpop.f32.mrb[0].mxu0
        %v2613 = vadd.f32 %v2529, %v2612
        %v2614 = vpop.f32.mrb[0].mxu0
        %v2615 = vadd.f32 %v2533, %v2614
        %2616 = vdwg.mxu0
        %2617 = vmatprep.subr.mxu0 %v2463
        %2618 = vmatpush1.msra.mxu0 %v2462
        %2619 = vmatprep.subr.mxu0 %v2467
        %2620 = vmatpush1.msra.mxu0 %v2466
        %2621 = vmatprep.subr.mxu0 %v2471
        %2622 = vmatpush1.msra.mxu0 %v2470
        %2623 = vmatprep.subr.mxu0 %v2475
        %2624 = vmatpush1.msra.mxu0 %v2474
        %2625 = vmatprep.subr.mxu0 %v2479
        %2626 = vmatpush1.msra.mxu0 %v2478
        %2627 = vmatprep.subr.mxu0 %v2483
        %2628 = vmatpush1.msra.mxu0 %v2482
        %2629 = vmatprep.subr.mxu0 %v2487
        %2630 = vmatpush1.msra.mxu0 %v2486
        %2631 = vmatprep.subr.mxu0 %v2491
        %2632 = vmatpush1.msra.mxu0 %v2490
        %2633 = vmatprep.subr.mxu0 %v2495
        %2634 = vmatpush1.msra.mxu0 %v2494
        %2635 = vmatprep.subr.mxu0 %v2499
        %2636 = vmatpush1.msra.mxu0 %v2498
        %2637 = vmatprep.subr.mxu0 %v2503
        %2638 = vmatpush1.msra.mxu0 %v2502
        %2639 = vmatprep.subr.mxu0 %v2507
        %2640 = vmatpush1.msra.mxu0 %v2506
        %2641 = vmatprep.subr.mxu0 %v2511
        %2642 = vmatpush1.msra.mxu0 %v2510
        %2643 = vmatprep.subr.mxu0 %v2515
        %2644 = vmatpush1.msra.mxu0 %v2514
        %2645 = vmatprep.subr.mxu0 %v2519
        %2646 = vmatpush1.msra.mxu0 %v2518
        %2647 = vmatprep.subr.mxu0 %v2523
        %2648 = vmatpush1.msra.mxu0 %v2522
        %2649 = vmatprep.subr.mxu0 0.0
        %2650 = vmatpush1.msra.mxu0 0.0
        %2651 = vmatprep.subr.mxu0 0.0
        %2652 = vmatpush1.msra.mxu0 0.0
        %2653 = vmatprep.subr.mxu0 0.0
        %2654 = vmatpush1.msra.mxu0 0.0
        %2655 = vmatprep.subr.mxu0 0.0
        %2656 = vmatpush1.msra.mxu0 0.0
        %2657 = vmatprep.subr.mxu0 0.0
        %2658 = vmatpush1.msra.mxu0 0.0
        %2659 = vmatprep.subr.mxu0 0.0
        %2660 = vmatpush1.msra.mxu0 0.0
        %2661 = vmatprep.subr.mxu0 0.0
        %2662 = vmatpush1.msra.mxu0 0.0
        %2663 = vmatprep.subr.mxu0 0.0
        %2664 = vmatpush1.msra.mxu0 0.0
        %2665 = vmatprep.subr.mxu0 0.0
        %2666 = vmatpush1.msra.mxu0 0.0
        %2667 = vmatprep.subr.mxu0 0.0
        %2668 = vmatpush1.msra.mxu0 0.0
        %2669 = vmatprep.subr.mxu0 0.0
        %2670 = vmatpush1.msra.mxu0 0.0
        %2671 = vmatprep.subr.mxu0 0.0
        %2672 = vmatpush1.msra.mxu0 0.0
        %2673 = vmatprep.subr.mxu0 0.0
        %2674 = vmatpush1.msra.mxu0 0.0
        %2675 = vmatprep.subr.mxu0 0.0
        %2676 = vmatpush1.msra.mxu0 0.0
        %2677 = vmatprep.subr.mxu0 0.0
        %2678 = vmatpush1.msra.mxu0 0.0
        %2679 = vmatprep.subr.mxu0 0.0
        %2680 = vmatpush1.msra.mxu0 0.0
        %2681 = vmatprep.mubr.f32.mxu0 0.0
        %2682 = vmatmul.mubr.f32.gmra.mrb[0].mxu0 %v2459
        %v2683 = vpop.f32.mrb[0].mxu0
        %v2684 = vadd.f32 %v2537, %v2683
        %v2685 = vpop.f32.mrb[0].mxu0
        %v2686 = vadd.f32 %v2541, %v2685
        %2687 = vdwg.mxu0
        %v2688 = vmul.f32 %v2613, %v2613
        %v2689 = vmul.f32 %v2615, %v2615
        %v2690 = vmul.f32 %v2684, %v2684
        %v2691 = vmul.f32 %v2686, %v2686
        %v2692 = vmul.f32 %v2613, %v2688
        %v2693 = vmul.f32 %v2615, %v2689
        %v2694 = vmul.f32 %v2684, %v2690
        %v2695 = vmul.f32 %v2686, %v2691
        %v2696 = vmul.f32 %v2692, 0.044715
        %v2697 = vmul.f32 %v2693, 0.044715
        %v2698 = vmul.f32 %v2694, 0.044715
        %v2699 = vmul.f32 %v2695, 0.044715
        %v2700 = vadd.f32 %v2613, %v2696
        %v2701 = vadd.f32 %v2615, %v2697
        %v2702 = vadd.f32 %v2684, %v2698
        %v2703 = vadd.f32 %v2686, %v2699
        %v2704 = vmul.f32 %v2700, 0.7978846
        %v2705 = vmul.f32 %v2701, 0.7978846
        %v2706 = vmul.f32 %v2702, 0.7978846
        %v2707 = vmul.f32 %v2703, 0.7978846
        %v2708 = vtanh.pop %v2704
        %v2709 = vtanh.pop %v2705
        %v2710 = vtanh.pop %v2706
        %v2711 = vtanh.pop %v2707
        %v2712 = vadd.f32 %v2708, 1.0
        %v2713 = vadd.f32 %v2709, 1.0
        %v2714 = vadd.f32 %v2710, 1.0
        %v2715 = vadd.f32 %v2711, 1.0
        %v2716 = vmul.f32 %v2712, 0.5
        %v2717 = vmul.f32 %v2713, 0.5
        %v2718 = vmul.f32 %v2714, 0.5
        %v2719 = vmul.f32 %v2715, 0.5
        %v2720 = vmul.f32 %v2613, %v2716
        %v2721 = vmul.f32 %v2615, %v2717
        %v2722 = vmul.f32 %v2684, %v2718
        %v2723 = vmul.f32 %v2686, %v2719
        %v2724 = vld [vmem:[%s745] sm:$0xff]
        %v2725 = vld [vmem:[%s745 + $0x8] sm:$0xff]
        %v2726 = vld [vmem:[%s745 + $0x10] sm:$0xff]
        %v2727 = vld [vmem:[%s745 + $0x18] sm:$0xff]
        %v2728 = vld [vmem:[%s745 + $0x20] sm:$0xff]
        %v2729 = vld [vmem:[%s745 + $0x28] sm:$0xff]
        %v2730 = vld [vmem:[%s745 + $0x30] sm:$0xff]
        %v2731 = vld [vmem:[%s745 + $0x38] sm:$0xff]
        %v2732 = vld [vmem:[%s745 + $0x40] sm:$0xff]
        %v2733 = vld [vmem:[%s745 + $0x48] sm:$0xff]
        %v2734 = vld [vmem:[%s745 + $0x50] sm:$0xff]
        %v2735 = vld [vmem:[%s745 + $0x58] sm:$0xff]
        %v2736 = vld [vmem:[%s745 + $0x60] sm:$0xff]
        %v2737 = vld [vmem:[%s745 + $0x68] sm:$0xff]
        %v2738 = vld [vmem:[%s745 + $0x70] sm:$0xff]
        %v2739 = vld [vmem:[%s745 + $0x78] sm:$0xff]
        %v2740 = vld [vmem:[%s745 + $0x80] sm:$0xff]
        %v2741 = vld [vmem:[%s745 + $0x88] sm:$0xff]
        %v2742 = vld [vmem:[%s745 + $0x90] sm:$0xff]
        %v2743 = vld [vmem:[%s745 + $0x98] sm:$0xff]
        %v2744 = vld [vmem:[%s745 + $0xa0] sm:$0xff]
        %v2745 = vld [vmem:[%s745 + $0xa8] sm:$0xff]
        %v2746 = vld [vmem:[%s745 + $0xb0] sm:$0xff]
        %v2747 = vld [vmem:[%s745 + $0xb8] sm:$0xff]
        %v2748 = vld [vmem:[%s745 + $0xc0] sm:$0xff]
        %v2749 = vld [vmem:[%s745 + $0xc8] sm:$0xff]
        %v2750 = vld [vmem:[%s745 + $0xd0] sm:$0xff]
        %v2751 = vld [vmem:[%s745 + $0xd8] sm:$0xff]
        %v2752 = vld [vmem:[%s745 + $0xe0] sm:$0xff]
        %v2753 = vld [vmem:[%s745 + $0xe8] sm:$0xff]
        %v2754 = vld [vmem:[%s745 + $0xf0] sm:$0xff]
        %v2755 = vld [vmem:[%s745 + $0xf8] sm:$0xff]
        %v2756 = vld [vmem:[%s745 + $0x100] sm:$0xff]
        %v2757 = vld [vmem:[%s745 + $0x108] sm:$0xff]
        %v2758 = vld [vmem:[%s745 + $0x110] sm:$0xff]
        %v2759 = vld [vmem:[%s745 + $0x118] sm:$0xff]
        %v2760 = vld [vmem:[%s745 + $0x120] sm:$0xff]
        %v2761 = vld [vmem:[%s745 + $0x128] sm:$0xff]
        %v2762 = vld [vmem:[%s745 + $0x130] sm:$0xff]
        %v2763 = vld [vmem:[%s745 + $0x138] sm:$0xff]
        %v2764 = vld [vmem:[%s745 + $0x140] sm:$0xff]
        %v2765 = vld [vmem:[%s745 + $0x148] sm:$0xff]
        %v2766 = vld [vmem:[%s745 + $0x150] sm:$0xff]
        %v2767 = vld [vmem:[%s745 + $0x158] sm:$0xff]
        %v2768 = vld [vmem:[%s745 + $0x160] sm:$0xff]
        %v2769 = vld [vmem:[%s745 + $0x168] sm:$0xff]
        %v2770 = vld [vmem:[%s745 + $0x170] sm:$0xff]
        %v2771 = vld [vmem:[%s745 + $0x178] sm:$0xff]
        %v2772 = vld [vmem:[%s745 + $0x180] sm:$0xff]
        %v2773 = vld [vmem:[%s745 + $0x188] sm:$0xff]
        %v2774 = vld [vmem:[%s745 + $0x190] sm:$0xff]
        %v2775 = vld [vmem:[%s745 + $0x198] sm:$0xff]
        %v2776 = vld [vmem:[%s745 + $0x1a0] sm:$0xff]
        %v2777 = vld [vmem:[%s745 + $0x1a8] sm:$0xff]
        %v2778 = vld [vmem:[%s745 + $0x1b0] sm:$0xff]
        %v2779 = vld [vmem:[%s745 + $0x1b8] sm:$0xff]
        %v2780 = vld [vmem:[%s745 + $0x1c0] sm:$0xff]
        %v2781 = vld [vmem:[%s745 + $0x1c8] sm:$0xff]
        %v2782 = vld [vmem:[%s745 + $0x1d0] sm:$0xff]
        %v2783 = vld [vmem:[%s745 + $0x1d8] sm:$0xff]
        %v2784 = vld [vmem:[%s745 + $0x1e0] sm:$0xff]
        %v2785 = vld [vmem:[%s745 + $0x1e8] sm:$0xff]
        %v2786 = vld [vmem:[%s745 + $0x1f0] sm:$0xff]
        %v2787 = vld [vmem:[%s745 + $0x1f8] sm:$0xff]
        %v2788 = vld [vmem:[%s861] sm:$0x1]
        %v2790 = vlaneseq
        %v2791 = vshrl.u32 %v2790, 7
        %v2792 = vsub.s32 0, %v2791
        %v2793 = vrot.slane %v2788, %v2792
        %2795 = vmatprep.subr.mxu0 0.0
        %2796 = vmatpush1.msra.mxu0 %v2724
        %2797 = vmatprep.subr.mxu0 0.0
        %2798 = vmatpush1.msra.mxu0 %v2725
        %2799 = vmatprep.subr.mxu0 0.0
        %2800 = vmatpush1.msra.mxu0 %v2726
        %2801 = vmatprep.subr.mxu0 0.0
        %2802 = vmatpush1.msra.mxu0 %v2727
        %2803 = vmatprep.subr.mxu0 0.0
        %2804 = vmatpush1.msra.mxu0 %v2728
        %2805 = vmatprep.subr.mxu0 0.0
        %2806 = vmatpush1.msra.mxu0 %v2729
        %2807 = vmatprep.subr.mxu0 0.0
        %2808 = vmatpush1.msra.mxu0 %v2730
        %2809 = vmatprep.subr.mxu0 0.0
        %2810 = vmatpush1.msra.mxu0 %v2731
        %2811 = vmatprep.subr.mxu0 0.0
        %2812 = vmatpush1.msra.mxu0 %v2732
        %2813 = vmatprep.subr.mxu0 0.0
        %2814 = vmatpush1.msra.mxu0 %v2733
        %2815 = vmatprep.subr.mxu0 0.0
        %2816 = vmatpush1.msra.mxu0 %v2734
        %2817 = vmatprep.subr.mxu0 0.0
        %2818 = vmatpush1.msra.mxu0 %v2735
        %2819 = vmatprep.subr.mxu0 0.0
        %2820 = vmatpush1.msra.mxu0 %v2736
        %2821 = vmatprep.subr.mxu0 0.0
        %2822 = vmatpush1.msra.mxu0 %v2737
        %2823 = vmatprep.subr.mxu0 0.0
        %2824 = vmatpush1.msra.mxu0 %v2738
        %2825 = vmatprep.subr.mxu0 0.0
        %2826 = vmatpush1.msra.mxu0 %v2739
        %2827 = vmatprep.subr.mxu0 0.0
        %2828 = vmatpush1.msra.mxu0 %v2740
        %2829 = vmatprep.subr.mxu0 0.0
        %2830 = vmatpush1.msra.mxu0 %v2741
        %2831 = vmatprep.subr.mxu0 0.0
        %2832 = vmatpush1.msra.mxu0 %v2742
        %2833 = vmatprep.subr.mxu0 0.0
        %2834 = vmatpush1.msra.mxu0 %v2743
        %2835 = vmatprep.subr.mxu0 0.0
        %2836 = vmatpush1.msra.mxu0 %v2744
        %2837 = vmatprep.subr.mxu0 0.0
        %2838 = vmatpush1.msra.mxu0 %v2745
        %2839 = vmatprep.subr.mxu0 0.0
        %2840 = vmatpush1.msra.mxu0 %v2746
        %2841 = vmatprep.subr.mxu0 0.0
        %2842 = vmatpush1.msra.mxu0 %v2747
        %2843 = vmatprep.subr.mxu0 0.0
        %2844 = vmatpush1.msra.mxu0 %v2748
        %2845 = vmatprep.subr.mxu0 0.0
        %2846 = vmatpush1.msra.mxu0 %v2749
        %2847 = vmatprep.subr.mxu0 0.0
        %2848 = vmatpush1.msra.mxu0 %v2750
        %2849 = vmatprep.subr.mxu0 0.0
        %2850 = vmatpush1.msra.mxu0 %v2751
        %2851 = vmatprep.subr.mxu0 0.0
        %2852 = vmatpush1.msra.mxu0 %v2752
        %2853 = vmatprep.subr.mxu0 0.0
        %2854 = vmatpush1.msra.mxu0 %v2753
        %2855 = vmatprep.subr.mxu0 0.0
        %2856 = vmatpush1.msra.mxu0 %v2754
        %2857 = vmatprep.subr.mxu0 0.0
        %2858 = vmatpush1.msra.mxu0 %v2755
        %2859 = vmatprep.mubr.f32.mxu0 %v2721
        %2860 = vmatmul.mubr.f32.gmra.mrb[0].mxu0 %v2720
        %v2861 = vpop.f32.mrb[0].mxu0
        %v2862 = vadd.f32 %v2793, %v2861
        %v2863 = vpop.f32.mrb[0].mxu0
        %2864 = vdwg.mxu0
        %2865 = vmatprep.subr.mxu0 0.0
        %2866 = vmatpush1.msra.mxu0 %v2756
        %2867 = vmatprep.subr.mxu0 0.0
        %2868 = vmatpush1.msra.mxu0 %v2757
        %2869 = vmatprep.subr.mxu0 0.0
        %2870 = vmatpush1.msra.mxu0 %v2758
        %2871 = vmatprep.subr.mxu0 0.0
        %2872 = vmatpush1.msra.mxu0 %v2759
        %2873 = vmatprep.subr.mxu0 0.0
        %2874 = vmatpush1.msra.mxu0 %v2760
        %2875 = vmatprep.subr.mxu0 0.0
        %2876 = vmatpush1.msra.mxu0 %v2761
        %2877 = vmatprep.subr.mxu0 0.0
        %2878 = vmatpush1.msra.mxu0 %v2762
        %2879 = vmatprep.subr.mxu0 0.0
        %2880 = vmatpush1.msra.mxu0 %v2763
        %2881 = vmatprep.subr.mxu0 0.0
        %2882 = vmatpush1.msra.mxu0 %v2764
        %2883 = vmatprep.subr.mxu0 0.0
        %2884 = vmatpush1.msra.mxu0 %v2765
        %2885 = vmatprep.subr.mxu0 0.0
        %2886 = vmatpush1.msra.mxu0 %v2766
        %2887 = vmatprep.subr.mxu0 0.0
        %2888 = vmatpush1.msra.mxu0 %v2767
        %2889 = vmatprep.subr.mxu0 0.0
        %2890 = vmatpush1.msra.mxu0 %v2768
        %2891 = vmatprep.subr.mxu0 0.0
        %2892 = vmatpush1.msra.mxu0 %v2769
        %2893 = vmatprep.subr.mxu0 0.0
        %2894 = vmatpush1.msra.mxu0 %v2770
        %2895 = vmatprep.subr.mxu0 0.0
        %2896 = vmatpush1.msra.mxu0 %v2771
        %2897 = vmatprep.subr.mxu0 0.0
        %2898 = vmatpush1.msra.mxu0 %v2772
        %2899 = vmatprep.subr.mxu0 0.0
        %2900 = vmatpush1.msra.mxu0 %v2773
        %2901 = vmatprep.subr.mxu0 0.0
        %2902 = vmatpush1.msra.mxu0 %v2774
        %2903 = vmatprep.subr.mxu0 0.0
        %2904 = vmatpush1.msra.mxu0 %v2775
        %2905 = vmatprep.subr.mxu0 0.0
        %2906 = vmatpush1.msra.mxu0 %v2776
        %2907 = vmatprep.subr.mxu0 0.0
        %2908 = vmatpush1.msra.mxu0 %v2777
        %2909 = vmatprep.subr.mxu0 0.0
        %2910 = vmatpush1.msra.mxu0 %v2778
        %2911 = vmatprep.subr.mxu0 0.0
        %2912 = vmatpush1.msra.mxu0 %v2779
        %2913 = vmatprep.subr.mxu0 0.0
        %2914 = vmatpush1.msra.mxu0 %v2780
        %2915 = vmatprep.subr.mxu0 0.0
        %2916 = vmatpush1.msra.mxu0 %v2781
        %2917 = vmatprep.subr.mxu0 0.0
        %2918 = vmatpush1.msra.mxu0 %v2782
        %2919 = vmatprep.subr.mxu0 0.0
        %2920 = vmatpush1.msra.mxu0 %v2783
        %2921 = vmatprep.subr.mxu0 0.0
        %2922 = vmatpush1.msra.mxu0 %v2784
        %2923 = vmatprep.subr.mxu0 0.0
        %2924 = vmatpush1.msra.mxu0 %v2785
        %2925 = vmatprep.subr.mxu0 0.0
        %2926 = vmatpush1.msra.mxu0 %v2786
        %2927 = vmatprep.subr.mxu0 0.0
        %2928 = vmatpush1.msra.mxu0 %v2787
        %2929 = vmatprep.mubr.f32.mxu0 %v2723
        %2930 = vmatmul.mubr.f32.gmra.mrb[0].mxu0 %v2722
        %v2931 = vpop.f32.mrb[0].mxu0
        %v2932 = vadd.f32 %v2862, %v2931
        %v2933 = vpop.f32.mrb[0].mxu0
        %2934 = vdwg.mxu0
        %v2935 = vadd.f32 %v2432, %v2932
        %2936 = vst [vmem:[#allocation2] sm:$0xff] %v2935
        %p2937 = scmp.eq.s32.totalorder %s39, 1
        // Predicated region
        $region121: #{tpu_custom_call.1} parent=83 // pred_check
          %p2938 = pneg %p2937
        $region122: #{tpu_custom_call.1} parent=83 // pred_check_branch
          %2940 = sbr.rel (%p2938) target = $region124
        $region123: #{tpu_custom_call.1} parent=83 // pred_region
          %v2941 = vld [vmem:[%s14] sm:$0x1]
          %v2942 = vld [vmem:[%s15] sm:$0x1]
          %2943 = vadd.xlane.f32.xlu0 %v2935
          %v2944 = vpop.xlane.xlu0 %2943
          %v2945 = vmul.f32 %v2944, %v875
          %v2946 = vsub.f32 %v2935, %v2945
          %v2947 = vmul.f32 %v2946, %v2946
          %2948 = vadd.xlane.f32.xlu0 %v2947
          %v2949 = vpop.xlane.xlu0 %2948
          %v2950 = vmul.f32 %v2949, %v875
          %v2951 = vadd.f32 %v2950, 1e-06
          %v2952 = vrsqrt.pop %v2951
          %v2953 = vmul.f32 %v2946, %v2952
          %v2955 = vlaneseq
          %v2956 = vshrl.u32 %v2955, 7
          %v2957 = vsub.s32 0, %v2956
          %v2958 = vrot.slane %v2941, %v2957
          %v2960 = vmul.f32 %v2953, %v2958
          %v2962 = vlaneseq
          %v2963 = vshrl.u32 %v2962, 7
          %v2964 = vsub.s32 0, %v2963
          %v2965 = vrot.slane %v2942, %v2964
          %v2967 = vadd.f32 %v2960, %v2965
          %2968 = vst [vmem:[%s841] sm:$0xff] %v2967
        $region124: #{tpu_custom_call.1} parent=83 // pred_fallthru
          _
        %s2969 = sand.u32 %s455, 1
        %s2970 = scalar_lea.sflag [#allocation5], %s2969
        %s2971 = sand.u32 %s455, 1
        %s2972 = smul.addr %s2971, 8
        %s2973 = scalar_lea.vmem [#allocation14], %s2972
        // Predicated region
        $region125: #{tpu_custom_call.1} parent=83 // pred_check
          %p2974 = pneg %p465
        $region126: #{tpu_custom_call.1} parent=83 // pred_check_branch
          %2976 = sbr.rel (%p2974) target = $region128
        $region127: #{tpu_custom_call.1} parent=83 // pred_region
          %s2978 = ssub.s32 128, 128
          %2979 = vsyncadd %s2970, %s2978
          %s2980 = smul.addr %s38, 128
          %s2981 = scalar_lea.hbm %s16, %s2980
          %s2983 = sshll.u32 %s2973, 4
          %s2984 = int_to_ptr.vmem [resolvable:$true] %s2983
          %2986 = dma.vmem_to_hbm [thread:$0]  %s2984, 128, %s2981, %s2970
        $region128: #{tpu_custom_call.1} parent=83 // pred_fallthru
          _
      $region84: #{tpu_custom_call.1} parent=5 // pred_fallthru
        _
      %p2987 = scmp.le.s32.totalorder 2, %s29
      // Predicated region
      $region129: #{tpu_custom_call.1} parent=5 // pred_check
        %p2988 = pneg %p2987
      $region130: #{tpu_custom_call.1} parent=5 // pred_check_branch
        %2990 = sbr.rel (%p2988) target = $region132
      $region131: #{tpu_custom_call.1} parent=5 // pred_region
        %s2991 = ssub.s32 %s29, 2
        // Predicated region
        $region133: #{tpu_custom_call.1} parent=131 // pred_check
          %p2992 = pneg %p471
        $region134: #{tpu_custom_call.1} parent=131 // pred_check_branch
          %2994 = sbr.rel (%p2992) target = $region136
        $region135: #{tpu_custom_call.1} parent=131 // pred_region
          %s2995 = sand.u32 %s456, 1
          %s2996 = scalar_lea.sflag [#allocation5], %s2995
          %s2997 = sand.u32 %s456, 1
          %s2998 = smul.addr %s2997, 8
          %s2999 = scalar_lea.vmem [#allocation14], %s2998
          %3000 = dma.done %s2996, 128
        $region136: #{tpu_custom_call.1} parent=131 // pred_fallthru
          _
      $region132: #{tpu_custom_call.1} parent=5 // pred_fallthru
        _
    $region6: #{tpu_custom_call.1} parent=1 // loop_footer
      %s33 = sadd.s32 1, %s29
    $region7: #{tpu_custom_call.1} parent=1 // loop_footer_branch
      %28 = sbr.rel target = $region3
    $region8: #{tpu_custom_call.1} parent=1 // loop_exit
      _
    %3001 = vsyncpa [#allocation4], 1
    %s3002 = scalar_lea.sflag [#allocation4], 1
    %3003 = vsyncpa %s3002, 1
    %3004 = vsyncpa [#allocation7], 1
    %3005 = vsyncpa [#allocation5], 1
    %s3006 = scalar_lea.sflag [#allocation5], 1
    %3007 = vsyncpa %s3006, 1

</llo_original>
